<compile_context>
chip_gen: v7x
topology: tpu7x:2x2x1
jax: 0.10.0
libtpu: 0.0.40
codegen_flags: <defaults>
</compile_context>

<pallas_src>
import jax
import jax.numpy as jnp
from jax.experimental import pallas as pl
from jax.experimental.pallas import tpu as pltpu

CPAD = 128  # lane-dense padding for the classifier output (classes) only


# ------------------ fused Conv3x3(pad=1) + ReLU + MaxPool2x2 -----------------

def _conv_relu_pool_kernel(x_ref, w_ref, o_ref, xpad_ref, patch_ref):
    # x_ref    : (1, H, W, Cin)          real (unpadded) input channels
    # w_ref    : (9*Cin, Cout)           rows ordered (ky, kx, cin), real Cout
    # o_ref    : (1, H//2, (W//2)*Cout)  pooled output, lane-dense store
    # xpad_ref : VMEM (H+2, W+2, Cin)    zero-halo padded input
    # patch_ref: VMEM (H*W, 9*Cin)       im2col patch buffer
    _, H, W, Cin = x_ref.shape
    Cout = w_ref.shape[-1]
    Ho, Wo = H // 2, W // 2

    # Zero only the 1-pixel halo (interior is fully overwritten each step).
    zrow = jnp.zeros((1, W + 2, Cin), xpad_ref.dtype)
    zcol = jnp.zeros((H + 2, 1, Cin), xpad_ref.dtype)
    xpad_ref[0:1, :, :] = zrow
    xpad_ref[H + 1:H + 2, :, :] = zrow
    xpad_ref[:, 0:1, :] = zcol
    xpad_ref[:, W + 1:W + 2, :] = zcol
    xpad_ref[1:H + 1, 1:W + 1, :] = x_ref[0]

    # im2col: one patch buffer, K ordered (ky, kx, cin) to match w_ref rows.
    for ky in range(3):
        for kx in range(3):
            t = ky * 3 + kx
            patch_ref[:, t * Cin:(t + 1) * Cin] = (
                xpad_ref[ky:ky + H, kx:kx + W, :].reshape(H * W, Cin))

    # Single MXU matmul, K = 9*Cin real channels, f32 accumulation in vregs.
    acc = jnp.dot(patch_ref[...], w_ref[...],
                  preferred_element_type=jnp.float32)          # (H*W, Cout)

    # ReLU (Dropout2d = identity in eval mode) + fused 2x2/2 max pool in f32.
    # TODO(synk): on v6e/v7x the compare/max could run in bf16 (exact under the
    # final bf16 rounding); kept f32 so the same kernel is safe on v5e.
    y = jnp.maximum(acc, 0.0)                                  # rows y*W + x
    y = jnp.max(y.reshape(H * W // 2, 2, Cout), axis=1)        # pool along W
    y = y.reshape(Ho, W, Cout)                                 # (yo, dy*Wo+xo)
    y = jnp.maximum(y[:, :Wo, :], y[:, Wo:, :])                # pool along H
    o_ref[0] = y.reshape(Ho, Wo * Cout).astype(o_ref.dtype)    # lane-dense


def conv3x3_relu_pool(x_nhwc, w):
    N, H, W, Cin = x_nhwc.shape
    assert H % 2 == 0 and W % 2 == 0, "2x2/2 max-pool needs even spatial dims"
    assert w.shape[0] == 9 * Cin
    Cout = w.shape[-1]
    Ho, Wo = H // 2, W // 2
    # TODO(synk): for large images (esp. v7x: 64 MiB VMEM/TC), tile H into row
    # strips with a 1-row halo (overlapping index_map) as a second "parallel"
    # grid axis, and set pltpu.CompilerParams(vmem_limit_bytes=...) explicitly.
    return pl.pallas_call(
        _conv_relu_pool_kernel,
        out_shape=jax.ShapeDtypeStruct((N, Ho, Wo * Cout), jnp.bfloat16),
        grid=(N,),
        in_specs=[
            pl.BlockSpec((1, H, W, Cin), lambda n: (n, 0, 0, 0)),
            pl.BlockSpec((9 * Cin, Cout), lambda n: (0, 0)),
        ],
        out_specs=pl.BlockSpec((1, Ho, Wo * Cout), lambda n: (n, 0, 0)),
        scratch_shapes=[
            pltpu.VMEM((H + 2, W + 2, Cin), jnp.bfloat16),
            pltpu.VMEM((H * W, 9 * Cin), jnp.bfloat16),
        ],
        compiler_params=pltpu.CompilerParams(
            dimension_semantics=("parallel",)),
    )(x_nhwc, w)


# ------------------------------- MLP head ------------------------------------

def _mlp_kernel(x_ref, w1_ref, b1_ref, w2_ref, b2_ref, o_ref):
    # Linear -> (Dropout = identity, eval mode) -> Linear; no activation in
    # between, matching the reference _create_mlp_layers.
    h = jnp.dot(x_ref[...], w1_ref[...],
                preferred_element_type=jnp.float32) + b1_ref[...]
    out = jnp.dot(h.astype(w2_ref.dtype), w2_ref[...],
                  preferred_element_type=jnp.float32) + b2_ref[...]
    o_ref[...] = out.astype(o_ref.dtype)


def classifier(feats, w1, b1, w2, b2):
    N, K = feats.shape
    hidden = w1.shape[-1]
    outp = w2.shape[-1]          # lane-padded class dim (128)
    # Batch-row grid: weights use constant index_maps so they stay resident in
    # VMEM while activation rows pipeline HBM<->VMEM.
    TB = 128 if N % 128 == 0 else N
    return pl.pallas_call(
        _mlp_kernel,
        out_shape=jax.ShapeDtypeStruct((N, outp), jnp.float32),
        grid=(N // TB,),
        in_specs=[
            pl.BlockSpec((TB, K), lambda i: (i, 0)),
            pl.BlockSpec((K, hidden), lambda i: (0, 0)),
            pl.BlockSpec((1, hidden), lambda i: (0, 0)),
            pl.BlockSpec((hidden, outp), lambda i: (0, 0)),
            pl.BlockSpec((1, outp), lambda i: (0, 0)),
        ],
        out_specs=pl.BlockSpec((TB, outp), lambda i: (i, 0)),
        compiler_params=pltpu.CompilerParams(
            dimension_semantics=("parallel",)),
    )(feats, w1, b1, w2, b2)


# ------------------------------- Parameters ----------------------------------

def make_params(key, num_classes, conv_channel_dimensions, mlp_dimensions,
                image_hw):
    """kaiming_normal_-style init, laid out for the fused kernels.

    Conv weights : (9*Cin_real, Cout_real) bf16, rows ordered (ky, kx, cin).
    Linear-1     : rows permuted so it consumes the (h, w, c) flatten of the
                   last conv stage directly (equivalent to torch.flatten on
                   NCHW); no channel padding -> K = Ho*Wo*Cout_real.
    Linear-2     : class dim padded to 128 lanes (extra columns are zero).
    Biases stay zero (init_weights() only re-initialises weights).
    """
    n_conv = len(conv_channel_dimensions) - 1
    assert len(mlp_dimensions) == 2, "classifier kernel models 2 Linear layers"
    hidden = mlp_dimensions[1]
    assert hidden % 128 == 0, "hidden dim must be lane-dense"
    ks = jax.random.split(key, n_conv + 2)

    conv_ws = []
    for i, (cin, cout) in enumerate(zip(conv_channel_dimensions,
                                        conv_channel_dimensions[1:])):
        std = (2.0 / (cin * 3 * 3)) ** 0.5
        # PyTorch layout (Cout, Cin, KH, KW) -> kernel layout (9*Cin, Cout)
        w = std * jax.random.normal(ks[i], (cout, cin, 3, 3), jnp.float32)
        w = jnp.transpose(w, (2, 3, 1, 0)).reshape(9 * cin, cout)
        conv_ws.append(w.astype(jnp.bfloat16))

    H, W = image_hw
    fh, fw = H // (2 ** n_conv), W // (2 ** n_conv)
    c_real = conv_channel_dimensions[-1]
    assert mlp_dimensions[0] == c_real * fh * fw

    # Linear 1: torch weight (hidden, C*fh*fw), torch flatten order (c, h, w);
    # re-permute rows to the kernel's (h, w, c) flatten order (no padding).
    std1 = (2.0 / mlp_dimensions[0]) ** 0.5
    w1_t = std1 * jax.random.normal(ks[n_conv], (hidden, mlp_dimensions[0]),
                                    jnp.float32)
    w1 = jnp.transpose(w1_t).reshape(c_real, fh, fw, hidden)   # (c, h, w, out)
    w1k = jnp.transpose(w1, (1, 2, 0, 3)).reshape(
        fh * fw * c_real, hidden).astype(jnp.bfloat16)
    b1 = jnp.zeros((1, hidden), jnp.float32)

    # Linear 2: torch weight (num_classes, hidden); classes padded to 128 lanes.
    std2 = (2.0 / hidden) ** 0.5
    w2_t = std2 * jax.random.normal(ks[n_conv + 1], (num_classes, hidden),
                                    jnp.float32)
    w2k = jnp.zeros((hidden, CPAD), jnp.bfloat16)
    w2k = w2k.at[:, :num_classes].set(jnp.transpose(w2_t).astype(jnp.bfloat16))
    b2 = jnp.zeros((1, CPAD), jnp.float32)

    return {"conv_ws": conv_ws, "linears": (w1k, b1, w2k, b2),
            "num_classes": num_classes}


# ------------------------------- Forward pass ---------------------------------

def convnet_forward(x_nchw, params):
    # NCHW -> NHWC and bf16 once at the boundary (cheap XLA ops; halves the
    # layer-1 input DMA bytes into the first conv kernel).
    # TODO(synk): keep the conv path / classifier weights in f32 if the
    # consumer needs bit-closer parity with the PyTorch f32 reference.
    x = jnp.transpose(x_nchw, (0, 2, 3, 1)).astype(jnp.bfloat16)
    for w in params["conv_ws"]:
        cin = w.shape[0] // 9
        n, h = x.shape[0], x.shape[1]
        x = x.reshape(n, h, -1, cin)          # (N, H, W, Cin) — free reshape
        x = conv3x3_relu_pool(x, w)           # -> (N, H//2, (W//2)*Cout)
    # Last stage is already stored as (N, fh, fw*Cout): a plain flatten gives
    # (h, w, c) order, which is folded into the w1 row permutation.
    feats = x.reshape(x.shape[0], -1)
    logits_p = classifier(feats, *params["linears"])
    return logits_p[:, :params["num_classes"]]   # slice lane-padded classes
    # TODO(synk): training-mode Dropout/Dropout2d masking is not implemented.


if __name__ == "__main__":
    key = jax.random.PRNGKey(0)
    k_x, k_p = jax.random.split(key)

    num_classes = 10
    N, C, H, W = 2, 3, 16, 16
    conv_channel_dimensions = (3, 32, 64)
    # after two 2x2 pools: 64 * (H//4) * (W//4) = 1024 flattened features
    mlp_dimensions = (64 * (H // 4) * (W // 4), 128)

    x = jax.random.normal(k_x, (N, C, H, W), jnp.float32)
    params = make_params(k_p, num_classes, conv_channel_dimensions,
                         mlp_dimensions, (H, W))

    logits = convnet_forward(x, params)
    jax.block_until_ready(logits)
    assert logits.shape == (N, num_classes) and logits.dtype == jnp.float32
    print("KERNEL_OK")
</pallas_src>

<mosaic_0001>
module attributes {stable_mosaic.version = 11 : i64} {
  func.func @_conv_relu_pool_kernel(%arg0: i32, %arg1: memref<1x16x16x3xbf16, #tpu.memory_space<vmem>>, %arg2: memref<27x32xbf16, #tpu.memory_space<vmem>>, %arg3: memref<1x8x256xbf16, #tpu.memory_space<vmem>>, %arg4: memref<18x18x3xbf16, #tpu.memory_space<vmem>>, %arg5: memref<256x27xbf16, #tpu.memory_space<vmem>>) attributes {dimension_semantics = [#tpu.dimension_semantics<parallel>], iteration_bounds = array<i64: 2>, scalar_prefetch = 0 : i64, scratch_operands = 2 : i64, tpu.core_type = #tpu.core_type<tc>, window_params = [{transform_indices = @transform_0, window_bounds = array<i64: 1, 16, 16, 3>}, {pipeline_mode = #tpu.pipeline_mode<synchronous>, transform_indices = @transform_1, window_bounds = array<i64: 27, 32>}, {transform_indices = @transform_2, window_bounds = array<i64: 1, 8, 256>}]} {
    %cst = arith.constant 0.000000e+00 : bf16
    %0 = vector.broadcast %cst : bf16 to vector<1x18x3xbf16>
    %cst_0 = arith.constant 0.000000e+00 : bf16
    %1 = vector.broadcast %cst_0 : bf16 to vector<18x1x3xbf16>
    %c0 = arith.constant 0 : index
    %c0_1 = arith.constant 0 : index
    %c0_2 = arith.constant 0 : index
    %2 = vector.load %arg4[%c0, %c0_1, %c0_2] : memref<18x18x3xbf16, #tpu.memory_space<vmem>>, vector<1x18x3xbf16>
    tpu.vector_store %arg4[%c0, %c0_1, %c0_2], %0 {strides = array<i32>} : memref<18x18x3xbf16, #tpu.memory_space<vmem>>, vector<1x18x3xbf16>,
    %c17 = arith.constant 17 : index
    %c0_3 = arith.constant 0 : index
    %c0_4 = arith.constant 0 : index
    %3 = vector.load %arg4[%c17, %c0_3, %c0_4] : memref<18x18x3xbf16, #tpu.memory_space<vmem>>, vector<1x18x3xbf16>
    tpu.vector_store %arg4[%c17, %c0_3, %c0_4], %0 {strides = array<i32>} : memref<18x18x3xbf16, #tpu.memory_space<vmem>>, vector<1x18x3xbf16>,
    %c0_5 = arith.constant 0 : index
    %c0_6 = arith.constant 0 : index
    %c0_7 = arith.constant 0 : index
    %4 = vector.load %arg4[%c0_5, %c0_6, %c0_7] : memref<18x18x3xbf16, #tpu.memory_space<vmem>>, vector<18x1x3xbf16>
    tpu.vector_store %arg4[%c0_5, %c0_6, %c0_7], %1 {strides = array<i32>} : memref<18x18x3xbf16, #tpu.memory_space<vmem>>, vector<18x1x3xbf16>,
    %c0_8 = arith.constant 0 : index
    %c17_9 = arith.constant 17 : index
    %c0_10 = arith.constant 0 : index
    %5 = vector.load %arg4[%c0_8, %c17_9, %c0_10] : memref<18x18x3xbf16, #tpu.memory_space<vmem>>, vector<18x1x3xbf16>
    tpu.vector_store %arg4[%c0_8, %c17_9, %c0_10], %1 {strides = array<i32>} : memref<18x18x3xbf16, #tpu.memory_space<vmem>>, vector<18x1x3xbf16>,
    %c0_11 = arith.constant 0 : index
    %c0_12 = arith.constant 0 : index
    %c0_13 = arith.constant 0 : index
    %c0_14 = arith.constant 0 : index
    %6 = vector.load %arg1[%c0_11, %c0_12, %c0_13, %c0_14] : memref<1x16x16x3xbf16, #tpu.memory_space<vmem>>, vector<1x16x16x3xbf16>
    %7 = vector.shape_cast %6 : vector<1x16x16x3xbf16> to vector<16x16x3xbf16>
    %c1 = arith.constant 1 : index
    %c1_15 = arith.constant 1 : index
    %c0_16 = arith.constant 0 : index
    %8 = vector.load %arg4[%c1, %c1_15, %c0_16] : memref<18x18x3xbf16, #tpu.memory_space<vmem>>, vector<16x16x3xbf16>
    tpu.vector_store %arg4[%c1, %c1_15, %c0_16], %7 {strides = array<i32>} : memref<18x18x3xbf16, #tpu.memory_space<vmem>>, vector<16x16x3xbf16>,
    %c0_17 = arith.constant 0 : index
    %c0_18 = arith.constant 0 : index
    %c0_19 = arith.constant 0 : index
    %9 = vector.load %arg4[%c0_17, %c0_18, %c0_19] : memref<18x18x3xbf16, #tpu.memory_space<vmem>>, vector<16x16x3xbf16>
    %10 = vector.shape_cast %9 : vector<16x16x3xbf16> to vector<256x3xbf16>
    %c0_20 = arith.constant 0 : index
    %c0_21 = arith.constant 0 : index
    %11 = vector.load %arg5[%c0_20, %c0_21] : memref<256x27xbf16, #tpu.memory_space<vmem>>, vector<256x3xbf16>
    tpu.vector_store %arg5[%c0_20, %c0_21], %10 {strides = array<i32>} : memref<256x27xbf16, #tpu.memory_space<vmem>>, vector<256x3xbf16>,
    %c0_22 = arith.constant 0 : index
    %c1_23 = arith.constant 1 : index
    %c0_24 = arith.constant 0 : index
    %12 = vector.load %arg4[%c0_22, %c1_23, %c0_24] : memref<18x18x3xbf16, #tpu.memory_space<vmem>>, vector<16x16x3xbf16>
    %13 = vector.shape_cast %12 : vector<16x16x3xbf16> to vector<256x3xbf16>
    %c0_25 = arith.constant 0 : index
    %c3 = arith.constant 3 : index
    %14 = vector.load %arg5[%c0_25, %c3] : memref<256x27xbf16, #tpu.memory_space<vmem>>, vector<256x3xbf16>
    tpu.vector_store %arg5[%c0_25, %c3], %13 {strides = array<i32>} : memref<256x27xbf16, #tpu.memory_space<vmem>>, vector<256x3xbf16>,
    %c0_26 = arith.constant 0 : index
    %c2 = arith.constant 2 : index
    %c0_27 = arith.constant 0 : index
    %15 = vector.load %arg4[%c0_26, %c2, %c0_27] : memref<18x18x3xbf16, #tpu.memory_space<vmem>>, vector<16x16x3xbf16>
    %16 = vector.shape_cast %15 : vector<16x16x3xbf16> to vector<256x3xbf16>
    %c0_28 = arith.constant 0 : index
    %c6 = arith.constant 6 : index
    %17 = vector.load %arg5[%c0_28, %c6] : memref<256x27xbf16, #tpu.memory_space<vmem>>, vector<256x3xbf16>
    tpu.vector_store %arg5[%c0_28, %c6], %16 {strides = array<i32>} : memref<256x27xbf16, #tpu.memory_space<vmem>>, vector<256x3xbf16>,
    %c1_29 = arith.constant 1 : index
    %c0_30 = arith.constant 0 : index
    %c0_31 = arith.constant 0 : index
    %18 = vector.load %arg4[%c1_29, %c0_30, %c0_31] : memref<18x18x3xbf16, #tpu.memory_space<vmem>>, vector<16x16x3xbf16>
    %19 = vector.shape_cast %18 : vector<16x16x3xbf16> to vector<256x3xbf16>
    %c0_32 = arith.constant 0 : index
    %c9 = arith.constant 9 : index
    %20 = vector.load %arg5[%c0_32, %c9] : memref<256x27xbf16, #tpu.memory_space<vmem>>, vector<256x3xbf16>
    tpu.vector_store %arg5[%c0_32, %c9], %19 {strides = array<i32>} : memref<256x27xbf16, #tpu.memory_space<vmem>>, vector<256x3xbf16>,
    %c1_33 = arith.constant 1 : index
    %c1_34 = arith.constant 1 : index
    %c0_35 = arith.constant 0 : index
    %21 = vector.load %arg4[%c1_33, %c1_34, %c0_35] : memref<18x18x3xbf16, #tpu.memory_space<vmem>>, vector<16x16x3xbf16>
    %22 = vector.shape_cast %21 : vector<16x16x3xbf16> to vector<256x3xbf16>
    %c0_36 = arith.constant 0 : index
    %c12 = arith.constant 12 : index
    %23 = vector.load %arg5[%c0_36, %c12] : memref<256x27xbf16, #tpu.memory_space<vmem>>, vector<256x3xbf16>
    tpu.vector_store %arg5[%c0_36, %c12], %22 {strides = array<i32>} : memref<256x27xbf16, #tpu.memory_space<vmem>>, vector<256x3xbf16>,
    %c1_37 = arith.constant 1 : index
    %c2_38 = arith.constant 2 : index
    %c0_39 = arith.constant 0 : index
    %24 = vector.load %arg4[%c1_37, %c2_38, %c0_39] : memref<18x18x3xbf16, #tpu.memory_space<vmem>>, vector<16x16x3xbf16>
    %25 = vector.shape_cast %24 : vector<16x16x3xbf16> to vector<256x3xbf16>
    %c0_40 = arith.constant 0 : index
    %c15 = arith.constant 15 : index
    %26 = vector.load %arg5[%c0_40, %c15] : memref<256x27xbf16, #tpu.memory_space<vmem>>, vector<256x3xbf16>
    tpu.vector_store %arg5[%c0_40, %c15], %25 {strides = array<i32>} : memref<256x27xbf16, #tpu.memory_space<vmem>>, vector<256x3xbf16>,
    %c2_41 = arith.constant 2 : index
    %c0_42 = arith.constant 0 : index
    %c0_43 = arith.constant 0 : index
    %27 = vector.load %arg4[%c2_41, %c0_42, %c0_43] : memref<18x18x3xbf16, #tpu.memory_space<vmem>>, vector<16x16x3xbf16>
    %28 = vector.shape_cast %27 : vector<16x16x3xbf16> to vector<256x3xbf16>
    %c0_44 = arith.constant 0 : index
    %c18 = arith.constant 18 : index
    %29 = vector.load %arg5[%c0_44, %c18] : memref<256x27xbf16, #tpu.memory_space<vmem>>, vector<256x3xbf16>
    tpu.vector_store %arg5[%c0_44, %c18], %28 {strides = array<i32>} : memref<256x27xbf16, #tpu.memory_space<vmem>>, vector<256x3xbf16>,
    %c2_45 = arith.constant 2 : index
    %c1_46 = arith.constant 1 : index
    %c0_47 = arith.constant 0 : index
    %30 = vector.load %arg4[%c2_45, %c1_46, %c0_47] : memref<18x18x3xbf16, #tpu.memory_space<vmem>>, vector<16x16x3xbf16>
    %31 = vector.shape_cast %30 : vector<16x16x3xbf16> to vector<256x3xbf16>
    %c0_48 = arith.constant 0 : index
    %c21 = arith.constant 21 : index
    %32 = vector.load %arg5[%c0_48, %c21] : memref<256x27xbf16, #tpu.memory_space<vmem>>, vector<256x3xbf16>
    tpu.vector_store %arg5[%c0_48, %c21], %31 {strides = array<i32>} : memref<256x27xbf16, #tpu.memory_space<vmem>>, vector<256x3xbf16>,
    %c2_49 = arith.constant 2 : index
    %c2_50 = arith.constant 2 : index
    %c0_51 = arith.constant 0 : index
    %33 = vector.load %arg4[%c2_49, %c2_50, %c0_51] : memref<18x18x3xbf16, #tpu.memory_space<vmem>>, vector<16x16x3xbf16>
    %34 = vector.shape_cast %33 : vector<16x16x3xbf16> to vector<256x3xbf16>
    %c0_52 = arith.constant 0 : index
    %c24 = arith.constant 24 : index
    %35 = vector.load %arg5[%c0_52, %c24] : memref<256x27xbf16, #tpu.memory_space<vmem>>, vector<256x3xbf16>
    tpu.vector_store %arg5[%c0_52, %c24], %34 {strides = array<i32>} : memref<256x27xbf16, #tpu.memory_space<vmem>>, vector<256x3xbf16>,
    %c0_53 = arith.constant 0 : index
    %c0_54 = arith.constant 0 : index
    %36 = vector.load %arg5[%c0_53, %c0_54] : memref<256x27xbf16, #tpu.memory_space<vmem>>, vector<256x27xbf16>
    %c0_55 = arith.constant 0 : index
    %c0_56 = arith.constant 0 : index
    %37 = vector.load %arg2[%c0_55, %c0_56] : memref<27x32xbf16, #tpu.memory_space<vmem>>, vector<27x32xbf16>
    %cst_57 = arith.constant dense<0.000000e+00> : vector<256x32xf32>
    %38 = tpu.matmul %36, %37, %cst_57 {dimension_numbers = #tpu.dot_dimension_numbers<[1], [0], [0], [1], [0, 0, 1, 1], [], []>} : vector<256x27xbf16>, vector<27x32xbf16>, vector<256x32xf32> -> vector<256x32xf32>
    %cst_58 = arith.constant 0.000000e+00 : f32
    %39 = vector.broadcast %cst_58 : f32 to vector<256x32xf32>
    %40 = arith.maximumf %38, %39 : vector<256x32xf32>
    %41 = vector.shape_cast %40 : vector<256x32xf32> to vector<128x2x32xf32>
    %cst_59 = arith.constant dense<0xFF800000> : vector<128x32xf32>
    %42 = vector.multi_reduction <maximumf>, %41, %cst_59 [1] : vector<128x2x32xf32> to vector<128x32xf32>
    %43 = vector.shape_cast %42 : vector<128x32xf32> to vector<8x16x32xf32>
    %44 = vector.extract_strided_slice %43 {offsets = [0, 0, 0], sizes = [8, 8, 32], strides = [1, 1, 1]} : vector<8x16x32xf32> to vector<8x8x32xf32>
    %45 = vector.extract_strided_slice %43 {offsets = [0, 8, 0], sizes = [8, 8, 32], strides = [1, 1, 1]} : vector<8x16x32xf32> to vector<8x8x32xf32>
    %46 = arith.maximumf %44, %45 : vector<8x8x32xf32>
    %47 = vector.shape_cast %46 : vector<8x8x32xf32> to vector<8x256xf32>
    %48 = arith.truncf %47 : vector<8x256xf32> to vector<8x256xbf16>
    %c0_60 = arith.constant 0 : index
    %c0_61 = arith.constant 0 : index
    %c0_62 = arith.constant 0 : index
    %49 = vector.load %arg3[%c0_60, %c0_61, %c0_62] : memref<1x8x256xbf16, #tpu.memory_space<vmem>>, vector<1x8x256xbf16>
    %50 = vector.shape_cast %49 : vector<1x8x256xbf16> to vector<8x256xbf16>
    %51 = vector.shape_cast %48 : vector<8x256xbf16> to vector<1x8x256xbf16>
    tpu.vector_store %arg3[%c0_60, %c0_61, %c0_62], %51 {strides = array<i32>} : memref<1x8x256xbf16, #tpu.memory_space<vmem>>, vector<1x8x256xbf16>,
    return
  }
  func.func @transform_0(%arg0: i32) -> (i32, i32, i32, i32) {
    %c0_i32 = arith.constant 0 : i32
    %c0_i32_0 = arith.constant 0 : i32
    %c0_i32_1 = arith.constant 0 : i32
    %c0_i32_2 = arith.constant 0 : i32
    return %arg0, %c0_i32, %c0_i32_0, %c0_i32_1 : i32, i32, i32, i32
  }
  func.func @transform_1(%arg0: i32) -> (i32, i32) {
    %c0_i32 = arith.constant 0 : i32
    %c0_i32_0 = arith.constant 0 : i32
    %c0_i32_1 = arith.constant 0 : i32
    return %c0_i32, %c0_i32_0 : i32, i32
  }
  func.func @transform_2(%arg0: i32) -> (i32, i32, i32) {
    %c0_i32 = arith.constant 0 : i32
    %c0_i32_0 = arith.constant 0 : i32
    %c0_i32_1 = arith.constant 0 : i32
    return %arg0, %c0_i32, %c0_i32_0 : i32, i32, i32
  }
}

</mosaic_0001>

<llo_original>
// kernel: tpu_custom_call.1
$region0: #{tpu_custom_call.1}
  #allocation0 [shape = 'u32[]', space=smem, size = 0x4, offset = 0x4, fixed_abs, tag = 'smem constant byte address 0x4 - core index']
  #allocation1 [shape = 'u32[144,128]{1,0:T(1,128)}', space=vmem, size = 0x12000, scoped, tag = 'internal scratch']
  #allocation2 [shape = 'bf16[18,18,3]{2,1,0:T(8,128)(2,1)}', space=vmem, size = 0x1b000, scoped, tag = 'scratch operand']
  #allocation3 [shape = 'bf16[256,27]{1,0:T(16,128)(2,1)}', space=vmem, size = 0x10000, scoped, tag = 'scratch operand']
  %s0 = inlined_call_operand.vmem [shape: bf16[2,16,16,3], index: 0, kind: input, shape index: {}]
  %s1 = inlined_call_operand.vmem [shape: bf16[27,32], index: 1, kind: input, shape index: {}]
  %s2 = inlined_call_operand.hbm [shape: bf16[2,8,256], index: 2, kind: output, shape index: {}]
  %s3 = sld [smem:[#allocation0]]
  $region41: #{tpu_custom_call.1} parent=0
    _
  %s5 = ssub.s32 1, %s3
  %s6 = scalar_select 0, %s5, %s3
  $region1: #{tpu_custom_call.1} parent=0
    #allocation4 [shape = 'u8[8192]{0}', space=vmem, size = 0x2000, scoped, tag = 'output window, operand 0']
    #allocation5 [shape = 's32[2]{0}', space=sflag, size = 0x8, scoped, tag = 'scoped memory for tpu_custom_call.1']
    %7 = vsyncpa [#allocation5], 0
    %s8 = scalar_lea.sflag [#allocation5], 1
    %9 = vsyncpa %s8, 0
    loop: start=0, step=1, limit=4
    $region2: #{tpu_custom_call.1} parent=1 // loop_pre_header
      _
    $region3: #{tpu_custom_call.1} parent=1 // loop_header
      %s11 = sphi 0, %s15
      %p12 = scmp.ge.s32.totalorder %s11, 4
      %s21 = sphi 0, %s23
      %s24 = sphi 0, %s21
      %s25 = sphi 0, %s24
      %s41 = sphi 0, %s25
      %s45 = sphi 0, %s45
      %s47 = sphi 0, %s45
      %s48 = sphi 0, %s47
      %s62 = sphi 0, %s48
      %s68 = sphi 0, %s70
      %s71 = sphi 0, %s68
      %s72 = sphi 0, %s71
      %s88 = sphi 0, %s72
    $region4: #{tpu_custom_call.1} parent=1 // loop_header_branch
      %14 = sbr.rel (%p12) target = $region8
    $region5: #{tpu_custom_call.1} parent=1 // loop_body
      %s16 = ssub.s32 %s11, 1
      %s17 = ssub.s32 %s11, 2
      %s18 = sadd.s32 %s11, 1
      %s19 = ssub.s32 %s11, %s18
      %p20 = scmp.eq.s32.totalorder %s19, 0
      %s22 = sadd.s32 %s21, 1
      %s23 = scalar_select %p20, %s21, %s22
      %p26 = pneg %p20
      %p27 = scmp.eq.s32.totalorder %s11, 1
      %p28 = por %p26, %p27
      %p29 = scmp.ne.s32.totalorder %s21, %s24
      %p30 = scmp.eq.s32.totalorder %s11, 0
      %p31 = por %p29, %p30
      %p32 = scmp.ne.s32.totalorder %s21, %s24
      %p33 = scmp.eq.s32.totalorder %s16, 1
      %p34 = por %p32, %p33
      %p35 = scmp.ne.s32.totalorder %s24, %s25
      %p36 = scmp.eq.s32.totalorder %s16, 0
      %p37 = por %p35, %p36
      %p38 = scmp.ne.s32.totalorder %s24, %s25
      %p39 = scmp.eq.s32.totalorder %s17, 1
      %p40 = por %p38, %p39
      %p42 = scmp.ne.s32.totalorder %s25, %s41
      %p43 = scmp.eq.s32.totalorder %s17, 0
      %p44 = por %p42, %p43
      %s46 = sadd.s32 %s45, 1
      %p49 = scmp.eq.s32.totalorder %s11, 1
      %p50 = scmp.ne.s32.totalorder %s45, %s47
      %p51 = scmp.eq.s32.totalorder %s11, 0
      %p52 = por %p50, %p51
      %p53 = scmp.ne.s32.totalorder %s45, %s47
      %p54 = scmp.eq.s32.totalorder %s16, 1
      %p55 = por %p53, %p54
      %p56 = scmp.ne.s32.totalorder %s47, %s48
      %p57 = scmp.eq.s32.totalorder %s16, 0
      %p58 = por %p56, %p57
      %p59 = scmp.ne.s32.totalorder %s47, %s48
      %p60 = scmp.eq.s32.totalorder %s17, 1
      %p61 = por %p59, %p60
      %p63 = scmp.ne.s32.totalorder %s48, %s62
      %p64 = scmp.eq.s32.totalorder %s17, 0
      %p65 = por %p63, %p64
      %s66 = ssub.s32 %s11, %s18
      %p67 = scmp.eq.s32.totalorder %s66, 0
      %s69 = sadd.s32 %s68, 1
      %s70 = scalar_select %p67, %s68, %s69
      %p73 = pneg %p67
      %p74 = scmp.eq.s32.totalorder %s11, 1
      %p75 = por %p73, %p74
      %p76 = scmp.ne.s32.totalorder %s68, %s71
      %p77 = scmp.eq.s32.totalorder %s11, 0
      %p78 = por %p76, %p77
      %p79 = scmp.ne.s32.totalorder %s68, %s71
      %p80 = scmp.eq.s32.totalorder %s16, 1
      %p81 = por %p79, %p80
      %p82 = scmp.ne.s32.totalorder %s71, %s72
      %p83 = scmp.eq.s32.totalorder %s16, 0
      %p84 = por %p82, %p83
      %p85 = scmp.ne.s32.totalorder %s71, %s72
      %p86 = scmp.eq.s32.totalorder %s17, 1
      %p87 = por %p85, %p86
      %p89 = scmp.ne.s32.totalorder %s72, %s88
      %p90 = scmp.eq.s32.totalorder %s17, 0
      %p91 = por %p89, %p90
      %p92 = scmp.le.s32.totalorder 1, %s11
      %p93 = scmp.lt.s32.totalorder %s11, 3
      %p94 = pnand %p92, %p93
      %p95 = pneg %p94
      // Predicated region
      $region9: #{tpu_custom_call.1} parent=5 // pred_check
        _
      $region10: #{tpu_custom_call.1} parent=5 // pred_check_branch
        %97 = sbr.rel (%p94) target = $region12
      $region11: #{tpu_custom_call.1} parent=5 // pred_region
        %s98 = ssub.s32 %s11, 1
        // Predicated region
        $region13: #{tpu_custom_call.1} parent=11 // pred_check
          %p99 = pneg %p58
        $region14: #{tpu_custom_call.1} parent=11 // pred_check_branch
          %101 = sbr.rel (%p99) target = $region16
        $region15: #{tpu_custom_call.1} parent=11 // pred_region
          _
        $region16: #{tpu_custom_call.1} parent=11 // pred_fallthru
          _
      $region12: #{tpu_custom_call.1} parent=5 // pred_fallthru
        _
      %p102 = scmp.lt.s32.totalorder %s11, 2
      // Predicated region
      $region17: #{tpu_custom_call.1} parent=5 // pred_check
        %p103 = pneg %p102
      $region18: #{tpu_custom_call.1} parent=5 // pred_check_branch
        %105 = sbr.rel (%p103) target = $region20
      $region19: #{tpu_custom_call.1} parent=5 // pred_region
        // Predicated region
        $region21: #{tpu_custom_call.1} parent=19 // pred_check
          %p106 = pneg %p31
        $region22: #{tpu_custom_call.1} parent=19 // pred_check_branch
          %108 = sbr.rel (%p106) target = $region24
        $region23: #{tpu_custom_call.1} parent=19 // pred_region
          %p109 = scmp.lt.s32.totalorder %s11, 1
          %s110 = scalar_select %p109, %s11, 1
          %s111 = smul.addr %s110, 32
          %s112 = smul.addr %s111, 4
          %s113 = scalar_lea.vmem %s0, %s112
        $region24: #{tpu_custom_call.1} parent=19 // pred_fallthru
          _
      $region20: #{tpu_custom_call.1} parent=5 // pred_fallthru
        _
      %p114 = scmp.le.s32.totalorder 1, %s11
      %p115 = scmp.lt.s32.totalorder %s11, 3
      %p116 = pnand %p114, %p115
      %p117 = pneg %p116
      // Predicated region
      $region25: #{tpu_custom_call.1} parent=5 // pred_check
        _
      $region26: #{tpu_custom_call.1} parent=5 // pred_check_branch
        %119 = sbr.rel (%p116) target = $region28
      $region27: #{tpu_custom_call.1} parent=5 // pred_region
        %s120 = ssub.s32 %s11, 1
        %p121 = scmp.lt.s32.totalorder %s16, 1
        %s122 = scalar_select %p121, %s16, 1
        %s123 = smul.addr %s122, 32
        %s124 = smul.addr %s123, 4
        %s125 = scalar_lea.vmem %s0, %s124
        %p126 = pneg %p37
        %p127 = pneg %p34
        %p128 = pneg %p58
        %p129 = pneg %p55
        %p130 = pneg %p84
        %p131 = pneg %p81
        %s132 = sand.u32 %s71, 1
        %s133 = scalar_lea.sflag [#allocation5], %s132
        %s134 = sand.u32 %s71, 1
        %s135 = smul.addr %s134, 8
        %s136 = scalar_lea.vmem [#allocation4], %s135
        %p137 = scmp.lt.s32.totalorder %s16, 1
        %s138 = scalar_select %p137, %s16, 1
        %s139 = smul.addr %s138, 32
        %s140 = smul.addr %s139, 4
        %s141 = scalar_lea.vmem %s0, %s140
        %vm143 = vcmask 19456
        %144 = vst.msk [vmem:[#allocation2] sm:$0xf] %vm143, 0
        %145 = vst.msk [vmem:[#allocation2 + $0x4] sm:$0xf] %vm143, 0
        %vm146 = vcmask 16384
        %147 = vst.msk [vmem:[#allocation2 + $0x8] sm:$0x1] %vm146, 0
        %s148 = scalar_lea.vmem [#allocation2], 204
        %149 = vst.msk [vmem:[%s148] sm:$0xf] %vm143, 0
        %150 = vst.msk [vmem:[%s148 + $0x4] sm:$0xf] %vm143, 0
        %151 = vst.msk [vmem:[%s148 + $0x8] sm:$0x1] %vm146, 0
        %vm152 = vcmask 16384
        %vm153 = vsmask.f32 256
        %vm154 = vmand %vm152, %vm153
        %v155 = vld [vmem:[#allocation2] sm:$0x1]
        %v156 = vsel %vm154, 0, %v155
        %157 = vst [vmem:[#allocation2] sm:$0x1] %v156
        %v158 = vld [vmem:[#allocation2 + $0xc] sm:$0x1]
        %v159 = vsel %vm154, 0, %v158
        %160 = vst [vmem:[#allocation2 + $0xc] sm:$0x1] %v159
        %v161 = vld [vmem:[#allocation2 + $0x18] sm:$0x1]
        %v162 = vsel %vm154, 0, %v161
        %163 = vst [vmem:[#allocation2 + $0x18] sm:$0x1] %v162
        %v164 = vld [vmem:[#allocation2 + $0x24] sm:$0x1]
        %v165 = vsel %vm154, 0, %v164
        %166 = vst [vmem:[#allocation2 + $0x24] sm:$0x1] %v165
        %v167 = vld [vmem:[#allocation2 + $0x30] sm:$0x1]
        %v168 = vsel %vm154, 0, %v167
        %169 = vst [vmem:[#allocation2 + $0x30] sm:$0x1] %v168
        %v170 = vld [vmem:[#allocation2 + $0x3c] sm:$0x1]
        %v171 = vsel %vm154, 0, %v170
        %172 = vst [vmem:[#allocation2 + $0x3c] sm:$0x1] %v171
        %v173 = vld [vmem:[#allocation2 + $0x48] sm:$0x1]
        %v174 = vsel %vm154, 0, %v173
        %175 = vst [vmem:[#allocation2 + $0x48] sm:$0x1] %v174
        %v176 = vld [vmem:[#allocation2 + $0x54] sm:$0x1]
        %v177 = vsel %vm154, 0, %v176
        %178 = vst [vmem:[#allocation2 + $0x54] sm:$0x1] %v177
        %v179 = vld [vmem:[#allocation2 + $0x60] sm:$0x1]
        %v180 = vsel %vm154, 0, %v179
        %181 = vst [vmem:[#allocation2 + $0x60] sm:$0x1] %v180
        %v182 = vld [vmem:[#allocation2 + $0x6c] sm:$0x1]
        %v183 = vsel %vm154, 0, %v182
        %184 = vst [vmem:[#allocation2 + $0x6c] sm:$0x1] %v183
        %v185 = vld [vmem:[#allocation2 + $0x78] sm:$0x1]
        %v186 = vsel %vm154, 0, %v185
        %187 = vst [vmem:[#allocation2 + $0x78] sm:$0x1] %v186
        %v188 = vld [vmem:[#allocation2 + $0x84] sm:$0x1]
        %v189 = vsel %vm154, 0, %v188
        %190 = vst [vmem:[#allocation2 + $0x84] sm:$0x1] %v189
        %v191 = vld [vmem:[#allocation2 + $0x90] sm:$0x1]
        %v192 = vsel %vm154, 0, %v191
        %193 = vst [vmem:[#allocation2 + $0x90] sm:$0x1] %v192
        %v194 = vld [vmem:[#allocation2 + $0x9c] sm:$0x1]
        %v195 = vsel %vm154, 0, %v194
        %196 = vst [vmem:[#allocation2 + $0x9c] sm:$0x1] %v195
        %v197 = vld [vmem:[#allocation2 + $0xa8] sm:$0x1]
        %v198 = vsel %vm154, 0, %v197
        %199 = vst [vmem:[#allocation2 + $0xa8] sm:$0x1] %v198
        %v200 = vld [vmem:[#allocation2 + $0xb4] sm:$0x1]
        %v201 = vsel %vm154, 0, %v200
        %202 = vst [vmem:[#allocation2 + $0xb4] sm:$0x1] %v201
        %v203 = vld [vmem:[#allocation2 + $0xc0] sm:$0x1]
        %v204 = vsel %vm154, 0, %v203
        %205 = vst [vmem:[#allocation2 + $0xc0] sm:$0x1] %v204
        %v206 = vld [vmem:[#allocation2 + $0xcc] sm:$0x1]
        %v207 = vsel %vm154, 0, %v206
        %208 = vst [vmem:[#allocation2 + $0xcc] sm:$0x1] %v207
        %vm209 = vsmask.f32 7938
        %vm210 = vmand %vm152, %vm209
        %v211 = vld [vmem:[#allocation2 + $0x8] sm:$0x1]
        %v212 = vsel %vm210, 0, %v211
        %213 = vst [vmem:[#allocation2 + $0x8] sm:$0x1] %v212
        %v214 = vld [vmem:[#allocation2 + $0x14] sm:$0x1]
        %v215 = vsel %vm210, 0, %v214
        %216 = vst [vmem:[#allocation2 + $0x14] sm:$0x1] %v215
        %v217 = vld [vmem:[#allocation2 + $0x20] sm:$0x1]
        %v218 = vsel %vm210, 0, %v217
        %219 = vst [vmem:[#allocation2 + $0x20] sm:$0x1] %v218
        %v220 = vld [vmem:[#allocation2 + $0x2c] sm:$0x1]
        %v221 = vsel %vm210, 0, %v220
        %222 = vst [vmem:[#allocation2 + $0x2c] sm:$0x1] %v221
        %v223 = vld [vmem:[#allocation2 + $0x38] sm:$0x1]
        %v224 = vsel %vm210, 0, %v223
        %225 = vst [vmem:[#allocation2 + $0x38] sm:$0x1] %v224
        %v226 = vld [vmem:[#allocation2 + $0x44] sm:$0x1]
        %v227 = vsel %vm210, 0, %v226
        %228 = vst [vmem:[#allocation2 + $0x44] sm:$0x1] %v227
        %v229 = vld [vmem:[#allocation2 + $0x50] sm:$0x1]
        %v230 = vsel %vm210, 0, %v229
        %231 = vst [vmem:[#allocation2 + $0x50] sm:$0x1] %v230
        %v232 = vld [vmem:[#allocation2 + $0x5c] sm:$0x1]
        %v233 = vsel %vm210, 0, %v232
        %234 = vst [vmem:[#allocation2 + $0x5c] sm:$0x1] %v233
        %v235 = vld [vmem:[#allocation2 + $0x68] sm:$0x1]
        %v236 = vsel %vm210, 0, %v235
        %237 = vst [vmem:[#allocation2 + $0x68] sm:$0x1] %v236
        %v238 = vld [vmem:[#allocation2 + $0x74] sm:$0x1]
        %v239 = vsel %vm210, 0, %v238
        %240 = vst [vmem:[#allocation2 + $0x74] sm:$0x1] %v239
        %v241 = vld [vmem:[#allocation2 + $0x80] sm:$0x1]
        %v242 = vsel %vm210, 0, %v241
        %243 = vst [vmem:[#allocation2 + $0x80] sm:$0x1] %v242
        %v244 = vld [vmem:[#allocation2 + $0x8c] sm:$0x1]
        %v245 = vsel %vm210, 0, %v244
        %246 = vst [vmem:[#allocation2 + $0x8c] sm:$0x1] %v245
        %v247 = vld [vmem:[#allocation2 + $0x98] sm:$0x1]
        %v248 = vsel %vm210, 0, %v247
        %249 = vst [vmem:[#allocation2 + $0x98] sm:$0x1] %v248
        %v250 = vld [vmem:[#allocation2 + $0xa4] sm:$0x1]
        %v251 = vsel %vm210, 0, %v250
        %252 = vst [vmem:[#allocation2 + $0xa4] sm:$0x1] %v251
        %v253 = vld [vmem:[#allocation2 + $0xb0] sm:$0x1]
        %v254 = vsel %vm210, 0, %v253
        %255 = vst [vmem:[#allocation2 + $0xb0] sm:$0x1] %v254
        %v256 = vld [vmem:[#allocation2 + $0xbc] sm:$0x1]
        %v257 = vsel %vm210, 0, %v256
        %258 = vst [vmem:[#allocation2 + $0xbc] sm:$0x1] %v257
        %v259 = vld [vmem:[#allocation2 + $0xc8] sm:$0x1]
        %v260 = vsel %vm210, 0, %v259
        %261 = vst [vmem:[#allocation2 + $0xc8] sm:$0x1] %v260
        %v262 = vld [vmem:[#allocation2 + $0xd4] sm:$0x1]
        %v263 = vsel %vm210, 0, %v262
        %264 = vst [vmem:[#allocation2 + $0xd4] sm:$0x1] %v263
        %v265 = vld [vmem:[%s141] sm:$0xf]
        %v266 = vld [vmem:[%s141 + $0x4] sm:$0xf]
        %v267 = vld [vmem:[%s141 + $0x8] sm:$0xf]
        %v268 = vld [vmem:[%s141 + $0xc] sm:$0xf]
        %v269 = vld [vmem:[%s141 + $0x10] sm:$0xf]
        %v270 = vld [vmem:[%s141 + $0x14] sm:$0xf]
        %v271 = vld [vmem:[%s141 + $0x18] sm:$0xf]
        %v272 = vld [vmem:[%s141 + $0x1c] sm:$0xf]
        %v273 = vld [vmem:[%s141 + $0x20] sm:$0xf]
        %v274 = vld [vmem:[%s141 + $0x24] sm:$0xf]
        %v275 = vld [vmem:[%s141 + $0x28] sm:$0xf]
        %v276 = vld [vmem:[%s141 + $0x2c] sm:$0xf]
        %v277 = vld [vmem:[%s141 + $0x30] sm:$0xf]
        %v278 = vld [vmem:[%s141 + $0x34] sm:$0xf]
        %v279 = vld [vmem:[%s141 + $0x38] sm:$0xf]
        %v280 = vld [vmem:[%s141 + $0x3c] sm:$0xf]
        %v281 = vld [vmem:[%s141 + $0x40] sm:$0xf]
        %v282 = vld [vmem:[%s141 + $0x44] sm:$0xf]
        %v283 = vld [vmem:[%s141 + $0x48] sm:$0xf]
        %v284 = vld [vmem:[%s141 + $0x4c] sm:$0xf]
        %v285 = vld [vmem:[%s141 + $0x50] sm:$0xf]
        %v286 = vld [vmem:[%s141 + $0x54] sm:$0xf]
        %v287 = vld [vmem:[%s141 + $0x58] sm:$0xf]
        %v288 = vld [vmem:[%s141 + $0x5c] sm:$0xf]
        %v289 = vld [vmem:[%s141 + $0x60] sm:$0xf]
        %v290 = vld [vmem:[%s141 + $0x64] sm:$0xf]
        %v291 = vld [vmem:[%s141 + $0x68] sm:$0xf]
        %v292 = vld [vmem:[%s141 + $0x6c] sm:$0xf]
        %v293 = vld [vmem:[%s141 + $0x70] sm:$0xf]
        %v294 = vld [vmem:[%s141 + $0x74] sm:$0xf]
        %v295 = vld [vmem:[%s141 + $0x78] sm:$0xf]
        %v296 = vld [vmem:[%s141 + $0x7c] sm:$0xf]
        %vm297 = vsmask.f32 4368
        %vm298 = vmor %vm153, %vm297
        %v300 = vshrl.u32 %v265, 16
        %v302 = vrot.slane %v300, 7
        %v303 = vshll.u32 %v265, 16
        %v305 = vor.u32 %v302, %v303
        %v306 = vrot.slane %v302, 4
        %v308 = vshrl.u32 %v266, 16
        %v310 = vrot.slane %v308, 7
        %v311 = vshll.u32 %v266, 16
        %v313 = vor.u32 %v310, %v311
        %v314 = vsel %vm298, %v306, %v313
        %v315 = vrot.slane %v310, 4
        %v317 = vshrl.u32 %v267, 16
        %v319 = vrot.slane %v317, 7
        %v320 = vshll.u32 %v267, 16
        %v322 = vor.u32 %v319, %v320
        %v323 = vrot.slane %v319, 4
        %v325 = vshrl.u32 %v268, 16
        %v327 = vrot.slane %v325, 7
        %v328 = vshll.u32 %v268, 16
        %v330 = vor.u32 %v327, %v328
        %v331 = vsel %vm298, %v323, %v330
        %v332 = vrot.slane %v327, 4
        %v334 = vshrl.u32 %v269, 16
        %v336 = vrot.slane %v334, 7
        %v337 = vshll.u32 %v269, 16
        %v339 = vor.u32 %v336, %v337
        %v340 = vrot.slane %v336, 4
        %v342 = vshrl.u32 %v270, 16
        %v344 = vrot.slane %v342, 7
        %v345 = vshll.u32 %v270, 16
        %v347 = vor.u32 %v344, %v345
        %v348 = vsel %vm298, %v340, %v347
        %v349 = vrot.slane %v344, 4
        %v351 = vshrl.u32 %v271, 16
        %v353 = vrot.slane %v351, 7
        %v354 = vshll.u32 %v271, 16
        %v356 = vor.u32 %v353, %v354
        %v357 = vrot.slane %v353, 4
        %v359 = vshrl.u32 %v272, 16
        %v361 = vrot.slane %v359, 7
        %v362 = vshll.u32 %v272, 16
        %v364 = vor.u32 %v361, %v362
        %v365 = vsel %vm298, %v357, %v364
        %v366 = vrot.slane %v361, 4
        %v368 = vshrl.u32 %v273, 16
        %v370 = vrot.slane %v368, 7
        %v371 = vshll.u32 %v273, 16
        %v373 = vor.u32 %v370, %v371
        %v374 = vrot.slane %v370, 4
        %v376 = vshrl.u32 %v274, 16
        %v378 = vrot.slane %v376, 7
        %v379 = vshll.u32 %v274, 16
        %v381 = vor.u32 %v378, %v379
        %v382 = vsel %vm298, %v374, %v381
        %v383 = vrot.slane %v378, 4
        %v385 = vshrl.u32 %v275, 16
        %v387 = vrot.slane %v385, 7
        %v388 = vshll.u32 %v275, 16
        %v390 = vor.u32 %v387, %v388
        %v391 = vrot.slane %v387, 4
        %v393 = vshrl.u32 %v276, 16
        %v395 = vrot.slane %v393, 7
        %v396 = vshll.u32 %v276, 16
        %v398 = vor.u32 %v395, %v396
        %v399 = vsel %vm298, %v391, %v398
        %v400 = vrot.slane %v395, 4
        %v402 = vshrl.u32 %v277, 16
        %v404 = vrot.slane %v402, 7
        %v405 = vshll.u32 %v277, 16
        %v407 = vor.u32 %v404, %v405
        %v408 = vrot.slane %v404, 4
        %v410 = vshrl.u32 %v278, 16
        %v412 = vrot.slane %v410, 7
        %v413 = vshll.u32 %v278, 16
        %v415 = vor.u32 %v412, %v413
        %v416 = vsel %vm298, %v408, %v415
        %v417 = vrot.slane %v412, 4
        %v419 = vshrl.u32 %v279, 16
        %v421 = vrot.slane %v419, 7
        %v422 = vshll.u32 %v279, 16
        %v424 = vor.u32 %v421, %v422
        %v425 = vrot.slane %v421, 4
        %v427 = vshrl.u32 %v280, 16
        %v429 = vrot.slane %v427, 7
        %v430 = vshll.u32 %v280, 16
        %v432 = vor.u32 %v429, %v430
        %v433 = vsel %vm298, %v425, %v432
        %v434 = vrot.slane %v429, 4
        %v436 = vshrl.u32 %v281, 16
        %v438 = vrot.slane %v436, 7
        %v439 = vshll.u32 %v281, 16
        %v441 = vor.u32 %v438, %v439
        %v442 = vrot.slane %v438, 4
        %v444 = vshrl.u32 %v282, 16
        %v446 = vrot.slane %v444, 7
        %v447 = vshll.u32 %v282, 16
        %v449 = vor.u32 %v446, %v447
        %v450 = vsel %vm298, %v442, %v449
        %v451 = vrot.slane %v446, 4
        %v453 = vshrl.u32 %v283, 16
        %v455 = vrot.slane %v453, 7
        %v456 = vshll.u32 %v283, 16
        %v458 = vor.u32 %v455, %v456
        %v459 = vrot.slane %v455, 4
        %v461 = vshrl.u32 %v284, 16
        %v463 = vrot.slane %v461, 7
        %v464 = vshll.u32 %v284, 16
        %v466 = vor.u32 %v463, %v464
        %v467 = vsel %vm298, %v459, %v466
        %v468 = vrot.slane %v463, 4
        %v470 = vshrl.u32 %v285, 16
        %v472 = vrot.slane %v470, 7
        %v473 = vshll.u32 %v285, 16
        %v475 = vor.u32 %v472, %v473
        %v476 = vrot.slane %v472, 4
        %v478 = vshrl.u32 %v286, 16
        %v480 = vrot.slane %v478, 7
        %v481 = vshll.u32 %v286, 16
        %v483 = vor.u32 %v480, %v481
        %v484 = vsel %vm298, %v476, %v483
        %v485 = vrot.slane %v480, 4
        %v487 = vshrl.u32 %v287, 16
        %v489 = vrot.slane %v487, 7
        %v490 = vshll.u32 %v287, 16
        %v492 = vor.u32 %v489, %v490
        %v493 = vrot.slane %v489, 4
        %v495 = vshrl.u32 %v288, 16
        %v497 = vrot.slane %v495, 7
        %v498 = vshll.u32 %v288, 16
        %v500 = vor.u32 %v497, %v498
        %v501 = vsel %vm298, %v493, %v500
        %v502 = vrot.slane %v497, 4
        %v504 = vshrl.u32 %v289, 16
        %v506 = vrot.slane %v504, 7
        %v507 = vshll.u32 %v289, 16
        %v509 = vor.u32 %v506, %v507
        %v510 = vrot.slane %v506, 4
        %v512 = vshrl.u32 %v290, 16
        %v514 = vrot.slane %v512, 7
        %v515 = vshll.u32 %v290, 16
        %v517 = vor.u32 %v514, %v515
        %v518 = vsel %vm298, %v510, %v517
        %v519 = vrot.slane %v514, 4
        %v521 = vshrl.u32 %v291, 16
        %v523 = vrot.slane %v521, 7
        %v524 = vshll.u32 %v291, 16
        %v526 = vor.u32 %v523, %v524
        %v527 = vrot.slane %v523, 4
        %v529 = vshrl.u32 %v292, 16
        %v531 = vrot.slane %v529, 7
        %v532 = vshll.u32 %v292, 16
        %v534 = vor.u32 %v531, %v532
        %v535 = vsel %vm298, %v527, %v534
        %v536 = vrot.slane %v531, 4
        %v538 = vshrl.u32 %v293, 16
        %v540 = vrot.slane %v538, 7
        %v541 = vshll.u32 %v293, 16
        %v543 = vor.u32 %v540, %v541
        %v544 = vrot.slane %v540, 4
        %v546 = vshrl.u32 %v294, 16
        %v548 = vrot.slane %v546, 7
        %v549 = vshll.u32 %v294, 16
        %v551 = vor.u32 %v548, %v549
        %v552 = vsel %vm298, %v544, %v551
        %v553 = vrot.slane %v548, 4
        %v555 = vshrl.u32 %v295, 16
        %v557 = vrot.slane %v555, 7
        %v558 = vshll.u32 %v295, 16
        %v560 = vor.u32 %v557, %v558
        %v561 = vrot.slane %v557, 4
        %v563 = vshrl.u32 %v296, 16
        %v565 = vrot.slane %v563, 7
        %v566 = vshll.u32 %v296, 16
        %v568 = vor.u32 %v565, %v566
        %v569 = vsel %vm298, %v561, %v568
        %v570 = vrot.slane %v565, 4
        %s619 = scalar_lea.vmem [#allocation2], 12
        %vm620 = vcmask 19456
        %vm621 = vmand %vm620, %vm209
        %v622 = vld [vmem:[%s619] sm:$0xf]
        %v623 = vsel %vm621, %v305, %v622
        %624 = vst [vmem:[%s619] sm:$0xf] %v623
        %625 = vst.msk [vmem:[%s619 + $0x4] sm:$0xf] %vm143, %v314
        %v626 = vld [vmem:[%s619 + $0x8] sm:$0x1]
        %v627 = vsel %vm154, %v315, %v626
        %628 = vst [vmem:[%s619 + $0x8] sm:$0x1] %v627
        %v629 = vld [vmem:[%s619 + $0xc] sm:$0xf]
        %v630 = vsel %vm621, %v322, %v629
        %631 = vst [vmem:[%s619 + $0xc] sm:$0xf] %v630
        %632 = vst.msk [vmem:[%s619 + $0x10] sm:$0xf] %vm143, %v331
        %v633 = vld [vmem:[%s619 + $0x14] sm:$0x1]
        %v634 = vsel %vm154, %v332, %v633
        %635 = vst [vmem:[%s619 + $0x14] sm:$0x1] %v634
        %v636 = vld [vmem:[%s619 + $0x18] sm:$0xf]
        %v637 = vsel %vm621, %v339, %v636
        %638 = vst [vmem:[%s619 + $0x18] sm:$0xf] %v637
        %639 = vst.msk [vmem:[%s619 + $0x1c] sm:$0xf] %vm143, %v348
        %v640 = vld [vmem:[%s619 + $0x20] sm:$0x1]
        %v641 = vsel %vm154, %v349, %v640
        %642 = vst [vmem:[%s619 + $0x20] sm:$0x1] %v641
        %v643 = vld [vmem:[%s619 + $0x24] sm:$0xf]
        %v644 = vsel %vm621, %v356, %v643
        %645 = vst [vmem:[%s619 + $0x24] sm:$0xf] %v644
        %646 = vst.msk [vmem:[%s619 + $0x28] sm:$0xf] %vm143, %v365
        %v647 = vld [vmem:[%s619 + $0x2c] sm:$0x1]
        %v648 = vsel %vm154, %v366, %v647
        %649 = vst [vmem:[%s619 + $0x2c] sm:$0x1] %v648
        %v650 = vld [vmem:[%s619 + $0x30] sm:$0xf]
        %v651 = vsel %vm621, %v373, %v650
        %652 = vst [vmem:[%s619 + $0x30] sm:$0xf] %v651
        %653 = vst.msk [vmem:[%s619 + $0x34] sm:$0xf] %vm143, %v382
        %v654 = vld [vmem:[%s619 + $0x38] sm:$0x1]
        %v655 = vsel %vm154, %v383, %v654
        %656 = vst [vmem:[%s619 + $0x38] sm:$0x1] %v655
        %v657 = vld [vmem:[%s619 + $0x3c] sm:$0xf]
        %v658 = vsel %vm621, %v390, %v657
        %659 = vst [vmem:[%s619 + $0x3c] sm:$0xf] %v658
        %660 = vst.msk [vmem:[%s619 + $0x40] sm:$0xf] %vm143, %v399
        %v661 = vld [vmem:[%s619 + $0x44] sm:$0x1]
        %v662 = vsel %vm154, %v400, %v661
        %663 = vst [vmem:[%s619 + $0x44] sm:$0x1] %v662
        %v664 = vld [vmem:[%s619 + $0x48] sm:$0xf]
        %v665 = vsel %vm621, %v407, %v664
        %666 = vst [vmem:[%s619 + $0x48] sm:$0xf] %v665
        %667 = vst.msk [vmem:[%s619 + $0x4c] sm:$0xf] %vm143, %v416
        %v668 = vld [vmem:[%s619 + $0x50] sm:$0x1]
        %v669 = vsel %vm154, %v417, %v668
        %670 = vst [vmem:[%s619 + $0x50] sm:$0x1] %v669
        %v671 = vld [vmem:[%s619 + $0x54] sm:$0xf]
        %v672 = vsel %vm621, %v424, %v671
        %673 = vst [vmem:[%s619 + $0x54] sm:$0xf] %v672
        %674 = vst.msk [vmem:[%s619 + $0x58] sm:$0xf] %vm143, %v433
        %v675 = vld [vmem:[%s619 + $0x5c] sm:$0x1]
        %v676 = vsel %vm154, %v434, %v675
        %677 = vst [vmem:[%s619 + $0x5c] sm:$0x1] %v676
        %v678 = vld [vmem:[%s619 + $0x60] sm:$0xf]
        %v679 = vsel %vm621, %v441, %v678
        %680 = vst [vmem:[%s619 + $0x60] sm:$0xf] %v679
        %681 = vst.msk [vmem:[%s619 + $0x64] sm:$0xf] %vm143, %v450
        %v682 = vld [vmem:[%s619 + $0x68] sm:$0x1]
        %v683 = vsel %vm154, %v451, %v682
        %684 = vst [vmem:[%s619 + $0x68] sm:$0x1] %v683
        %v685 = vld [vmem:[%s619 + $0x6c] sm:$0xf]
        %v686 = vsel %vm621, %v458, %v685
        %687 = vst [vmem:[%s619 + $0x6c] sm:$0xf] %v686
        %688 = vst.msk [vmem:[%s619 + $0x70] sm:$0xf] %vm143, %v467
        %v689 = vld [vmem:[%s619 + $0x74] sm:$0x1]
        %v690 = vsel %vm154, %v468, %v689
        %691 = vst [vmem:[%s619 + $0x74] sm:$0x1] %v690
        %v692 = vld [vmem:[%s619 + $0x78] sm:$0xf]
        %v693 = vsel %vm621, %v475, %v692
        %694 = vst [vmem:[%s619 + $0x78] sm:$0xf] %v693
        %695 = vst.msk [vmem:[%s619 + $0x7c] sm:$0xf] %vm143, %v484
        %v696 = vld [vmem:[%s619 + $0x80] sm:$0x1]
        %v697 = vsel %vm154, %v485, %v696
        %698 = vst [vmem:[%s619 + $0x80] sm:$0x1] %v697
        %v699 = vld [vmem:[%s619 + $0x84] sm:$0xf]
        %v700 = vsel %vm621, %v492, %v699
        %701 = vst [vmem:[%s619 + $0x84] sm:$0xf] %v700
        %702 = vst.msk [vmem:[%s619 + $0x88] sm:$0xf] %vm143, %v501
        %v703 = vld [vmem:[%s619 + $0x8c] sm:$0x1]
        %v704 = vsel %vm154, %v502, %v703
        %705 = vst [vmem:[%s619 + $0x8c] sm:$0x1] %v704
        %v706 = vld [vmem:[%s619 + $0x90] sm:$0xf]
        %v707 = vsel %vm621, %v509, %v706
        %708 = vst [vmem:[%s619 + $0x90] sm:$0xf] %v707
        %709 = vst.msk [vmem:[%s619 + $0x94] sm:$0xf] %vm143, %v518
        %v710 = vld [vmem:[%s619 + $0x98] sm:$0x1]
        %v711 = vsel %vm154, %v519, %v710
        %712 = vst [vmem:[%s619 + $0x98] sm:$0x1] %v711
        %v713 = vld [vmem:[%s619 + $0x9c] sm:$0xf]
        %v714 = vsel %vm621, %v526, %v713
        %715 = vst [vmem:[%s619 + $0x9c] sm:$0xf] %v714
        %716 = vst.msk [vmem:[%s619 + $0xa0] sm:$0xf] %vm143, %v535
        %v717 = vld [vmem:[%s619 + $0xa4] sm:$0x1]
        %v718 = vsel %vm154, %v536, %v717
        %719 = vst [vmem:[%s619 + $0xa4] sm:$0x1] %v718
        %v720 = vld [vmem:[%s619 + $0xa8] sm:$0xf]
        %v721 = vsel %vm621, %v543, %v720
        %722 = vst [vmem:[%s619 + $0xa8] sm:$0xf] %v721
        %723 = vst.msk [vmem:[%s619 + $0xac] sm:$0xf] %vm143, %v552
        %v724 = vld [vmem:[%s619 + $0xb0] sm:$0x1]
        %v725 = vsel %vm154, %v553, %v724
        %726 = vst [vmem:[%s619 + $0xb0] sm:$0x1] %v725
        %v727 = vld [vmem:[%s619 + $0xb4] sm:$0xf]
        %v728 = vsel %vm621, %v560, %v727
        %729 = vst [vmem:[%s619 + $0xb4] sm:$0xf] %v728
        %730 = vst.msk [vmem:[%s619 + $0xb8] sm:$0xf] %vm143, %v569
        %v731 = vld [vmem:[%s619 + $0xbc] sm:$0x1]
        %v732 = vsel %vm154, %v570, %v731
        %733 = vst [vmem:[%s619 + $0xbc] sm:$0x1] %v732
        %v734 = vld [vmem:[#allocation2] sm:$0xf]
        %v735 = vld [vmem:[#allocation2 + $0x4] sm:$0xf]
        %v736 = vld [vmem:[#allocation2 + $0xc] sm:$0xf]
        %v737 = vld [vmem:[#allocation2 + $0x10] sm:$0xf]
        %v738 = vld [vmem:[#allocation2 + $0x18] sm:$0xf]
        %v739 = vld [vmem:[#allocation2 + $0x1c] sm:$0xf]
        %v740 = vld [vmem:[#allocation2 + $0x24] sm:$0xf]
        %v741 = vld [vmem:[#allocation2 + $0x28] sm:$0xf]
        %v742 = vld [vmem:[#allocation2 + $0x30] sm:$0xf]
        %v743 = vld [vmem:[#allocation2 + $0x34] sm:$0xf]
        %v744 = vld [vmem:[#allocation2 + $0x3c] sm:$0xf]
        %v745 = vld [vmem:[#allocation2 + $0x40] sm:$0xf]
        %v746 = vld [vmem:[#allocation2 + $0x48] sm:$0xf]
        %v747 = vld [vmem:[#allocation2 + $0x4c] sm:$0xf]
        %v748 = vld [vmem:[#allocation2 + $0x54] sm:$0xf]
        %v749 = vld [vmem:[#allocation2 + $0x58] sm:$0xf]
        %v750 = vld [vmem:[#allocation2 + $0x60] sm:$0xf]
        %v751 = vld [vmem:[#allocation2 + $0x64] sm:$0xf]
        %v752 = vld [vmem:[#allocation2 + $0x6c] sm:$0xf]
        %v753 = vld [vmem:[#allocation2 + $0x70] sm:$0xf]
        %v754 = vld [vmem:[#allocation2 + $0x78] sm:$0xf]
        %v755 = vld [vmem:[#allocation2 + $0x7c] sm:$0xf]
        %v756 = vld [vmem:[#allocation2 + $0x84] sm:$0xf]
        %v757 = vld [vmem:[#allocation2 + $0x88] sm:$0xf]
        %v758 = vld [vmem:[#allocation2 + $0x90] sm:$0xf]
        %v759 = vld [vmem:[#allocation2 + $0x94] sm:$0xf]
        %v760 = vld [vmem:[#allocation2 + $0x9c] sm:$0xf]
        %v761 = vld [vmem:[#allocation2 + $0xa0] sm:$0xf]
        %v762 = vld [vmem:[#allocation2 + $0xa8] sm:$0xf]
        %v763 = vld [vmem:[#allocation2 + $0xac] sm:$0xf]
        %v764 = vld [vmem:[#allocation2 + $0xb4] sm:$0xf]
        %v765 = vld [vmem:[#allocation2 + $0xb8] sm:$0xf]
        %v798 = vunpack.c.l.b16 %v734
        %v799 = vunpack.c.l.b16 %v735
        %v800 = vunpack.c.l.b16 %v736
        %v801 = vunpack.c.l.b16 %v737
        %v802 = vunpack.c.l.b16 %v738
        %v803 = vunpack.c.l.b16 %v739
        %v804 = vunpack.c.l.b16 %v740
        %v805 = vunpack.c.l.b16 %v741
        %v806 = vunpack.c.l.b16 %v742
        %v807 = vunpack.c.l.b16 %v743
        %v808 = vunpack.c.l.b16 %v744
        %v809 = vunpack.c.l.b16 %v745
        %v810 = vunpack.c.l.b16 %v746
        %v811 = vunpack.c.l.b16 %v747
        %v812 = vunpack.c.l.b16 %v748
        %v813 = vunpack.c.l.b16 %v749
        %v814 = vunpack.c.l.b16 %v750
        %v815 = vunpack.c.l.b16 %v751
        %v816 = vunpack.c.l.b16 %v752
        %v817 = vunpack.c.l.b16 %v753
        %v818 = vunpack.c.l.b16 %v754
        %v819 = vunpack.c.l.b16 %v755
        %v820 = vunpack.c.l.b16 %v756
        %v821 = vunpack.c.l.b16 %v757
        %v822 = vunpack.c.l.b16 %v758
        %v823 = vunpack.c.l.b16 %v759
        %v824 = vunpack.c.l.b16 %v760
        %v825 = vunpack.c.l.b16 %v761
        %v826 = vunpack.c.l.b16 %v762
        %v827 = vunpack.c.l.b16 %v763
        %v828 = vunpack.c.l.b16 %v764
        %v829 = vunpack.c.l.b16 %v765
        %v830 = vpack.c.b16 %v799, %v798
        %v831 = vpack.c.b16 %v801, %v800
        %v832 = vpack.c.b16 %v803, %v802
        %v833 = vpack.c.b16 %v805, %v804
        %v834 = vpack.c.b16 %v807, %v806
        %v835 = vpack.c.b16 %v809, %v808
        %v836 = vpack.c.b16 %v811, %v810
        %v837 = vpack.c.b16 %v813, %v812
        %v838 = vpack.c.b16 %v815, %v814
        %v839 = vpack.c.b16 %v817, %v816
        %v840 = vpack.c.b16 %v819, %v818
        %v841 = vpack.c.b16 %v821, %v820
        %v842 = vpack.c.b16 %v823, %v822
        %v843 = vpack.c.b16 %v825, %v824
        %v844 = vpack.c.b16 %v827, %v826
        %v845 = vpack.c.b16 %v829, %v828
        %vm862 = vcmask 23552
        %863 = vst.msk [vmem:[#allocation3] sm:$0xff] %vm862, %v830
        %864 = vst.msk [vmem:[#allocation3 + $0x8] sm:$0xff] %vm862, %v831
        %865 = vst.msk [vmem:[#allocation3 + $0x10] sm:$0xff] %vm862, %v832
        %866 = vst.msk [vmem:[#allocation3 + $0x18] sm:$0xff] %vm862, %v833
        %867 = vst.msk [vmem:[#allocation3 + $0x20] sm:$0xff] %vm862, %v834
        %868 = vst.msk [vmem:[#allocation3 + $0x28] sm:$0xff] %vm862, %v835
        %869 = vst.msk [vmem:[#allocation3 + $0x30] sm:$0xff] %vm862, %v836
        %870 = vst.msk [vmem:[#allocation3 + $0x38] sm:$0xff] %vm862, %v837
        %871 = vst.msk [vmem:[#allocation3 + $0x40] sm:$0xff] %vm862, %v838
        %872 = vst.msk [vmem:[#allocation3 + $0x48] sm:$0xff] %vm862, %v839
        %873 = vst.msk [vmem:[#allocation3 + $0x50] sm:$0xff] %vm862, %v840
        %874 = vst.msk [vmem:[#allocation3 + $0x58] sm:$0xff] %vm862, %v841
        %875 = vst.msk [vmem:[#allocation3 + $0x60] sm:$0xff] %vm862, %v842
        %876 = vst.msk [vmem:[#allocation3 + $0x68] sm:$0xff] %vm862, %v843
        %877 = vst.msk [vmem:[#allocation3 + $0x70] sm:$0xff] %vm862, %v844
        %878 = vst.msk [vmem:[#allocation3 + $0x78] sm:$0xff] %vm862, %v845
        %v879 = vld [vmem:[#allocation2] sm:$0xf]
        %v880 = vld [vmem:[#allocation2 + $0x4] sm:$0xf]
        %v881 = vld [vmem:[#allocation2 + $0x8] sm:$0x1]
        %v882 = vld [vmem:[#allocation2 + $0xc] sm:$0xf]
        %v883 = vld [vmem:[#allocation2 + $0x10] sm:$0xf]
        %v884 = vld [vmem:[#allocation2 + $0x14] sm:$0x1]
        %v885 = vld [vmem:[#allocation2 + $0x18] sm:$0xf]
        %v886 = vld [vmem:[#allocation2 + $0x1c] sm:$0xf]
        %v887 = vld [vmem:[#allocation2 + $0x20] sm:$0x1]
        %v888 = vld [vmem:[#allocation2 + $0x24] sm:$0xf]
        %v889 = vld [vmem:[#allocation2 + $0x28] sm:$0xf]
        %v890 = vld [vmem:[#allocation2 + $0x2c] sm:$0x1]
        %v891 = vld [vmem:[#allocation2 + $0x30] sm:$0xf]
        %v892 = vld [vmem:[#allocation2 + $0x34] sm:$0xf]
        %v893 = vld [vmem:[#allocation2 + $0x38] sm:$0x1]
        %v894 = vld [vmem:[#allocation2 + $0x3c] sm:$0xf]
        %v895 = vld [vmem:[#allocation2 + $0x40] sm:$0xf]
        %v896 = vld [vmem:[#allocation2 + $0x44] sm:$0x1]
        %v897 = vld [vmem:[#allocation2 + $0x48] sm:$0xf]
        %v898 = vld [vmem:[#allocation2 + $0x4c] sm:$0xf]
        %v899 = vld [vmem:[#allocation2 + $0x50] sm:$0x1]
        %v900 = vld [vmem:[#allocation2 + $0x54] sm:$0xf]
        %v901 = vld [vmem:[#allocation2 + $0x58] sm:$0xf]
        %v902 = vld [vmem:[#allocation2 + $0x5c] sm:$0x1]
        %v903 = vld [vmem:[#allocation2 + $0x60] sm:$0xf]
        %v904 = vld [vmem:[#allocation2 + $0x64] sm:$0xf]
        %v905 = vld [vmem:[#allocation2 + $0x68] sm:$0x1]
        %v906 = vld [vmem:[#allocation2 + $0x6c] sm:$0xf]
        %v907 = vld [vmem:[#allocation2 + $0x70] sm:$0xf]
        %v908 = vld [vmem:[#allocation2 + $0x74] sm:$0x1]
        %v909 = vld [vmem:[#allocation2 + $0x78] sm:$0xf]
        %v910 = vld [vmem:[#allocation2 + $0x7c] sm:$0xf]
        %v911 = vld [vmem:[#allocation2 + $0x80] sm:$0x1]
        %v912 = vld [vmem:[#allocation2 + $0x84] sm:$0xf]
        %v913 = vld [vmem:[#allocation2 + $0x88] sm:$0xf]
        %v914 = vld [vmem:[#allocation2 + $0x8c] sm:$0x1]
        %v915 = vld [vmem:[#allocation2 + $0x90] sm:$0xf]
        %v916 = vld [vmem:[#allocation2 + $0x94] sm:$0xf]
        %v917 = vld [vmem:[#allocation2 + $0x98] sm:$0x1]
        %v918 = vld [vmem:[#allocation2 + $0x9c] sm:$0xf]
        %v919 = vld [vmem:[#allocation2 + $0xa0] sm:$0xf]
        %v920 = vld [vmem:[#allocation2 + $0xa4] sm:$0x1]
        %v921 = vld [vmem:[#allocation2 + $0xa8] sm:$0xf]
        %v922 = vld [vmem:[#allocation2 + $0xac] sm:$0xf]
        %v923 = vld [vmem:[#allocation2 + $0xb0] sm:$0x1]
        %v924 = vld [vmem:[#allocation2 + $0xb4] sm:$0xf]
        %v925 = vld [vmem:[#allocation2 + $0xb8] sm:$0xf]
        %v926 = vld [vmem:[#allocation2 + $0xbc] sm:$0x1]
        %vm927 = vsmask.f32 3328
        %vm928 = vsmask.f32 7440
        %vm929 = vmor %vm927, %vm928
        %v931 = vshrl.u32 %v879, 16
        %v933 = vrot.slane %v931, 4
        %v934 = vshll.u32 %v879, 16
        %v936 = vrot.slane %v934, 5
        %v937 = vor.u32 %v933, %v936
        %v938 = vrot.slane %v937, 4
        %v940 = vshll.u32 %v880, 16
        %v942 = vrot.slane %v940, 5
        %v943 = vsel %vm929, %v938, %v942
        %v944 = vshrl.u32 %v880, 16
        %v946 = vrot.slane %v944, 4
        %v947 = vor.u32 %v946, %v942
        %v948 = vrot.slane %v947, 4
        %v950 = vshll.u32 %v881, 16
        %v952 = vrot.slane %v950, 5
        %v953 = vsel %vm929, %v948, %v952
        %v955 = vshrl.u32 %v882, 16
        %v957 = vrot.slane %v955, 4
        %v958 = vshll.u32 %v882, 16
        %v960 = vrot.slane %v958, 5
        %v961 = vor.u32 %v957, %v960
        %v962 = vrot.slane %v961, 4
        %v964 = vshll.u32 %v883, 16
        %v966 = vrot.slane %v964, 5
        %v967 = vsel %vm929, %v962, %v966
        %v968 = vshrl.u32 %v883, 16
        %v970 = vrot.slane %v968, 4
        %v971 = vor.u32 %v970, %v966
        %v972 = vrot.slane %v971, 4
        %v974 = vshll.u32 %v884, 16
        %v976 = vrot.slane %v974, 5
        %v977 = vsel %vm929, %v972, %v976
        %v979 = vshrl.u32 %v885, 16
        %v981 = vrot.slane %v979, 4
        %v982 = vshll.u32 %v885, 16
        %v984 = vrot.slane %v982, 5
        %v985 = vor.u32 %v981, %v984
        %v986 = vrot.slane %v985, 4
        %v988 = vshll.u32 %v886, 16
        %v990 = vrot.slane %v988, 5
        %v991 = vsel %vm929, %v986, %v990
        %v992 = vshrl.u32 %v886, 16
        %v994 = vrot.slane %v992, 4
        %v995 = vor.u32 %v994, %v990
        %v996 = vrot.slane %v995, 4
        %v998 = vshll.u32 %v887, 16
        %v1000 = vrot.slane %v998, 5
        %v1001 = vsel %vm929, %v996, %v1000
        %v1003 = vshrl.u32 %v888, 16
        %v1005 = vrot.slane %v1003, 4
        %v1006 = vshll.u32 %v888, 16
        %v1008 = vrot.slane %v1006, 5
        %v1009 = vor.u32 %v1005, %v1008
        %v1010 = vrot.slane %v1009, 4
        %v1012 = vshll.u32 %v889, 16
        %v1014 = vrot.slane %v1012, 5
        %v1015 = vsel %vm929, %v1010, %v1014
        %v1016 = vshrl.u32 %v889, 16
        %v1018 = vrot.slane %v1016, 4
        %v1019 = vor.u32 %v1018, %v1014
        %v1020 = vrot.slane %v1019, 4
        %v1022 = vshll.u32 %v890, 16
        %v1024 = vrot.slane %v1022, 5
        %v1025 = vsel %vm929, %v1020, %v1024
        %v1027 = vshrl.u32 %v891, 16
        %v1029 = vrot.slane %v1027, 4
        %v1030 = vshll.u32 %v891, 16
        %v1032 = vrot.slane %v1030, 5
        %v1033 = vor.u32 %v1029, %v1032
        %v1034 = vrot.slane %v1033, 4
        %v1036 = vshll.u32 %v892, 16
        %v1038 = vrot.slane %v1036, 5
        %v1039 = vsel %vm929, %v1034, %v1038
        %v1040 = vshrl.u32 %v892, 16
        %v1042 = vrot.slane %v1040, 4
        %v1043 = vor.u32 %v1042, %v1038
        %v1044 = vrot.slane %v1043, 4
        %v1046 = vshll.u32 %v893, 16
        %v1048 = vrot.slane %v1046, 5
        %v1049 = vsel %vm929, %v1044, %v1048
        %v1051 = vshrl.u32 %v894, 16
        %v1053 = vrot.slane %v1051, 4
        %v1054 = vshll.u32 %v894, 16
        %v1056 = vrot.slane %v1054, 5
        %v1057 = vor.u32 %v1053, %v1056
        %v1058 = vrot.slane %v1057, 4
        %v1060 = vshll.u32 %v895, 16
        %v1062 = vrot.slane %v1060, 5
        %v1063 = vsel %vm929, %v1058, %v1062
        %v1064 = vshrl.u32 %v895, 16
        %v1066 = vrot.slane %v1064, 4
        %v1067 = vor.u32 %v1066, %v1062
        %v1068 = vrot.slane %v1067, 4
        %v1070 = vshll.u32 %v896, 16
        %v1072 = vrot.slane %v1070, 5
        %v1073 = vsel %vm929, %v1068, %v1072
        %v1075 = vshrl.u32 %v897, 16
        %v1077 = vrot.slane %v1075, 4
        %v1078 = vshll.u32 %v897, 16
        %v1080 = vrot.slane %v1078, 5
        %v1081 = vor.u32 %v1077, %v1080
        %v1082 = vrot.slane %v1081, 4
        %v1084 = vshll.u32 %v898, 16
        %v1086 = vrot.slane %v1084, 5
        %v1087 = vsel %vm929, %v1082, %v1086
        %v1088 = vshrl.u32 %v898, 16
        %v1090 = vrot.slane %v1088, 4
        %v1091 = vor.u32 %v1090, %v1086
        %v1092 = vrot.slane %v1091, 4
        %v1094 = vshll.u32 %v899, 16
        %v1096 = vrot.slane %v1094, 5
        %v1097 = vsel %vm929, %v1092, %v1096
        %v1099 = vshrl.u32 %v900, 16
        %v1101 = vrot.slane %v1099, 4
        %v1102 = vshll.u32 %v900, 16
        %v1104 = vrot.slane %v1102, 5
        %v1105 = vor.u32 %v1101, %v1104
        %v1106 = vrot.slane %v1105, 4
        %v1108 = vshll.u32 %v901, 16
        %v1110 = vrot.slane %v1108, 5
        %v1111 = vsel %vm929, %v1106, %v1110
        %v1112 = vshrl.u32 %v901, 16
        %v1114 = vrot.slane %v1112, 4
        %v1115 = vor.u32 %v1114, %v1110
        %v1116 = vrot.slane %v1115, 4
        %v1118 = vshll.u32 %v902, 16
        %v1120 = vrot.slane %v1118, 5
        %v1121 = vsel %vm929, %v1116, %v1120
        %v1123 = vshrl.u32 %v903, 16
        %v1125 = vrot.slane %v1123, 4
        %v1126 = vshll.u32 %v903, 16
        %v1128 = vrot.slane %v1126, 5
        %v1129 = vor.u32 %v1125, %v1128
        %v1130 = vrot.slane %v1129, 4
        %v1132 = vshll.u32 %v904, 16
        %v1134 = vrot.slane %v1132, 5
        %v1135 = vsel %vm929, %v1130, %v1134
        %v1136 = vshrl.u32 %v904, 16
        %v1138 = vrot.slane %v1136, 4
        %v1139 = vor.u32 %v1138, %v1134
        %v1140 = vrot.slane %v1139, 4
        %v1142 = vshll.u32 %v905, 16
        %v1144 = vrot.slane %v1142, 5
        %v1145 = vsel %vm929, %v1140, %v1144
        %v1147 = vshrl.u32 %v906, 16
        %v1149 = vrot.slane %v1147, 4
        %v1150 = vshll.u32 %v906, 16
        %v1152 = vrot.slane %v1150, 5
        %v1153 = vor.u32 %v1149, %v1152
        %v1154 = vrot.slane %v1153, 4
        %v1156 = vshll.u32 %v907, 16
        %v1158 = vrot.slane %v1156, 5
        %v1159 = vsel %vm929, %v1154, %v1158
        %v1160 = vshrl.u32 %v907, 16
        %v1162 = vrot.slane %v1160, 4
        %v1163 = vor.u32 %v1162, %v1158
        %v1164 = vrot.slane %v1163, 4
        %v1166 = vshll.u32 %v908, 16
        %v1168 = vrot.slane %v1166, 5
        %v1169 = vsel %vm929, %v1164, %v1168
        %v1171 = vshrl.u32 %v909, 16
        %v1173 = vrot.slane %v1171, 4
        %v1174 = vshll.u32 %v909, 16
        %v1176 = vrot.slane %v1174, 5
        %v1177 = vor.u32 %v1173, %v1176
        %v1178 = vrot.slane %v1177, 4
        %v1180 = vshll.u32 %v910, 16
        %v1182 = vrot.slane %v1180, 5
        %v1183 = vsel %vm929, %v1178, %v1182
        %v1184 = vshrl.u32 %v910, 16
        %v1186 = vrot.slane %v1184, 4
        %v1187 = vor.u32 %v1186, %v1182
        %v1188 = vrot.slane %v1187, 4
        %v1190 = vshll.u32 %v911, 16
        %v1192 = vrot.slane %v1190, 5
        %v1193 = vsel %vm929, %v1188, %v1192
        %v1195 = vshrl.u32 %v912, 16
        %v1197 = vrot.slane %v1195, 4
        %v1198 = vshll.u32 %v912, 16
        %v1200 = vrot.slane %v1198, 5
        %v1201 = vor.u32 %v1197, %v1200
        %v1202 = vrot.slane %v1201, 4
        %v1204 = vshll.u32 %v913, 16
        %v1206 = vrot.slane %v1204, 5
        %v1207 = vsel %vm929, %v1202, %v1206
        %v1208 = vshrl.u32 %v913, 16
        %v1210 = vrot.slane %v1208, 4
        %v1211 = vor.u32 %v1210, %v1206
        %v1212 = vrot.slane %v1211, 4
        %v1214 = vshll.u32 %v914, 16
        %v1216 = vrot.slane %v1214, 5
        %v1217 = vsel %vm929, %v1212, %v1216
        %v1219 = vshrl.u32 %v915, 16
        %v1221 = vrot.slane %v1219, 4
        %v1222 = vshll.u32 %v915, 16
        %v1224 = vrot.slane %v1222, 5
        %v1225 = vor.u32 %v1221, %v1224
        %v1226 = vrot.slane %v1225, 4
        %v1228 = vshll.u32 %v916, 16
        %v1230 = vrot.slane %v1228, 5
        %v1231 = vsel %vm929, %v1226, %v1230
        %v1232 = vshrl.u32 %v916, 16
        %v1234 = vrot.slane %v1232, 4
        %v1235 = vor.u32 %v1234, %v1230
        %v1236 = vrot.slane %v1235, 4
        %v1238 = vshll.u32 %v917, 16
        %v1240 = vrot.slane %v1238, 5
        %v1241 = vsel %vm929, %v1236, %v1240
        %v1243 = vshrl.u32 %v918, 16
        %v1245 = vrot.slane %v1243, 4
        %v1246 = vshll.u32 %v918, 16
        %v1248 = vrot.slane %v1246, 5
        %v1249 = vor.u32 %v1245, %v1248
        %v1250 = vrot.slane %v1249, 4
        %v1252 = vshll.u32 %v919, 16
        %v1254 = vrot.slane %v1252, 5
        %v1255 = vsel %vm929, %v1250, %v1254
        %v1256 = vshrl.u32 %v919, 16
        %v1258 = vrot.slane %v1256, 4
        %v1259 = vor.u32 %v1258, %v1254
        %v1260 = vrot.slane %v1259, 4
        %v1262 = vshll.u32 %v920, 16
        %v1264 = vrot.slane %v1262, 5
        %v1265 = vsel %vm929, %v1260, %v1264
        %v1267 = vshrl.u32 %v921, 16
        %v1269 = vrot.slane %v1267, 4
        %v1270 = vshll.u32 %v921, 16
        %v1272 = vrot.slane %v1270, 5
        %v1273 = vor.u32 %v1269, %v1272
        %v1274 = vrot.slane %v1273, 4
        %v1276 = vshll.u32 %v922, 16
        %v1278 = vrot.slane %v1276, 5
        %v1279 = vsel %vm929, %v1274, %v1278
        %v1280 = vshrl.u32 %v922, 16
        %v1282 = vrot.slane %v1280, 4
        %v1283 = vor.u32 %v1282, %v1278
        %v1284 = vrot.slane %v1283, 4
        %v1286 = vshll.u32 %v923, 16
        %v1288 = vrot.slane %v1286, 5
        %v1289 = vsel %vm929, %v1284, %v1288
        %v1291 = vshrl.u32 %v924, 16
        %v1293 = vrot.slane %v1291, 4
        %v1294 = vshll.u32 %v924, 16
        %v1296 = vrot.slane %v1294, 5
        %v1297 = vor.u32 %v1293, %v1296
        %v1298 = vrot.slane %v1297, 4
        %v1300 = vshll.u32 %v925, 16
        %v1302 = vrot.slane %v1300, 5
        %v1303 = vsel %vm929, %v1298, %v1302
        %v1304 = vshrl.u32 %v925, 16
        %v1306 = vrot.slane %v1304, 4
        %v1307 = vor.u32 %v1306, %v1302
        %v1308 = vrot.slane %v1307, 4
        %v1310 = vshll.u32 %v926, 16
        %v1312 = vrot.slane %v1310, 5
        %v1313 = vsel %vm929, %v1308, %v1312
        %v1314 = vunpack.c.l.b16 %v943
        %v1315 = vunpack.c.l.b16 %v953
        %v1316 = vunpack.c.l.b16 %v967
        %v1317 = vunpack.c.l.b16 %v977
        %v1318 = vunpack.c.l.b16 %v991
        %v1319 = vunpack.c.l.b16 %v1001
        %v1320 = vunpack.c.l.b16 %v1015
        %v1321 = vunpack.c.l.b16 %v1025
        %v1322 = vunpack.c.l.b16 %v1039
        %v1323 = vunpack.c.l.b16 %v1049
        %v1324 = vunpack.c.l.b16 %v1063
        %v1325 = vunpack.c.l.b16 %v1073
        %v1326 = vunpack.c.l.b16 %v1087
        %v1327 = vunpack.c.l.b16 %v1097
        %v1328 = vunpack.c.l.b16 %v1111
        %v1329 = vunpack.c.l.b16 %v1121
        %v1330 = vunpack.c.l.b16 %v1135
        %v1331 = vunpack.c.l.b16 %v1145
        %v1332 = vunpack.c.l.b16 %v1159
        %v1333 = vunpack.c.l.b16 %v1169
        %v1334 = vunpack.c.l.b16 %v1183
        %v1335 = vunpack.c.l.b16 %v1193
        %v1336 = vunpack.c.l.b16 %v1207
        %v1337 = vunpack.c.l.b16 %v1217
        %v1338 = vunpack.c.l.b16 %v1231
        %v1339 = vunpack.c.l.b16 %v1241
        %v1340 = vunpack.c.l.b16 %v1255
        %v1341 = vunpack.c.l.b16 %v1265
        %v1342 = vunpack.c.l.b16 %v1279
        %v1343 = vunpack.c.l.b16 %v1289
        %v1344 = vunpack.c.l.b16 %v1303
        %v1345 = vunpack.c.l.b16 %v1313
        %v1346 = vpack.c.b16 %v1315, %v1314
        %v1347 = vpack.c.b16 %v1317, %v1316
        %v1348 = vpack.c.b16 %v1319, %v1318
        %v1349 = vpack.c.b16 %v1321, %v1320
        %v1350 = vpack.c.b16 %v1323, %v1322
        %v1351 = vpack.c.b16 %v1325, %v1324
        %v1352 = vpack.c.b16 %v1327, %v1326
        %v1353 = vpack.c.b16 %v1329, %v1328
        %v1354 = vpack.c.b16 %v1331, %v1330
        %v1355 = vpack.c.b16 %v1333, %v1332
        %v1356 = vpack.c.b16 %v1335, %v1334
        %v1357 = vpack.c.b16 %v1337, %v1336
        %v1358 = vpack.c.b16 %v1339, %v1338
        %v1359 = vpack.c.b16 %v1341, %v1340
        %v1360 = vpack.c.b16 %v1343, %v1342
        %v1361 = vpack.c.b16 %v1345, %v1344
        %1362 = vrot.lane.b32.xlu0 %v1346, 3
        %v1363 = vpop.permute.xlu0 %1362
        %1364 = vrot.lane.b32.xlu0 %v1347, 3
        %v1365 = vpop.permute.xlu0 %1364
        %1366 = vrot.lane.b32.xlu0 %v1348, 3
        %v1367 = vpop.permute.xlu0 %1366
        %1368 = vrot.lane.b32.xlu0 %v1349, 3
        %v1369 = vpop.permute.xlu0 %1368
        %1370 = vrot.lane.b32.xlu0 %v1350, 3
        %v1371 = vpop.permute.xlu0 %1370
        %1372 = vrot.lane.b32.xlu0 %v1351, 3
        %v1373 = vpop.permute.xlu0 %1372
        %1374 = vrot.lane.b32.xlu0 %v1352, 3
        %v1375 = vpop.permute.xlu0 %1374
        %1376 = vrot.lane.b32.xlu0 %v1353, 3
        %v1377 = vpop.permute.xlu0 %1376
        %1378 = vrot.lane.b32.xlu0 %v1354, 3
        %v1379 = vpop.permute.xlu0 %1378
        %1380 = vrot.lane.b32.xlu0 %v1355, 3
        %v1381 = vpop.permute.xlu0 %1380
        %1382 = vrot.lane.b32.xlu0 %v1356, 3
        %v1383 = vpop.permute.xlu0 %1382
        %1384 = vrot.lane.b32.xlu0 %v1357, 3
        %v1385 = vpop.permute.xlu0 %1384
        %1386 = vrot.lane.b32.xlu0 %v1358, 3
        %v1387 = vpop.permute.xlu0 %1386
        %1388 = vrot.lane.b32.xlu0 %v1359, 3
        %v1389 = vpop.permute.xlu0 %1388
        %1390 = vrot.lane.b32.xlu0 %v1360, 3
        %v1391 = vpop.permute.xlu0 %1390
        %1392 = vrot.lane.b32.xlu0 %v1361, 3
        %v1393 = vpop.permute.xlu0 %1392
        %vm1410 = vcmask 48152
        %1411 = vst.msk [vmem:[#allocation3] sm:$0xff] %vm1410, %v1363
        %1412 = vst.msk [vmem:[#allocation3 + $0x8] sm:$0xff] %vm1410, %v1365
        %1413 = vst.msk [vmem:[#allocation3 + $0x10] sm:$0xff] %vm1410, %v1367
        %1414 = vst.msk [vmem:[#allocation3 + $0x18] sm:$0xff] %vm1410, %v1369
        %1415 = vst.msk [vmem:[#allocation3 + $0x20] sm:$0xff] %vm1410, %v1371
        %1416 = vst.msk [vmem:[#allocation3 + $0x28] sm:$0xff] %vm1410, %v1373
        %1417 = vst.msk [vmem:[#allocation3 + $0x30] sm:$0xff] %vm1410, %v1375
        %1418 = vst.msk [vmem:[#allocation3 + $0x38] sm:$0xff] %vm1410, %v1377
        %1419 = vst.msk [vmem:[#allocation3 + $0x40] sm:$0xff] %vm1410, %v1379
        %1420 = vst.msk [vmem:[#allocation3 + $0x48] sm:$0xff] %vm1410, %v1381
        %1421 = vst.msk [vmem:[#allocation3 + $0x50] sm:$0xff] %vm1410, %v1383
        %1422 = vst.msk [vmem:[#allocation3 + $0x58] sm:$0xff] %vm1410, %v1385
        %1423 = vst.msk [vmem:[#allocation3 + $0x60] sm:$0xff] %vm1410, %v1387
        %1424 = vst.msk [vmem:[#allocation3 + $0x68] sm:$0xff] %vm1410, %v1389
        %1425 = vst.msk [vmem:[#allocation3 + $0x70] sm:$0xff] %vm1410, %v1391
        %1426 = vst.msk [vmem:[#allocation3 + $0x78] sm:$0xff] %vm1410, %v1393
        %v1427 = vld [vmem:[#allocation2] sm:$0xe]
        %v1428 = vld [vmem:[#allocation2 + $0x4] sm:$0xf]
        %v1429 = vld [vmem:[#allocation2 + $0x8] sm:$0x1]
        %v1430 = vld [vmem:[#allocation2 + $0xc] sm:$0xe]
        %v1431 = vld [vmem:[#allocation2 + $0x10] sm:$0xf]
        %v1432 = vld [vmem:[#allocation2 + $0x14] sm:$0x1]
        %v1433 = vld [vmem:[#allocation2 + $0x18] sm:$0xe]
        %v1434 = vld [vmem:[#allocation2 + $0x1c] sm:$0xf]
        %v1435 = vld [vmem:[#allocation2 + $0x20] sm:$0x1]
        %v1436 = vld [vmem:[#allocation2 + $0x24] sm:$0xe]
        %v1437 = vld [vmem:[#allocation2 + $0x28] sm:$0xf]
        %v1438 = vld [vmem:[#allocation2 + $0x2c] sm:$0x1]
        %v1439 = vld [vmem:[#allocation2 + $0x30] sm:$0xe]
        %v1440 = vld [vmem:[#allocation2 + $0x34] sm:$0xf]
        %v1441 = vld [vmem:[#allocation2 + $0x38] sm:$0x1]
        %v1442 = vld [vmem:[#allocation2 + $0x3c] sm:$0xe]
        %v1443 = vld [vmem:[#allocation2 + $0x40] sm:$0xf]
        %v1444 = vld [vmem:[#allocation2 + $0x44] sm:$0x1]
        %v1445 = vld [vmem:[#allocation2 + $0x48] sm:$0xe]
        %v1446 = vld [vmem:[#allocation2 + $0x4c] sm:$0xf]
        %v1447 = vld [vmem:[#allocation2 + $0x50] sm:$0x1]
        %v1448 = vld [vmem:[#allocation2 + $0x54] sm:$0xe]
        %v1449 = vld [vmem:[#allocation2 + $0x58] sm:$0xf]
        %v1450 = vld [vmem:[#allocation2 + $0x5c] sm:$0x1]
        %v1451 = vld [vmem:[#allocation2 + $0x60] sm:$0xe]
        %v1452 = vld [vmem:[#allocation2 + $0x64] sm:$0xf]
        %v1453 = vld [vmem:[#allocation2 + $0x68] sm:$0x1]
        %v1454 = vld [vmem:[#allocation2 + $0x6c] sm:$0xe]
        %v1455 = vld [vmem:[#allocation2 + $0x70] sm:$0xf]
        %v1456 = vld [vmem:[#allocation2 + $0x74] sm:$0x1]
        %v1457 = vld [vmem:[#allocation2 + $0x78] sm:$0xe]
        %v1458 = vld [vmem:[#allocation2 + $0x7c] sm:$0xf]
        %v1459 = vld [vmem:[#allocation2 + $0x80] sm:$0x1]
        %v1460 = vld [vmem:[#allocation2 + $0x84] sm:$0xe]
        %v1461 = vld [vmem:[#allocation2 + $0x88] sm:$0xf]
        %v1462 = vld [vmem:[#allocation2 + $0x8c] sm:$0x1]
        %v1463 = vld [vmem:[#allocation2 + $0x90] sm:$0xe]
        %v1464 = vld [vmem:[#allocation2 + $0x94] sm:$0xf]
        %v1465 = vld [vmem:[#allocation2 + $0x98] sm:$0x1]
        %v1466 = vld [vmem:[#allocation2 + $0x9c] sm:$0xe]
        %v1467 = vld [vmem:[#allocation2 + $0xa0] sm:$0xf]
        %v1468 = vld [vmem:[#allocation2 + $0xa4] sm:$0x1]
        %v1469 = vld [vmem:[#allocation2 + $0xa8] sm:$0xe]
        %v1470 = vld [vmem:[#allocation2 + $0xac] sm:$0xf]
        %v1471 = vld [vmem:[#allocation2 + $0xb0] sm:$0x1]
        %v1472 = vld [vmem:[#allocation2 + $0xb4] sm:$0xe]
        %v1473 = vld [vmem:[#allocation2 + $0xb8] sm:$0xf]
        %v1474 = vld [vmem:[#allocation2 + $0xbc] sm:$0x1]
        %vm1523 = vcmask 1042432
        %vm1524 = vcmask 1046532
        %vm1525 = vmor %vm1523, %vm1524
        %v1526 = vrot.slane %v1427, 5
        %v1527 = vrot.slane %v1526, 4
        %v1528 = vrot.slane %v1428, 5
        %v1529 = vsel %vm1525, %v1527, %v1528
        %v1530 = vrot.slane %v1528, 4
        %v1531 = vrot.slane %v1429, 5
        %v1532 = vsel %vm1525, %v1530, %v1531
        %v1533 = vrot.slane %v1430, 5
        %v1534 = vrot.slane %v1533, 4
        %v1535 = vrot.slane %v1431, 5
        %v1536 = vsel %vm1525, %v1534, %v1535
        %v1537 = vrot.slane %v1535, 4
        %v1538 = vrot.slane %v1432, 5
        %v1539 = vsel %vm1525, %v1537, %v1538
        %v1540 = vrot.slane %v1433, 5
        %v1541 = vrot.slane %v1540, 4
        %v1542 = vrot.slane %v1434, 5
        %v1543 = vsel %vm1525, %v1541, %v1542
        %v1544 = vrot.slane %v1542, 4
        %v1545 = vrot.slane %v1435, 5
        %v1546 = vsel %vm1525, %v1544, %v1545
        %v1547 = vrot.slane %v1436, 5
        %v1548 = vrot.slane %v1547, 4
        %v1549 = vrot.slane %v1437, 5
        %v1550 = vsel %vm1525, %v1548, %v1549
        %v1551 = vrot.slane %v1549, 4
        %v1552 = vrot.slane %v1438, 5
        %v1553 = vsel %vm1525, %v1551, %v1552
        %v1554 = vrot.slane %v1439, 5
        %v1555 = vrot.slane %v1554, 4
        %v1556 = vrot.slane %v1440, 5
        %v1557 = vsel %vm1525, %v1555, %v1556
        %v1558 = vrot.slane %v1556, 4
        %v1559 = vrot.slane %v1441, 5
        %v1560 = vsel %vm1525, %v1558, %v1559
        %v1561 = vrot.slane %v1442, 5
        %v1562 = vrot.slane %v1561, 4
        %v1563 = vrot.slane %v1443, 5
        %v1564 = vsel %vm1525, %v1562, %v1563
        %v1565 = vrot.slane %v1563, 4
        %v1566 = vrot.slane %v1444, 5
        %v1567 = vsel %vm1525, %v1565, %v1566
        %v1568 = vrot.slane %v1445, 5
        %v1569 = vrot.slane %v1568, 4
        %v1570 = vrot.slane %v1446, 5
        %v1571 = vsel %vm1525, %v1569, %v1570
        %v1572 = vrot.slane %v1570, 4
        %v1573 = vrot.slane %v1447, 5
        %v1574 = vsel %vm1525, %v1572, %v1573
        %v1575 = vrot.slane %v1448, 5
        %v1576 = vrot.slane %v1575, 4
        %v1577 = vrot.slane %v1449, 5
        %v1578 = vsel %vm1525, %v1576, %v1577
        %v1579 = vrot.slane %v1577, 4
        %v1580 = vrot.slane %v1450, 5
        %v1581 = vsel %vm1525, %v1579, %v1580
        %v1582 = vrot.slane %v1451, 5
        %v1583 = vrot.slane %v1582, 4
        %v1584 = vrot.slane %v1452, 5
        %v1585 = vsel %vm1525, %v1583, %v1584
        %v1586 = vrot.slane %v1584, 4
        %v1587 = vrot.slane %v1453, 5
        %v1588 = vsel %vm1525, %v1586, %v1587
        %v1589 = vrot.slane %v1454, 5
        %v1590 = vrot.slane %v1589, 4
        %v1591 = vrot.slane %v1455, 5
        %v1592 = vsel %vm1525, %v1590, %v1591
        %v1593 = vrot.slane %v1591, 4
        %v1594 = vrot.slane %v1456, 5
        %v1595 = vsel %vm1525, %v1593, %v1594
        %v1596 = vrot.slane %v1457, 5
        %v1597 = vrot.slane %v1596, 4
        %v1598 = vrot.slane %v1458, 5
        %v1599 = vsel %vm1525, %v1597, %v1598
        %v1600 = vrot.slane %v1598, 4
        %v1601 = vrot.slane %v1459, 5
        %v1602 = vsel %vm1525, %v1600, %v1601
        %v1603 = vrot.slane %v1460, 5
        %v1604 = vrot.slane %v1603, 4
        %v1605 = vrot.slane %v1461, 5
        %v1606 = vsel %vm1525, %v1604, %v1605
        %v1607 = vrot.slane %v1605, 4
        %v1608 = vrot.slane %v1462, 5
        %v1609 = vsel %vm1525, %v1607, %v1608
        %v1610 = vrot.slane %v1463, 5
        %v1611 = vrot.slane %v1610, 4
        %v1612 = vrot.slane %v1464, 5
        %v1613 = vsel %vm1525, %v1611, %v1612
        %v1614 = vrot.slane %v1612, 4
        %v1615 = vrot.slane %v1465, 5
        %v1616 = vsel %vm1525, %v1614, %v1615
        %v1617 = vrot.slane %v1466, 5
        %v1618 = vrot.slane %v1617, 4
        %v1619 = vrot.slane %v1467, 5
        %v1620 = vsel %vm1525, %v1618, %v1619
        %v1621 = vrot.slane %v1619, 4
        %v1622 = vrot.slane %v1468, 5
        %v1623 = vsel %vm1525, %v1621, %v1622
        %v1624 = vrot.slane %v1469, 5
        %v1625 = vrot.slane %v1624, 4
        %v1626 = vrot.slane %v1470, 5
        %v1627 = vsel %vm1525, %v1625, %v1626
        %v1628 = vrot.slane %v1626, 4
        %v1629 = vrot.slane %v1471, 5
        %v1630 = vsel %vm1525, %v1628, %v1629
        %v1631 = vrot.slane %v1472, 5
        %v1632 = vrot.slane %v1631, 4
        %v1633 = vrot.slane %v1473, 5
        %v1634 = vsel %vm1525, %v1632, %v1633
        %v1635 = vrot.slane %v1633, 4
        %v1636 = vrot.slane %v1474, 5
        %v1637 = vsel %vm1525, %v1635, %v1636
        %v1638 = vunpack.c.l.b16 %v1529
        %v1639 = vunpack.c.l.b16 %v1532
        %v1640 = vunpack.c.l.b16 %v1536
        %v1641 = vunpack.c.l.b16 %v1539
        %v1642 = vunpack.c.l.b16 %v1543
        %v1643 = vunpack.c.l.b16 %v1546
        %v1644 = vunpack.c.l.b16 %v1550
        %v1645 = vunpack.c.l.b16 %v1553
        %v1646 = vunpack.c.l.b16 %v1557
        %v1647 = vunpack.c.l.b16 %v1560
        %v1648 = vunpack.c.l.b16 %v1564
        %v1649 = vunpack.c.l.b16 %v1567
        %v1650 = vunpack.c.l.b16 %v1571
        %v1651 = vunpack.c.l.b16 %v1574
        %v1652 = vunpack.c.l.b16 %v1578
        %v1653 = vunpack.c.l.b16 %v1581
        %v1654 = vunpack.c.l.b16 %v1585
        %v1655 = vunpack.c.l.b16 %v1588
        %v1656 = vunpack.c.l.b16 %v1592
        %v1657 = vunpack.c.l.b16 %v1595
        %v1658 = vunpack.c.l.b16 %v1599
        %v1659 = vunpack.c.l.b16 %v1602
        %v1660 = vunpack.c.l.b16 %v1606
        %v1661 = vunpack.c.l.b16 %v1609
        %v1662 = vunpack.c.l.b16 %v1613
        %v1663 = vunpack.c.l.b16 %v1616
        %v1664 = vunpack.c.l.b16 %v1620
        %v1665 = vunpack.c.l.b16 %v1623
        %v1666 = vunpack.c.l.b16 %v1627
        %v1667 = vunpack.c.l.b16 %v1630
        %v1668 = vunpack.c.l.b16 %v1634
        %v1669 = vunpack.c.l.b16 %v1637
        %v1670 = vpack.c.b16 %v1639, %v1638
        %v1671 = vpack.c.b16 %v1641, %v1640
        %v1672 = vpack.c.b16 %v1643, %v1642
        %v1673 = vpack.c.b16 %v1645, %v1644
        %v1674 = vpack.c.b16 %v1647, %v1646
        %v1675 = vpack.c.b16 %v1649, %v1648
        %v1676 = vpack.c.b16 %v1651, %v1650
        %v1677 = vpack.c.b16 %v1653, %v1652
        %v1678 = vpack.c.b16 %v1655, %v1654
        %v1679 = vpack.c.b16 %v1657, %v1656
        %v1680 = vpack.c.b16 %v1659, %v1658
        %v1681 = vpack.c.b16 %v1661, %v1660
        %v1682 = vpack.c.b16 %v1663, %v1662
        %v1683 = vpack.c.b16 %v1665, %v1664
        %v1684 = vpack.c.b16 %v1667, %v1666
        %v1685 = vpack.c.b16 %v1669, %v1668
        %1686 = vrot.lane.b32.xlu0 %v1670, 6
        %v1687 = vpop.permute.xlu0 %1686
        %1688 = vrot.lane.b32.xlu0 %v1671, 6
        %v1689 = vpop.permute.xlu0 %1688
        %1690 = vrot.lane.b32.xlu0 %v1672, 6
        %v1691 = vpop.permute.xlu0 %1690
        %1692 = vrot.lane.b32.xlu0 %v1673, 6
        %v1693 = vpop.permute.xlu0 %1692
        %1694 = vrot.lane.b32.xlu0 %v1674, 6
        %v1695 = vpop.permute.xlu0 %1694
        %1696 = vrot.lane.b32.xlu0 %v1675, 6
        %v1697 = vpop.permute.xlu0 %1696
        %1698 = vrot.lane.b32.xlu0 %v1676, 6
        %v1699 = vpop.permute.xlu0 %1698
        %1700 = vrot.lane.b32.xlu0 %v1677, 6
        %v1701 = vpop.permute.xlu0 %1700
        %1702 = vrot.lane.b32.xlu0 %v1678, 6
        %v1703 = vpop.permute.xlu0 %1702
        %1704 = vrot.lane.b32.xlu0 %v1679, 6
        %v1705 = vpop.permute.xlu0 %1704
        %1706 = vrot.lane.b32.xlu0 %v1680, 6
        %v1707 = vpop.permute.xlu0 %1706
        %1708 = vrot.lane.b32.xlu0 %v1681, 6
        %v1709 = vpop.permute.xlu0 %1708
        %1710 = vrot.lane.b32.xlu0 %v1682, 6
        %v1711 = vpop.permute.xlu0 %1710
        %1712 = vrot.lane.b32.xlu0 %v1683, 6
        %v1713 = vpop.permute.xlu0 %1712
        %1714 = vrot.lane.b32.xlu0 %v1684, 6
        %v1715 = vpop.permute.xlu0 %1714
        %1716 = vrot.lane.b32.xlu0 %v1685, 6
        %v1717 = vpop.permute.xlu0 %1716
        %vm1734 = vcmask 72752
        %1735 = vst.msk [vmem:[#allocation3] sm:$0xff] %vm1734, %v1687
        %1736 = vst.msk [vmem:[#allocation3 + $0x8] sm:$0xff] %vm1734, %v1689
        %1737 = vst.msk [vmem:[#allocation3 + $0x10] sm:$0xff] %vm1734, %v1691
        %1738 = vst.msk [vmem:[#allocation3 + $0x18] sm:$0xff] %vm1734, %v1693
        %1739 = vst.msk [vmem:[#allocation3 + $0x20] sm:$0xff] %vm1734, %v1695
        %1740 = vst.msk [vmem:[#allocation3 + $0x28] sm:$0xff] %vm1734, %v1697
        %1741 = vst.msk [vmem:[#allocation3 + $0x30] sm:$0xff] %vm1734, %v1699
        %1742 = vst.msk [vmem:[#allocation3 + $0x38] sm:$0xff] %vm1734, %v1701
        %1743 = vst.msk [vmem:[#allocation3 + $0x40] sm:$0xff] %vm1734, %v1703
        %1744 = vst.msk [vmem:[#allocation3 + $0x48] sm:$0xff] %vm1734, %v1705
        %1745 = vst.msk [vmem:[#allocation3 + $0x50] sm:$0xff] %vm1734, %v1707
        %1746 = vst.msk [vmem:[#allocation3 + $0x58] sm:$0xff] %vm1734, %v1709
        %1747 = vst.msk [vmem:[#allocation3 + $0x60] sm:$0xff] %vm1734, %v1711
        %1748 = vst.msk [vmem:[#allocation3 + $0x68] sm:$0xff] %vm1734, %v1713
        %1749 = vst.msk [vmem:[#allocation3 + $0x70] sm:$0xff] %vm1734, %v1715
        %1750 = vst.msk [vmem:[#allocation3 + $0x78] sm:$0xff] %vm1734, %v1717
        %v1751 = vld [vmem:[%s619] sm:$0xf]
        %v1752 = vld [vmem:[%s619 + $0x4] sm:$0xf]
        %v1753 = vld [vmem:[%s619 + $0xc] sm:$0xf]
        %v1754 = vld [vmem:[%s619 + $0x10] sm:$0xf]
        %v1755 = vld [vmem:[%s619 + $0x18] sm:$0xf]
        %v1756 = vld [vmem:[%s619 + $0x1c] sm:$0xf]
        %v1757 = vld [vmem:[%s619 + $0x24] sm:$0xf]
        %v1758 = vld [vmem:[%s619 + $0x28] sm:$0xf]
        %v1759 = vld [vmem:[%s619 + $0x30] sm:$0xf]
        %v1760 = vld [vmem:[%s619 + $0x34] sm:$0xf]
        %v1761 = vld [vmem:[%s619 + $0x3c] sm:$0xf]
        %v1762 = vld [vmem:[%s619 + $0x40] sm:$0xf]
        %v1763 = vld [vmem:[%s619 + $0x48] sm:$0xf]
        %v1764 = vld [vmem:[%s619 + $0x4c] sm:$0xf]
        %v1765 = vld [vmem:[%s619 + $0x54] sm:$0xf]
        %v1766 = vld [vmem:[%s619 + $0x58] sm:$0xf]
        %v1767 = vld [vmem:[%s619 + $0x60] sm:$0xf]
        %v1768 = vld [vmem:[%s619 + $0x64] sm:$0xf]
        %v1769 = vld [vmem:[%s619 + $0x6c] sm:$0xf]
        %v1770 = vld [vmem:[%s619 + $0x70] sm:$0xf]
        %v1771 = vld [vmem:[%s619 + $0x78] sm:$0xf]
        %v1772 = vld [vmem:[%s619 + $0x7c] sm:$0xf]
        %v1773 = vld [vmem:[%s619 + $0x84] sm:$0xf]
        %v1774 = vld [vmem:[%s619 + $0x88] sm:$0xf]
        %v1775 = vld [vmem:[%s619 + $0x90] sm:$0xf]
        %v1776 = vld [vmem:[%s619 + $0x94] sm:$0xf]
        %v1777 = vld [vmem:[%s619 + $0x9c] sm:$0xf]
        %v1778 = vld [vmem:[%s619 + $0xa0] sm:$0xf]
        %v1779 = vld [vmem:[%s619 + $0xa8] sm:$0xf]
        %v1780 = vld [vmem:[%s619 + $0xac] sm:$0xf]
        %v1781 = vld [vmem:[%s619 + $0xb4] sm:$0xf]
        %v1782 = vld [vmem:[%s619 + $0xb8] sm:$0xf]
        %v1815 = vunpack.c.l.b16 %v1751
        %v1816 = vunpack.c.l.b16 %v1752
        %v1817 = vunpack.c.l.b16 %v1753
        %v1818 = vunpack.c.l.b16 %v1754
        %v1819 = vunpack.c.l.b16 %v1755
        %v1820 = vunpack.c.l.b16 %v1756
        %v1821 = vunpack.c.l.b16 %v1757
        %v1822 = vunpack.c.l.b16 %v1758
        %v1823 = vunpack.c.l.b16 %v1759
        %v1824 = vunpack.c.l.b16 %v1760
        %v1825 = vunpack.c.l.b16 %v1761
        %v1826 = vunpack.c.l.b16 %v1762
        %v1827 = vunpack.c.l.b16 %v1763
        %v1828 = vunpack.c.l.b16 %v1764
        %v1829 = vunpack.c.l.b16 %v1765
        %v1830 = vunpack.c.l.b16 %v1766
        %v1831 = vunpack.c.l.b16 %v1767
        %v1832 = vunpack.c.l.b16 %v1768
        %v1833 = vunpack.c.l.b16 %v1769
        %v1834 = vunpack.c.l.b16 %v1770
        %v1835 = vunpack.c.l.b16 %v1771
        %v1836 = vunpack.c.l.b16 %v1772
        %v1837 = vunpack.c.l.b16 %v1773
        %v1838 = vunpack.c.l.b16 %v1774
        %v1839 = vunpack.c.l.b16 %v1775
        %v1840 = vunpack.c.l.b16 %v1776
        %v1841 = vunpack.c.l.b16 %v1777
        %v1842 = vunpack.c.l.b16 %v1778
        %v1843 = vunpack.c.l.b16 %v1779
        %v1844 = vunpack.c.l.b16 %v1780
        %v1845 = vunpack.c.l.b16 %v1781
        %v1846 = vunpack.c.l.b16 %v1782
        %v1847 = vpack.c.b16 %v1816, %v1815
        %v1848 = vpack.c.b16 %v1818, %v1817
        %v1849 = vpack.c.b16 %v1820, %v1819
        %v1850 = vpack.c.b16 %v1822, %v1821
        %v1851 = vpack.c.b16 %v1824, %v1823
        %v1852 = vpack.c.b16 %v1826, %v1825
        %v1853 = vpack.c.b16 %v1828, %v1827
        %v1854 = vpack.c.b16 %v1830, %v1829
        %v1855 = vpack.c.b16 %v1832, %v1831
        %v1856 = vpack.c.b16 %v1834, %v1833
        %v1857 = vpack.c.b16 %v1836, %v1835
        %v1858 = vpack.c.b16 %v1838, %v1837
        %v1859 = vpack.c.b16 %v1840, %v1839
        %v1860 = vpack.c.b16 %v1842, %v1841
        %v1861 = vpack.c.b16 %v1844, %v1843
        %v1862 = vpack.c.b16 %v1846, %v1845
        %1863 = vrot.lane.b32.xlu0 %v1847, 9
        %v1864 = vpop.permute.xlu0 %1863
        %1865 = vrot.lane.b32.xlu0 %v1848, 9
        %v1866 = vpop.permute.xlu0 %1865
        %1867 = vrot.lane.b32.xlu0 %v1849, 9
        %v1868 = vpop.permute.xlu0 %1867
        %1869 = vrot.lane.b32.xlu0 %v1850, 9
        %v1870 = vpop.permute.xlu0 %1869
        %1871 = vrot.lane.b32.xlu0 %v1851, 9
        %v1872 = vpop.permute.xlu0 %1871
        %1873 = vrot.lane.b32.xlu0 %v1852, 9
        %v1874 = vpop.permute.xlu0 %1873
        %1875 = vrot.lane.b32.xlu0 %v1853, 9
        %v1876 = vpop.permute.xlu0 %1875
        %1877 = vrot.lane.b32.xlu0 %v1854, 9
        %v1878 = vpop.permute.xlu0 %1877
        %1879 = vrot.lane.b32.xlu0 %v1855, 9
        %v1880 = vpop.permute.xlu0 %1879
        %1881 = vrot.lane.b32.xlu0 %v1856, 9
        %v1882 = vpop.permute.xlu0 %1881
        %1883 = vrot.lane.b32.xlu0 %v1857, 9
        %v1884 = vpop.permute.xlu0 %1883
        %1885 = vrot.lane.b32.xlu0 %v1858, 9
        %v1886 = vpop.permute.xlu0 %1885
        %1887 = vrot.lane.b32.xlu0 %v1859, 9
        %v1888 = vpop.permute.xlu0 %1887
        %1889 = vrot.lane.b32.xlu0 %v1860, 9
        %v1890 = vpop.permute.xlu0 %1889
        %1891 = vrot.lane.b32.xlu0 %v1861, 9
        %v1892 = vpop.permute.xlu0 %1891
        %1893 = vrot.lane.b32.xlu0 %v1862, 9
        %v1894 = vpop.permute.xlu0 %1893
        %vm1911 = vcmask 97352
        %1912 = vst.msk [vmem:[#allocation3] sm:$0xff] %vm1911, %v1864
        %1913 = vst.msk [vmem:[#allocation3 + $0x8] sm:$0xff] %vm1911, %v1866
        %1914 = vst.msk [vmem:[#allocation3 + $0x10] sm:$0xff] %vm1911, %v1868
        %1915 = vst.msk [vmem:[#allocation3 + $0x18] sm:$0xff] %vm1911, %v1870
        %1916 = vst.msk [vmem:[#allocation3 + $0x20] sm:$0xff] %vm1911, %v1872
        %1917 = vst.msk [vmem:[#allocation3 + $0x28] sm:$0xff] %vm1911, %v1874
        %1918 = vst.msk [vmem:[#allocation3 + $0x30] sm:$0xff] %vm1911, %v1876
        %1919 = vst.msk [vmem:[#allocation3 + $0x38] sm:$0xff] %vm1911, %v1878
        %1920 = vst.msk [vmem:[#allocation3 + $0x40] sm:$0xff] %vm1911, %v1880
        %1921 = vst.msk [vmem:[#allocation3 + $0x48] sm:$0xff] %vm1911, %v1882
        %1922 = vst.msk [vmem:[#allocation3 + $0x50] sm:$0xff] %vm1911, %v1884
        %1923 = vst.msk [vmem:[#allocation3 + $0x58] sm:$0xff] %vm1911, %v1886
        %1924 = vst.msk [vmem:[#allocation3 + $0x60] sm:$0xff] %vm1911, %v1888
        %1925 = vst.msk [vmem:[#allocation3 + $0x68] sm:$0xff] %vm1911, %v1890
        %1926 = vst.msk [vmem:[#allocation3 + $0x70] sm:$0xff] %vm1911, %v1892
        %1927 = vst.msk [vmem:[#allocation3 + $0x78] sm:$0xff] %vm1911, %v1894
        %v1928 = vld [vmem:[%s619] sm:$0xf]
        %v1929 = vld [vmem:[%s619 + $0x4] sm:$0xf]
        %v1930 = vld [vmem:[%s619 + $0x8] sm:$0x1]
        %v1931 = vld [vmem:[%s619 + $0xc] sm:$0xf]
        %v1932 = vld [vmem:[%s619 + $0x10] sm:$0xf]
        %v1933 = vld [vmem:[%s619 + $0x14] sm:$0x1]
        %v1934 = vld [vmem:[%s619 + $0x18] sm:$0xf]
        %v1935 = vld [vmem:[%s619 + $0x1c] sm:$0xf]
        %v1936 = vld [vmem:[%s619 + $0x20] sm:$0x1]
        %v1937 = vld [vmem:[%s619 + $0x24] sm:$0xf]
        %v1938 = vld [vmem:[%s619 + $0x28] sm:$0xf]
        %v1939 = vld [vmem:[%s619 + $0x2c] sm:$0x1]
        %v1940 = vld [vmem:[%s619 + $0x30] sm:$0xf]
        %v1941 = vld [vmem:[%s619 + $0x34] sm:$0xf]
        %v1942 = vld [vmem:[%s619 + $0x38] sm:$0x1]
        %v1943 = vld [vmem:[%s619 + $0x3c] sm:$0xf]
        %v1944 = vld [vmem:[%s619 + $0x40] sm:$0xf]
        %v1945 = vld [vmem:[%s619 + $0x44] sm:$0x1]
        %v1946 = vld [vmem:[%s619 + $0x48] sm:$0xf]
        %v1947 = vld [vmem:[%s619 + $0x4c] sm:$0xf]
        %v1948 = vld [vmem:[%s619 + $0x50] sm:$0x1]
        %v1949 = vld [vmem:[%s619 + $0x54] sm:$0xf]
        %v1950 = vld [vmem:[%s619 + $0x58] sm:$0xf]
        %v1951 = vld [vmem:[%s619 + $0x5c] sm:$0x1]
        %v1952 = vld [vmem:[%s619 + $0x60] sm:$0xf]
        %v1953 = vld [vmem:[%s619 + $0x64] sm:$0xf]
        %v1954 = vld [vmem:[%s619 + $0x68] sm:$0x1]
        %v1955 = vld [vmem:[%s619 + $0x6c] sm:$0xf]
        %v1956 = vld [vmem:[%s619 + $0x70] sm:$0xf]
        %v1957 = vld [vmem:[%s619 + $0x74] sm:$0x1]
        %v1958 = vld [vmem:[%s619 + $0x78] sm:$0xf]
        %v1959 = vld [vmem:[%s619 + $0x7c] sm:$0xf]
        %v1960 = vld [vmem:[%s619 + $0x80] sm:$0x1]
        %v1961 = vld [vmem:[%s619 + $0x84] sm:$0xf]
        %v1962 = vld [vmem:[%s619 + $0x88] sm:$0xf]
        %v1963 = vld [vmem:[%s619 + $0x8c] sm:$0x1]
        %v1964 = vld [vmem:[%s619 + $0x90] sm:$0xf]
        %v1965 = vld [vmem:[%s619 + $0x94] sm:$0xf]
        %v1966 = vld [vmem:[%s619 + $0x98] sm:$0x1]
        %v1967 = vld [vmem:[%s619 + $0x9c] sm:$0xf]
        %v1968 = vld [vmem:[%s619 + $0xa0] sm:$0xf]
        %v1969 = vld [vmem:[%s619 + $0xa4] sm:$0x1]
        %v1970 = vld [vmem:[%s619 + $0xa8] sm:$0xf]
        %v1971 = vld [vmem:[%s619 + $0xac] sm:$0xf]
        %v1972 = vld [vmem:[%s619 + $0xb0] sm:$0x1]
        %v1973 = vld [vmem:[%s619 + $0xb4] sm:$0xf]
        %v1974 = vld [vmem:[%s619 + $0xb8] sm:$0xf]
        %v1975 = vld [vmem:[%s619 + $0xbc] sm:$0x1]
        %v1977 = vshrl.u32 %v1928, 16
        %v1979 = vrot.slane %v1977, 4
        %v1980 = vshll.u32 %v1928, 16
        %v1982 = vrot.slane %v1980, 5
        %v1983 = vor.u32 %v1979, %v1982
        %v1984 = vrot.slane %v1983, 4
        %v1986 = vshll.u32 %v1929, 16
        %v1988 = vrot.slane %v1986, 5
        %v1989 = vsel %vm929, %v1984, %v1988
        %v1990 = vshrl.u32 %v1929, 16
        %v1992 = vrot.slane %v1990, 4
        %v1993 = vor.u32 %v1992, %v1988
        %v1994 = vrot.slane %v1993, 4
        %v1996 = vshll.u32 %v1930, 16
        %v1998 = vrot.slane %v1996, 5
        %v1999 = vsel %vm929, %v1994, %v1998
        %v2001 = vshrl.u32 %v1931, 16
        %v2003 = vrot.slane %v2001, 4
        %v2004 = vshll.u32 %v1931, 16
        %v2006 = vrot.slane %v2004, 5
        %v2007 = vor.u32 %v2003, %v2006
        %v2008 = vrot.slane %v2007, 4
        %v2010 = vshll.u32 %v1932, 16
        %v2012 = vrot.slane %v2010, 5
        %v2013 = vsel %vm929, %v2008, %v2012
        %v2014 = vshrl.u32 %v1932, 16
        %v2016 = vrot.slane %v2014, 4
        %v2017 = vor.u32 %v2016, %v2012
        %v2018 = vrot.slane %v2017, 4
        %v2020 = vshll.u32 %v1933, 16
        %v2022 = vrot.slane %v2020, 5
        %v2023 = vsel %vm929, %v2018, %v2022
        %v2025 = vshrl.u32 %v1934, 16
        %v2027 = vrot.slane %v2025, 4
        %v2028 = vshll.u32 %v1934, 16
        %v2030 = vrot.slane %v2028, 5
        %v2031 = vor.u32 %v2027, %v2030
        %v2032 = vrot.slane %v2031, 4
        %v2034 = vshll.u32 %v1935, 16
        %v2036 = vrot.slane %v2034, 5
        %v2037 = vsel %vm929, %v2032, %v2036
        %v2038 = vshrl.u32 %v1935, 16
        %v2040 = vrot.slane %v2038, 4
        %v2041 = vor.u32 %v2040, %v2036
        %v2042 = vrot.slane %v2041, 4
        %v2044 = vshll.u32 %v1936, 16
        %v2046 = vrot.slane %v2044, 5
        %v2047 = vsel %vm929, %v2042, %v2046
        %v2049 = vshrl.u32 %v1937, 16
        %v2051 = vrot.slane %v2049, 4
        %v2052 = vshll.u32 %v1937, 16
        %v2054 = vrot.slane %v2052, 5
        %v2055 = vor.u32 %v2051, %v2054
        %v2056 = vrot.slane %v2055, 4
        %v2058 = vshll.u32 %v1938, 16
        %v2060 = vrot.slane %v2058, 5
        %v2061 = vsel %vm929, %v2056, %v2060
        %v2062 = vshrl.u32 %v1938, 16
        %v2064 = vrot.slane %v2062, 4
        %v2065 = vor.u32 %v2064, %v2060
        %v2066 = vrot.slane %v2065, 4
        %v2068 = vshll.u32 %v1939, 16
        %v2070 = vrot.slane %v2068, 5
        %v2071 = vsel %vm929, %v2066, %v2070
        %v2073 = vshrl.u32 %v1940, 16
        %v2075 = vrot.slane %v2073, 4
        %v2076 = vshll.u32 %v1940, 16
        %v2078 = vrot.slane %v2076, 5
        %v2079 = vor.u32 %v2075, %v2078
        %v2080 = vrot.slane %v2079, 4
        %v2082 = vshll.u32 %v1941, 16
        %v2084 = vrot.slane %v2082, 5
        %v2085 = vsel %vm929, %v2080, %v2084
        %v2086 = vshrl.u32 %v1941, 16
        %v2088 = vrot.slane %v2086, 4
        %v2089 = vor.u32 %v2088, %v2084
        %v2090 = vrot.slane %v2089, 4
        %v2092 = vshll.u32 %v1942, 16
        %v2094 = vrot.slane %v2092, 5
        %v2095 = vsel %vm929, %v2090, %v2094
        %v2097 = vshrl.u32 %v1943, 16
        %v2099 = vrot.slane %v2097, 4
        %v2100 = vshll.u32 %v1943, 16
        %v2102 = vrot.slane %v2100, 5
        %v2103 = vor.u32 %v2099, %v2102
        %v2104 = vrot.slane %v2103, 4
        %v2106 = vshll.u32 %v1944, 16
        %v2108 = vrot.slane %v2106, 5
        %v2109 = vsel %vm929, %v2104, %v2108
        %v2110 = vshrl.u32 %v1944, 16
        %v2112 = vrot.slane %v2110, 4
        %v2113 = vor.u32 %v2112, %v2108
        %v2114 = vrot.slane %v2113, 4
        %v2116 = vshll.u32 %v1945, 16
        %v2118 = vrot.slane %v2116, 5
        %v2119 = vsel %vm929, %v2114, %v2118
        %v2121 = vshrl.u32 %v1946, 16
        %v2123 = vrot.slane %v2121, 4
        %v2124 = vshll.u32 %v1946, 16
        %v2126 = vrot.slane %v2124, 5
        %v2127 = vor.u32 %v2123, %v2126
        %v2128 = vrot.slane %v2127, 4
        %v2130 = vshll.u32 %v1947, 16
        %v2132 = vrot.slane %v2130, 5
        %v2133 = vsel %vm929, %v2128, %v2132
        %v2134 = vshrl.u32 %v1947, 16
        %v2136 = vrot.slane %v2134, 4
        %v2137 = vor.u32 %v2136, %v2132
        %v2138 = vrot.slane %v2137, 4
        %v2140 = vshll.u32 %v1948, 16
        %v2142 = vrot.slane %v2140, 5
        %v2143 = vsel %vm929, %v2138, %v2142
        %v2145 = vshrl.u32 %v1949, 16
        %v2147 = vrot.slane %v2145, 4
        %v2148 = vshll.u32 %v1949, 16
        %v2150 = vrot.slane %v2148, 5
        %v2151 = vor.u32 %v2147, %v2150
        %v2152 = vrot.slane %v2151, 4
        %v2154 = vshll.u32 %v1950, 16
        %v2156 = vrot.slane %v2154, 5
        %v2157 = vsel %vm929, %v2152, %v2156
        %v2158 = vshrl.u32 %v1950, 16
        %v2160 = vrot.slane %v2158, 4
        %v2161 = vor.u32 %v2160, %v2156
        %v2162 = vrot.slane %v2161, 4
        %v2164 = vshll.u32 %v1951, 16
        %v2166 = vrot.slane %v2164, 5
        %v2167 = vsel %vm929, %v2162, %v2166
        %v2169 = vshrl.u32 %v1952, 16
        %v2171 = vrot.slane %v2169, 4
        %v2172 = vshll.u32 %v1952, 16
        %v2174 = vrot.slane %v2172, 5
        %v2175 = vor.u32 %v2171, %v2174
        %v2176 = vrot.slane %v2175, 4
        %v2178 = vshll.u32 %v1953, 16
        %v2180 = vrot.slane %v2178, 5
        %v2181 = vsel %vm929, %v2176, %v2180
        %v2182 = vshrl.u32 %v1953, 16
        %v2184 = vrot.slane %v2182, 4
        %v2185 = vor.u32 %v2184, %v2180
        %v2186 = vrot.slane %v2185, 4
        %v2188 = vshll.u32 %v1954, 16
        %v2190 = vrot.slane %v2188, 5
        %v2191 = vsel %vm929, %v2186, %v2190
        %v2193 = vshrl.u32 %v1955, 16
        %v2195 = vrot.slane %v2193, 4
        %v2196 = vshll.u32 %v1955, 16
        %v2198 = vrot.slane %v2196, 5
        %v2199 = vor.u32 %v2195, %v2198
        %v2200 = vrot.slane %v2199, 4
        %v2202 = vshll.u32 %v1956, 16
        %v2204 = vrot.slane %v2202, 5
        %v2205 = vsel %vm929, %v2200, %v2204
        %v2206 = vshrl.u32 %v1956, 16
        %v2208 = vrot.slane %v2206, 4
        %v2209 = vor.u32 %v2208, %v2204
        %v2210 = vrot.slane %v2209, 4
        %v2212 = vshll.u32 %v1957, 16
        %v2214 = vrot.slane %v2212, 5
        %v2215 = vsel %vm929, %v2210, %v2214
        %v2217 = vshrl.u32 %v1958, 16
        %v2219 = vrot.slane %v2217, 4
        %v2220 = vshll.u32 %v1958, 16
        %v2222 = vrot.slane %v2220, 5
        %v2223 = vor.u32 %v2219, %v2222
        %v2224 = vrot.slane %v2223, 4
        %v2226 = vshll.u32 %v1959, 16
        %v2228 = vrot.slane %v2226, 5
        %v2229 = vsel %vm929, %v2224, %v2228
        %v2230 = vshrl.u32 %v1959, 16
        %v2232 = vrot.slane %v2230, 4
        %v2233 = vor.u32 %v2232, %v2228
        %v2234 = vrot.slane %v2233, 4
        %v2236 = vshll.u32 %v1960, 16
        %v2238 = vrot.slane %v2236, 5
        %v2239 = vsel %vm929, %v2234, %v2238
        %v2241 = vshrl.u32 %v1961, 16
        %v2243 = vrot.slane %v2241, 4
        %v2244 = vshll.u32 %v1961, 16
        %v2246 = vrot.slane %v2244, 5
        %v2247 = vor.u32 %v2243, %v2246
        %v2248 = vrot.slane %v2247, 4
        %v2250 = vshll.u32 %v1962, 16
        %v2252 = vrot.slane %v2250, 5
        %v2253 = vsel %vm929, %v2248, %v2252
        %v2254 = vshrl.u32 %v1962, 16
        %v2256 = vrot.slane %v2254, 4
        %v2257 = vor.u32 %v2256, %v2252
        %v2258 = vrot.slane %v2257, 4
        %v2260 = vshll.u32 %v1963, 16
        %v2262 = vrot.slane %v2260, 5
        %v2263 = vsel %vm929, %v2258, %v2262
        %v2265 = vshrl.u32 %v1964, 16
        %v2267 = vrot.slane %v2265, 4
        %v2268 = vshll.u32 %v1964, 16
        %v2270 = vrot.slane %v2268, 5
        %v2271 = vor.u32 %v2267, %v2270
        %v2272 = vrot.slane %v2271, 4
        %v2274 = vshll.u32 %v1965, 16
        %v2276 = vrot.slane %v2274, 5
        %v2277 = vsel %vm929, %v2272, %v2276
        %v2278 = vshrl.u32 %v1965, 16
        %v2280 = vrot.slane %v2278, 4
        %v2281 = vor.u32 %v2280, %v2276
        %v2282 = vrot.slane %v2281, 4
        %v2284 = vshll.u32 %v1966, 16
        %v2286 = vrot.slane %v2284, 5
        %v2287 = vsel %vm929, %v2282, %v2286
        %v2289 = vshrl.u32 %v1967, 16
        %v2291 = vrot.slane %v2289, 4
        %v2292 = vshll.u32 %v1967, 16
        %v2294 = vrot.slane %v2292, 5
        %v2295 = vor.u32 %v2291, %v2294
        %v2296 = vrot.slane %v2295, 4
        %v2298 = vshll.u32 %v1968, 16
        %v2300 = vrot.slane %v2298, 5
        %v2301 = vsel %vm929, %v2296, %v2300
        %v2302 = vshrl.u32 %v1968, 16
        %v2304 = vrot.slane %v2302, 4
        %v2305 = vor.u32 %v2304, %v2300
        %v2306 = vrot.slane %v2305, 4
        %v2308 = vshll.u32 %v1969, 16
        %v2310 = vrot.slane %v2308, 5
        %v2311 = vsel %vm929, %v2306, %v2310
        %v2313 = vshrl.u32 %v1970, 16
        %v2315 = vrot.slane %v2313, 4
        %v2316 = vshll.u32 %v1970, 16
        %v2318 = vrot.slane %v2316, 5
        %v2319 = vor.u32 %v2315, %v2318
        %v2320 = vrot.slane %v2319, 4
        %v2322 = vshll.u32 %v1971, 16
        %v2324 = vrot.slane %v2322, 5
        %v2325 = vsel %vm929, %v2320, %v2324
        %v2326 = vshrl.u32 %v1971, 16
        %v2328 = vrot.slane %v2326, 4
        %v2329 = vor.u32 %v2328, %v2324
        %v2330 = vrot.slane %v2329, 4
        %v2332 = vshll.u32 %v1972, 16
        %v2334 = vrot.slane %v2332, 5
        %v2335 = vsel %vm929, %v2330, %v2334
        %v2337 = vshrl.u32 %v1973, 16
        %v2339 = vrot.slane %v2337, 4
        %v2340 = vshll.u32 %v1973, 16
        %v2342 = vrot.slane %v2340, 5
        %v2343 = vor.u32 %v2339, %v2342
        %v2344 = vrot.slane %v2343, 4
        %v2346 = vshll.u32 %v1974, 16
        %v2348 = vrot.slane %v2346, 5
        %v2349 = vsel %vm929, %v2344, %v2348
        %v2350 = vshrl.u32 %v1974, 16
        %v2352 = vrot.slane %v2350, 4
        %v2353 = vor.u32 %v2352, %v2348
        %v2354 = vrot.slane %v2353, 4
        %v2356 = vshll.u32 %v1975, 16
        %v2358 = vrot.slane %v2356, 5
        %v2359 = vsel %vm929, %v2354, %v2358
        %v2360 = vunpack.c.l.b16 %v1989
        %v2361 = vunpack.c.l.b16 %v1999
        %v2362 = vunpack.c.l.b16 %v2013
        %v2363 = vunpack.c.l.b16 %v2023
        %v2364 = vunpack.c.l.b16 %v2037
        %v2365 = vunpack.c.l.b16 %v2047
        %v2366 = vunpack.c.l.b16 %v2061
        %v2367 = vunpack.c.l.b16 %v2071
        %v2368 = vunpack.c.l.b16 %v2085
        %v2369 = vunpack.c.l.b16 %v2095
        %v2370 = vunpack.c.l.b16 %v2109
        %v2371 = vunpack.c.l.b16 %v2119
        %v2372 = vunpack.c.l.b16 %v2133
        %v2373 = vunpack.c.l.b16 %v2143
        %v2374 = vunpack.c.l.b16 %v2157
        %v2375 = vunpack.c.l.b16 %v2167
        %v2376 = vunpack.c.l.b16 %v2181
        %v2377 = vunpack.c.l.b16 %v2191
        %v2378 = vunpack.c.l.b16 %v2205
        %v2379 = vunpack.c.l.b16 %v2215
        %v2380 = vunpack.c.l.b16 %v2229
        %v2381 = vunpack.c.l.b16 %v2239
        %v2382 = vunpack.c.l.b16 %v2253
        %v2383 = vunpack.c.l.b16 %v2263
        %v2384 = vunpack.c.l.b16 %v2277
        %v2385 = vunpack.c.l.b16 %v2287
        %v2386 = vunpack.c.l.b16 %v2301
        %v2387 = vunpack.c.l.b16 %v2311
        %v2388 = vunpack.c.l.b16 %v2325
        %v2389 = vunpack.c.l.b16 %v2335
        %v2390 = vunpack.c.l.b16 %v2349
        %v2391 = vunpack.c.l.b16 %v2359
        %v2392 = vpack.c.b16 %v2361, %v2360
        %v2393 = vpack.c.b16 %v2363, %v2362
        %v2394 = vpack.c.b16 %v2365, %v2364
        %v2395 = vpack.c.b16 %v2367, %v2366
        %v2396 = vpack.c.b16 %v2369, %v2368
        %v2397 = vpack.c.b16 %v2371, %v2370
        %v2398 = vpack.c.b16 %v2373, %v2372
        %v2399 = vpack.c.b16 %v2375, %v2374
        %v2400 = vpack.c.b16 %v2377, %v2376
        %v2401 = vpack.c.b16 %v2379, %v2378
        %v2402 = vpack.c.b16 %v2381, %v2380
        %v2403 = vpack.c.b16 %v2383, %v2382
        %v2404 = vpack.c.b16 %v2385, %v2384
        %v2405 = vpack.c.b16 %v2387, %v2386
        %v2406 = vpack.c.b16 %v2389, %v2388
        %v2407 = vpack.c.b16 %v2391, %v2390
        %2408 = vrot.lane.b32.xlu0 %v2392, 12
        %v2409 = vpop.permute.xlu0 %2408
        %2410 = vrot.lane.b32.xlu0 %v2393, 12
        %v2411 = vpop.permute.xlu0 %2410
        %2412 = vrot.lane.b32.xlu0 %v2394, 12
        %v2413 = vpop.permute.xlu0 %2412
        %2414 = vrot.lane.b32.xlu0 %v2395, 12
        %v2415 = vpop.permute.xlu0 %2414
        %2416 = vrot.lane.b32.xlu0 %v2396, 12
        %v2417 = vpop.permute.xlu0 %2416
        %2418 = vrot.lane.b32.xlu0 %v2397, 12
        %v2419 = vpop.permute.xlu0 %2418
        %2420 = vrot.lane.b32.xlu0 %v2398, 12
        %v2421 = vpop.permute.xlu0 %2420
        %2422 = vrot.lane.b32.xlu0 %v2399, 12
        %v2423 = vpop.permute.xlu0 %2422
        %2424 = vrot.lane.b32.xlu0 %v2400, 12
        %v2425 = vpop.permute.xlu0 %2424
        %2426 = vrot.lane.b32.xlu0 %v2401, 12
        %v2427 = vpop.permute.xlu0 %2426
        %2428 = vrot.lane.b32.xlu0 %v2402, 12
        %v2429 = vpop.permute.xlu0 %2428
        %2430 = vrot.lane.b32.xlu0 %v2403, 12
        %v2431 = vpop.permute.xlu0 %2430
        %2432 = vrot.lane.b32.xlu0 %v2404, 12
        %v2433 = vpop.permute.xlu0 %2432
        %2434 = vrot.lane.b32.xlu0 %v2405, 12
        %v2435 = vpop.permute.xlu0 %2434
        %2436 = vrot.lane.b32.xlu0 %v2406, 12
        %v2437 = vpop.permute.xlu0 %2436
        %2438 = vrot.lane.b32.xlu0 %v2407, 12
        %v2439 = vpop.permute.xlu0 %2438
        %vm2456 = vcmask 121952
        %2457 = vst.msk [vmem:[#allocation3] sm:$0xff] %vm2456, %v2409
        %2458 = vst.msk [vmem:[#allocation3 + $0x8] sm:$0xff] %vm2456, %v2411
        %2459 = vst.msk [vmem:[#allocation3 + $0x10] sm:$0xff] %vm2456, %v2413
        %2460 = vst.msk [vmem:[#allocation3 + $0x18] sm:$0xff] %vm2456, %v2415
        %2461 = vst.msk [vmem:[#allocation3 + $0x20] sm:$0xff] %vm2456, %v2417
        %2462 = vst.msk [vmem:[#allocation3 + $0x28] sm:$0xff] %vm2456, %v2419
        %2463 = vst.msk [vmem:[#allocation3 + $0x30] sm:$0xff] %vm2456, %v2421
        %2464 = vst.msk [vmem:[#allocation3 + $0x38] sm:$0xff] %vm2456, %v2423
        %2465 = vst.msk [vmem:[#allocation3 + $0x40] sm:$0xff] %vm2456, %v2425
        %2466 = vst.msk [vmem:[#allocation3 + $0x48] sm:$0xff] %vm2456, %v2427
        %2467 = vst.msk [vmem:[#allocation3 + $0x50] sm:$0xff] %vm2456, %v2429
        %2468 = vst.msk [vmem:[#allocation3 + $0x58] sm:$0xff] %vm2456, %v2431
        %2469 = vst.msk [vmem:[#allocation3 + $0x60] sm:$0xff] %vm2456, %v2433
        %2470 = vst.msk [vmem:[#allocation3 + $0x68] sm:$0xff] %vm2456, %v2435
        %2471 = vst.msk [vmem:[#allocation3 + $0x70] sm:$0xff] %vm2456, %v2437
        %2472 = vst.msk [vmem:[#allocation3 + $0x78] sm:$0xff] %vm2456, %v2439
        %v2473 = vld [vmem:[%s619] sm:$0xe]
        %v2474 = vld [vmem:[%s619 + $0x4] sm:$0xf]
        %v2475 = vld [vmem:[%s619 + $0x8] sm:$0x1]
        %v2476 = vld [vmem:[%s619 + $0xc] sm:$0xe]
        %v2477 = vld [vmem:[%s619 + $0x10] sm:$0xf]
        %v2478 = vld [vmem:[%s619 + $0x14] sm:$0x1]
        %v2479 = vld [vmem:[%s619 + $0x18] sm:$0xe]
        %v2480 = vld [vmem:[%s619 + $0x1c] sm:$0xf]
        %v2481 = vld [vmem:[%s619 + $0x20] sm:$0x1]
        %v2482 = vld [vmem:[%s619 + $0x24] sm:$0xe]
        %v2483 = vld [vmem:[%s619 + $0x28] sm:$0xf]
        %v2484 = vld [vmem:[%s619 + $0x2c] sm:$0x1]
        %v2485 = vld [vmem:[%s619 + $0x30] sm:$0xe]
        %v2486 = vld [vmem:[%s619 + $0x34] sm:$0xf]
        %v2487 = vld [vmem:[%s619 + $0x38] sm:$0x1]
        %v2488 = vld [vmem:[%s619 + $0x3c] sm:$0xe]
        %v2489 = vld [vmem:[%s619 + $0x40] sm:$0xf]
        %v2490 = vld [vmem:[%s619 + $0x44] sm:$0x1]
        %v2491 = vld [vmem:[%s619 + $0x48] sm:$0xe]
        %v2492 = vld [vmem:[%s619 + $0x4c] sm:$0xf]
        %v2493 = vld [vmem:[%s619 + $0x50] sm:$0x1]
        %v2494 = vld [vmem:[%s619 + $0x54] sm:$0xe]
        %v2495 = vld [vmem:[%s619 + $0x58] sm:$0xf]
        %v2496 = vld [vmem:[%s619 + $0x5c] sm:$0x1]
        %v2497 = vld [vmem:[%s619 + $0x60] sm:$0xe]
        %v2498 = vld [vmem:[%s619 + $0x64] sm:$0xf]
        %v2499 = vld [vmem:[%s619 + $0x68] sm:$0x1]
        %v2500 = vld [vmem:[%s619 + $0x6c] sm:$0xe]
        %v2501 = vld [vmem:[%s619 + $0x70] sm:$0xf]
        %v2502 = vld [vmem:[%s619 + $0x74] sm:$0x1]
        %v2503 = vld [vmem:[%s619 + $0x78] sm:$0xe]
        %v2504 = vld [vmem:[%s619 + $0x7c] sm:$0xf]
        %v2505 = vld [vmem:[%s619 + $0x80] sm:$0x1]
        %v2506 = vld [vmem:[%s619 + $0x84] sm:$0xe]
        %v2507 = vld [vmem:[%s619 + $0x88] sm:$0xf]
        %v2508 = vld [vmem:[%s619 + $0x8c] sm:$0x1]
        %v2509 = vld [vmem:[%s619 + $0x90] sm:$0xe]
        %v2510 = vld [vmem:[%s619 + $0x94] sm:$0xf]
        %v2511 = vld [vmem:[%s619 + $0x98] sm:$0x1]
        %v2512 = vld [vmem:[%s619 + $0x9c] sm:$0xe]
        %v2513 = vld [vmem:[%s619 + $0xa0] sm:$0xf]
        %v2514 = vld [vmem:[%s619 + $0xa4] sm:$0x1]
        %v2515 = vld [vmem:[%s619 + $0xa8] sm:$0xe]
        %v2516 = vld [vmem:[%s619 + $0xac] sm:$0xf]
        %v2517 = vld [vmem:[%s619 + $0xb0] sm:$0x1]
        %v2518 = vld [vmem:[%s619 + $0xb4] sm:$0xe]
        %v2519 = vld [vmem:[%s619 + $0xb8] sm:$0xf]
        %v2520 = vld [vmem:[%s619 + $0xbc] sm:$0x1]
        %v2569 = vrot.slane %v2473, 5
        %v2570 = vrot.slane %v2569, 4
        %v2571 = vrot.slane %v2474, 5
        %v2572 = vsel %vm1525, %v2570, %v2571
        %v2573 = vrot.slane %v2571, 4
        %v2574 = vrot.slane %v2475, 5
        %v2575 = vsel %vm1525, %v2573, %v2574
        %v2576 = vrot.slane %v2476, 5
        %v2577 = vrot.slane %v2576, 4
        %v2578 = vrot.slane %v2477, 5
        %v2579 = vsel %vm1525, %v2577, %v2578
        %v2580 = vrot.slane %v2578, 4
        %v2581 = vrot.slane %v2478, 5
        %v2582 = vsel %vm1525, %v2580, %v2581
        %v2583 = vrot.slane %v2479, 5
        %v2584 = vrot.slane %v2583, 4
        %v2585 = vrot.slane %v2480, 5
        %v2586 = vsel %vm1525, %v2584, %v2585
        %v2587 = vrot.slane %v2585, 4
        %v2588 = vrot.slane %v2481, 5
        %v2589 = vsel %vm1525, %v2587, %v2588
        %v2590 = vrot.slane %v2482, 5
        %v2591 = vrot.slane %v2590, 4
        %v2592 = vrot.slane %v2483, 5
        %v2593 = vsel %vm1525, %v2591, %v2592
        %v2594 = vrot.slane %v2592, 4
        %v2595 = vrot.slane %v2484, 5
        %v2596 = vsel %vm1525, %v2594, %v2595
        %v2597 = vrot.slane %v2485, 5
        %v2598 = vrot.slane %v2597, 4
        %v2599 = vrot.slane %v2486, 5
        %v2600 = vsel %vm1525, %v2598, %v2599
        %v2601 = vrot.slane %v2599, 4
        %v2602 = vrot.slane %v2487, 5
        %v2603 = vsel %vm1525, %v2601, %v2602
        %v2604 = vrot.slane %v2488, 5
        %v2605 = vrot.slane %v2604, 4
        %v2606 = vrot.slane %v2489, 5
        %v2607 = vsel %vm1525, %v2605, %v2606
        %v2608 = vrot.slane %v2606, 4
        %v2609 = vrot.slane %v2490, 5
        %v2610 = vsel %vm1525, %v2608, %v2609
        %v2611 = vrot.slane %v2491, 5
        %v2612 = vrot.slane %v2611, 4
        %v2613 = vrot.slane %v2492, 5
        %v2614 = vsel %vm1525, %v2612, %v2613
        %v2615 = vrot.slane %v2613, 4
        %v2616 = vrot.slane %v2493, 5
        %v2617 = vsel %vm1525, %v2615, %v2616
        %v2618 = vrot.slane %v2494, 5
        %v2619 = vrot.slane %v2618, 4
        %v2620 = vrot.slane %v2495, 5
        %v2621 = vsel %vm1525, %v2619, %v2620
        %v2622 = vrot.slane %v2620, 4
        %v2623 = vrot.slane %v2496, 5
        %v2624 = vsel %vm1525, %v2622, %v2623
        %v2625 = vrot.slane %v2497, 5
        %v2626 = vrot.slane %v2625, 4
        %v2627 = vrot.slane %v2498, 5
        %v2628 = vsel %vm1525, %v2626, %v2627
        %v2629 = vrot.slane %v2627, 4
        %v2630 = vrot.slane %v2499, 5
        %v2631 = vsel %vm1525, %v2629, %v2630
        %v2632 = vrot.slane %v2500, 5
        %v2633 = vrot.slane %v2632, 4
        %v2634 = vrot.slane %v2501, 5
        %v2635 = vsel %vm1525, %v2633, %v2634
        %v2636 = vrot.slane %v2634, 4
        %v2637 = vrot.slane %v2502, 5
        %v2638 = vsel %vm1525, %v2636, %v2637
        %v2639 = vrot.slane %v2503, 5
        %v2640 = vrot.slane %v2639, 4
        %v2641 = vrot.slane %v2504, 5
        %v2642 = vsel %vm1525, %v2640, %v2641
        %v2643 = vrot.slane %v2641, 4
        %v2644 = vrot.slane %v2505, 5
        %v2645 = vsel %vm1525, %v2643, %v2644
        %v2646 = vrot.slane %v2506, 5
        %v2647 = vrot.slane %v2646, 4
        %v2648 = vrot.slane %v2507, 5
        %v2649 = vsel %vm1525, %v2647, %v2648
        %v2650 = vrot.slane %v2648, 4
        %v2651 = vrot.slane %v2508, 5
        %v2652 = vsel %vm1525, %v2650, %v2651
        %v2653 = vrot.slane %v2509, 5
        %v2654 = vrot.slane %v2653, 4
        %v2655 = vrot.slane %v2510, 5
        %v2656 = vsel %vm1525, %v2654, %v2655
        %v2657 = vrot.slane %v2655, 4
        %v2658 = vrot.slane %v2511, 5
        %v2659 = vsel %vm1525, %v2657, %v2658
        %v2660 = vrot.slane %v2512, 5
        %v2661 = vrot.slane %v2660, 4
        %v2662 = vrot.slane %v2513, 5
        %v2663 = vsel %vm1525, %v2661, %v2662
        %v2664 = vrot.slane %v2662, 4
        %v2665 = vrot.slane %v2514, 5
        %v2666 = vsel %vm1525, %v2664, %v2665
        %v2667 = vrot.slane %v2515, 5
        %v2668 = vrot.slane %v2667, 4
        %v2669 = vrot.slane %v2516, 5
        %v2670 = vsel %vm1525, %v2668, %v2669
        %v2671 = vrot.slane %v2669, 4
        %v2672 = vrot.slane %v2517, 5
        %v2673 = vsel %vm1525, %v2671, %v2672
        %v2674 = vrot.slane %v2518, 5
        %v2675 = vrot.slane %v2674, 4
        %v2676 = vrot.slane %v2519, 5
        %v2677 = vsel %vm1525, %v2675, %v2676
        %v2678 = vrot.slane %v2676, 4
        %v2679 = vrot.slane %v2520, 5
        %v2680 = vsel %vm1525, %v2678, %v2679
        %v2681 = vunpack.c.l.b16 %v2572
        %v2682 = vunpack.c.l.b16 %v2575
        %v2683 = vunpack.c.l.b16 %v2579
        %v2684 = vunpack.c.l.b16 %v2582
        %v2685 = vunpack.c.l.b16 %v2586
        %v2686 = vunpack.c.l.b16 %v2589
        %v2687 = vunpack.c.l.b16 %v2593
        %v2688 = vunpack.c.l.b16 %v2596
        %v2689 = vunpack.c.l.b16 %v2600
        %v2690 = vunpack.c.l.b16 %v2603
        %v2691 = vunpack.c.l.b16 %v2607
        %v2692 = vunpack.c.l.b16 %v2610
        %v2693 = vunpack.c.l.b16 %v2614
        %v2694 = vunpack.c.l.b16 %v2617
        %v2695 = vunpack.c.l.b16 %v2621
        %v2696 = vunpack.c.l.b16 %v2624
        %v2697 = vunpack.c.l.b16 %v2628
        %v2698 = vunpack.c.l.b16 %v2631
        %v2699 = vunpack.c.l.b16 %v2635
        %v2700 = vunpack.c.l.b16 %v2638
        %v2701 = vunpack.c.l.b16 %v2642
        %v2702 = vunpack.c.l.b16 %v2645
        %v2703 = vunpack.c.l.b16 %v2649
        %v2704 = vunpack.c.l.b16 %v2652
        %v2705 = vunpack.c.l.b16 %v2656
        %v2706 = vunpack.c.l.b16 %v2659
        %v2707 = vunpack.c.l.b16 %v2663
        %v2708 = vunpack.c.l.b16 %v2666
        %v2709 = vunpack.c.l.b16 %v2670
        %v2710 = vunpack.c.l.b16 %v2673
        %v2711 = vunpack.c.l.b16 %v2677
        %v2712 = vunpack.c.l.b16 %v2680
        %v2713 = vpack.c.b16 %v2682, %v2681
        %v2714 = vpack.c.b16 %v2684, %v2683
        %v2715 = vpack.c.b16 %v2686, %v2685
        %v2716 = vpack.c.b16 %v2688, %v2687
        %v2717 = vpack.c.b16 %v2690, %v2689
        %v2718 = vpack.c.b16 %v2692, %v2691
        %v2719 = vpack.c.b16 %v2694, %v2693
        %v2720 = vpack.c.b16 %v2696, %v2695
        %v2721 = vpack.c.b16 %v2698, %v2697
        %v2722 = vpack.c.b16 %v2700, %v2699
        %v2723 = vpack.c.b16 %v2702, %v2701
        %v2724 = vpack.c.b16 %v2704, %v2703
        %v2725 = vpack.c.b16 %v2706, %v2705
        %v2726 = vpack.c.b16 %v2708, %v2707
        %v2727 = vpack.c.b16 %v2710, %v2709
        %v2728 = vpack.c.b16 %v2712, %v2711
        %2729 = vrot.lane.b32.xlu0 %v2713, 15
        %v2730 = vpop.permute.xlu0 %2729
        %2731 = vrot.lane.b32.xlu0 %v2714, 15
        %v2732 = vpop.permute.xlu0 %2731
        %2733 = vrot.lane.b32.xlu0 %v2715, 15
        %v2734 = vpop.permute.xlu0 %2733
        %2735 = vrot.lane.b32.xlu0 %v2716, 15
        %v2736 = vpop.permute.xlu0 %2735
        %2737 = vrot.lane.b32.xlu0 %v2717, 15
        %v2738 = vpop.permute.xlu0 %2737
        %2739 = vrot.lane.b32.xlu0 %v2718, 15
        %v2740 = vpop.permute.xlu0 %2739
        %2741 = vrot.lane.b32.xlu0 %v2719, 15
        %v2742 = vpop.permute.xlu0 %2741
        %2743 = vrot.lane.b32.xlu0 %v2720, 15
        %v2744 = vpop.permute.xlu0 %2743
        %2745 = vrot.lane.b32.xlu0 %v2721, 15
        %v2746 = vpop.permute.xlu0 %2745
        %2747 = vrot.lane.b32.xlu0 %v2722, 15
        %v2748 = vpop.permute.xlu0 %2747
        %2749 = vrot.lane.b32.xlu0 %v2723, 15
        %v2750 = vpop.permute.xlu0 %2749
        %2751 = vrot.lane.b32.xlu0 %v2724, 15
        %v2752 = vpop.permute.xlu0 %2751
        %2753 = vrot.lane.b32.xlu0 %v2725, 15
        %v2754 = vpop.permute.xlu0 %2753
        %2755 = vrot.lane.b32.xlu0 %v2726, 15
        %v2756 = vpop.permute.xlu0 %2755
        %2757 = vrot.lane.b32.xlu0 %v2727, 15
        %v2758 = vpop.permute.xlu0 %2757
        %2759 = vrot.lane.b32.xlu0 %v2728, 15
        %v2760 = vpop.permute.xlu0 %2759
        %vm2777 = vcmask 146552
        %2778 = vst.msk [vmem:[#allocation3] sm:$0xff] %vm2777, %v2730
        %2779 = vst.msk [vmem:[#allocation3 + $0x8] sm:$0xff] %vm2777, %v2732
        %2780 = vst.msk [vmem:[#allocation3 + $0x10] sm:$0xff] %vm2777, %v2734
        %2781 = vst.msk [vmem:[#allocation3 + $0x18] sm:$0xff] %vm2777, %v2736
        %2782 = vst.msk [vmem:[#allocation3 + $0x20] sm:$0xff] %vm2777, %v2738
        %2783 = vst.msk [vmem:[#allocation3 + $0x28] sm:$0xff] %vm2777, %v2740
        %2784 = vst.msk [vmem:[#allocation3 + $0x30] sm:$0xff] %vm2777, %v2742
        %2785 = vst.msk [vmem:[#allocation3 + $0x38] sm:$0xff] %vm2777, %v2744
        %2786 = vst.msk [vmem:[#allocation3 + $0x40] sm:$0xff] %vm2777, %v2746
        %2787 = vst.msk [vmem:[#allocation3 + $0x48] sm:$0xff] %vm2777, %v2748
        %2788 = vst.msk [vmem:[#allocation3 + $0x50] sm:$0xff] %vm2777, %v2750
        %2789 = vst.msk [vmem:[#allocation3 + $0x58] sm:$0xff] %vm2777, %v2752
        %2790 = vst.msk [vmem:[#allocation3 + $0x60] sm:$0xff] %vm2777, %v2754
        %2791 = vst.msk [vmem:[#allocation3 + $0x68] sm:$0xff] %vm2777, %v2756
        %2792 = vst.msk [vmem:[#allocation3 + $0x70] sm:$0xff] %vm2777, %v2758
        %2793 = vst.msk [vmem:[#allocation3 + $0x78] sm:$0xff] %vm2777, %v2760
        %s2794 = scalar_lea.vmem [#allocation2], 24
        %v2795 = vld [vmem:[%s2794] sm:$0xf]
        %v2796 = vld [vmem:[%s2794 + $0x4] sm:$0xf]
        %v2797 = vld [vmem:[%s2794 + $0xc] sm:$0xf]
        %v2798 = vld [vmem:[%s2794 + $0x10] sm:$0xf]
        %v2799 = vld [vmem:[%s2794 + $0x18] sm:$0xf]
        %v2800 = vld [vmem:[%s2794 + $0x1c] sm:$0xf]
        %v2801 = vld [vmem:[%s2794 + $0x24] sm:$0xf]
        %v2802 = vld [vmem:[%s2794 + $0x28] sm:$0xf]
        %v2803 = vld [vmem:[%s2794 + $0x30] sm:$0xf]
        %v2804 = vld [vmem:[%s2794 + $0x34] sm:$0xf]
        %v2805 = vld [vmem:[%s2794 + $0x3c] sm:$0xf]
        %v2806 = vld [vmem:[%s2794 + $0x40] sm:$0xf]
        %v2807 = vld [vmem:[%s2794 + $0x48] sm:$0xf]
        %v2808 = vld [vmem:[%s2794 + $0x4c] sm:$0xf]
        %v2809 = vld [vmem:[%s2794 + $0x54] sm:$0xf]
        %v2810 = vld [vmem:[%s2794 + $0x58] sm:$0xf]
        %v2811 = vld [vmem:[%s2794 + $0x60] sm:$0xf]
        %v2812 = vld [vmem:[%s2794 + $0x64] sm:$0xf]
        %v2813 = vld [vmem:[%s2794 + $0x6c] sm:$0xf]
        %v2814 = vld [vmem:[%s2794 + $0x70] sm:$0xf]
        %v2815 = vld [vmem:[%s2794 + $0x78] sm:$0xf]
        %v2816 = vld [vmem:[%s2794 + $0x7c] sm:$0xf]
        %v2817 = vld [vmem:[%s2794 + $0x84] sm:$0xf]
        %v2818 = vld [vmem:[%s2794 + $0x88] sm:$0xf]
        %v2819 = vld [vmem:[%s2794 + $0x90] sm:$0xf]
        %v2820 = vld [vmem:[%s2794 + $0x94] sm:$0xf]
        %v2821 = vld [vmem:[%s2794 + $0x9c] sm:$0xf]
        %v2822 = vld [vmem:[%s2794 + $0xa0] sm:$0xf]
        %v2823 = vld [vmem:[%s2794 + $0xa8] sm:$0xf]
        %v2824 = vld [vmem:[%s2794 + $0xac] sm:$0xf]
        %v2825 = vld [vmem:[%s2794 + $0xb4] sm:$0xf]
        %v2826 = vld [vmem:[%s2794 + $0xb8] sm:$0xf]
        %v2859 = vunpack.c.l.b16 %v2795
        %v2860 = vunpack.c.l.b16 %v2796
        %v2861 = vunpack.c.l.b16 %v2797
        %v2862 = vunpack.c.l.b16 %v2798
        %v2863 = vunpack.c.l.b16 %v2799
        %v2864 = vunpack.c.l.b16 %v2800
        %v2865 = vunpack.c.l.b16 %v2801
        %v2866 = vunpack.c.l.b16 %v2802
        %v2867 = vunpack.c.l.b16 %v2803
        %v2868 = vunpack.c.l.b16 %v2804
        %v2869 = vunpack.c.l.b16 %v2805
        %v2870 = vunpack.c.l.b16 %v2806
        %v2871 = vunpack.c.l.b16 %v2807
        %v2872 = vunpack.c.l.b16 %v2808
        %v2873 = vunpack.c.l.b16 %v2809
        %v2874 = vunpack.c.l.b16 %v2810
        %v2875 = vunpack.c.l.b16 %v2811
        %v2876 = vunpack.c.l.b16 %v2812
        %v2877 = vunpack.c.l.b16 %v2813
        %v2878 = vunpack.c.l.b16 %v2814
        %v2879 = vunpack.c.l.b16 %v2815
        %v2880 = vunpack.c.l.b16 %v2816
        %v2881 = vunpack.c.l.b16 %v2817
        %v2882 = vunpack.c.l.b16 %v2818
        %v2883 = vunpack.c.l.b16 %v2819
        %v2884 = vunpack.c.l.b16 %v2820
        %v2885 = vunpack.c.l.b16 %v2821
        %v2886 = vunpack.c.l.b16 %v2822
        %v2887 = vunpack.c.l.b16 %v2823
        %v2888 = vunpack.c.l.b16 %v2824
        %v2889 = vunpack.c.l.b16 %v2825
        %v2890 = vunpack.c.l.b16 %v2826
        %v2891 = vpack.c.b16 %v2860, %v2859
        %v2892 = vpack.c.b16 %v2862, %v2861
        %v2893 = vpack.c.b16 %v2864, %v2863
        %v2894 = vpack.c.b16 %v2866, %v2865
        %v2895 = vpack.c.b16 %v2868, %v2867
        %v2896 = vpack.c.b16 %v2870, %v2869
        %v2897 = vpack.c.b16 %v2872, %v2871
        %v2898 = vpack.c.b16 %v2874, %v2873
        %v2899 = vpack.c.b16 %v2876, %v2875
        %v2900 = vpack.c.b16 %v2878, %v2877
        %v2901 = vpack.c.b16 %v2880, %v2879
        %v2902 = vpack.c.b16 %v2882, %v2881
        %v2903 = vpack.c.b16 %v2884, %v2883
        %v2904 = vpack.c.b16 %v2886, %v2885
        %v2905 = vpack.c.b16 %v2888, %v2887
        %v2906 = vpack.c.b16 %v2890, %v2889
        %2907 = vrot.lane.b32.xlu0 %v2891, 18
        %v2908 = vpop.permute.xlu0 %2907
        %2909 = vrot.lane.b32.xlu0 %v2892, 18
        %v2910 = vpop.permute.xlu0 %2909
        %2911 = vrot.lane.b32.xlu0 %v2893, 18
        %v2912 = vpop.permute.xlu0 %2911
        %2913 = vrot.lane.b32.xlu0 %v2894, 18
        %v2914 = vpop.permute.xlu0 %2913
        %2915 = vrot.lane.b32.xlu0 %v2895, 18
        %v2916 = vpop.permute.xlu0 %2915
        %2917 = vrot.lane.b32.xlu0 %v2896, 18
        %v2918 = vpop.permute.xlu0 %2917
        %2919 = vrot.lane.b32.xlu0 %v2897, 18
        %v2920 = vpop.permute.xlu0 %2919
        %2921 = vrot.lane.b32.xlu0 %v2898, 18
        %v2922 = vpop.permute.xlu0 %2921
        %2923 = vrot.lane.b32.xlu0 %v2899, 18
        %v2924 = vpop.permute.xlu0 %2923
        %2925 = vrot.lane.b32.xlu0 %v2900, 18
        %v2926 = vpop.permute.xlu0 %2925
        %2927 = vrot.lane.b32.xlu0 %v2901, 18
        %v2928 = vpop.permute.xlu0 %2927
        %2929 = vrot.lane.b32.xlu0 %v2902, 18
        %v2930 = vpop.permute.xlu0 %2929
        %2931 = vrot.lane.b32.xlu0 %v2903, 18
        %v2932 = vpop.permute.xlu0 %2931
        %2933 = vrot.lane.b32.xlu0 %v2904, 18
        %v2934 = vpop.permute.xlu0 %2933
        %2935 = vrot.lane.b32.xlu0 %v2905, 18
        %v2936 = vpop.permute.xlu0 %2935
        %2937 = vrot.lane.b32.xlu0 %v2906, 18
        %v2938 = vpop.permute.xlu0 %2937
        %vm2955 = vcmask 171152
        %2956 = vst.msk [vmem:[#allocation3] sm:$0xff] %vm2955, %v2908
        %2957 = vst.msk [vmem:[#allocation3 + $0x8] sm:$0xff] %vm2955, %v2910
        %2958 = vst.msk [vmem:[#allocation3 + $0x10] sm:$0xff] %vm2955, %v2912
        %2959 = vst.msk [vmem:[#allocation3 + $0x18] sm:$0xff] %vm2955, %v2914
        %2960 = vst.msk [vmem:[#allocation3 + $0x20] sm:$0xff] %vm2955, %v2916
        %2961 = vst.msk [vmem:[#allocation3 + $0x28] sm:$0xff] %vm2955, %v2918
        %2962 = vst.msk [vmem:[#allocation3 + $0x30] sm:$0xff] %vm2955, %v2920
        %2963 = vst.msk [vmem:[#allocation3 + $0x38] sm:$0xff] %vm2955, %v2922
        %2964 = vst.msk [vmem:[#allocation3 + $0x40] sm:$0xff] %vm2955, %v2924
        %2965 = vst.msk [vmem:[#allocation3 + $0x48] sm:$0xff] %vm2955, %v2926
        %2966 = vst.msk [vmem:[#allocation3 + $0x50] sm:$0xff] %vm2955, %v2928
        %2967 = vst.msk [vmem:[#allocation3 + $0x58] sm:$0xff] %vm2955, %v2930
        %2968 = vst.msk [vmem:[#allocation3 + $0x60] sm:$0xff] %vm2955, %v2932
        %2969 = vst.msk [vmem:[#allocation3 + $0x68] sm:$0xff] %vm2955, %v2934
        %2970 = vst.msk [vmem:[#allocation3 + $0x70] sm:$0xff] %vm2955, %v2936
        %2971 = vst.msk [vmem:[#allocation3 + $0x78] sm:$0xff] %vm2955, %v2938
        %v2972 = vld [vmem:[%s2794] sm:$0xf]
        %v2973 = vld [vmem:[%s2794 + $0x4] sm:$0xf]
        %v2974 = vld [vmem:[%s2794 + $0x8] sm:$0x1]
        %v2975 = vld [vmem:[%s2794 + $0xc] sm:$0xf]
        %v2976 = vld [vmem:[%s2794 + $0x10] sm:$0xf]
        %v2977 = vld [vmem:[%s2794 + $0x14] sm:$0x1]
        %v2978 = vld [vmem:[%s2794 + $0x18] sm:$0xf]
        %v2979 = vld [vmem:[%s2794 + $0x1c] sm:$0xf]
        %v2980 = vld [vmem:[%s2794 + $0x20] sm:$0x1]
        %v2981 = vld [vmem:[%s2794 + $0x24] sm:$0xf]
        %v2982 = vld [vmem:[%s2794 + $0x28] sm:$0xf]
        %v2983 = vld [vmem:[%s2794 + $0x2c] sm:$0x1]
        %v2984 = vld [vmem:[%s2794 + $0x30] sm:$0xf]
        %v2985 = vld [vmem:[%s2794 + $0x34] sm:$0xf]
        %v2986 = vld [vmem:[%s2794 + $0x38] sm:$0x1]
        %v2987 = vld [vmem:[%s2794 + $0x3c] sm:$0xf]
        %v2988 = vld [vmem:[%s2794 + $0x40] sm:$0xf]
        %v2989 = vld [vmem:[%s2794 + $0x44] sm:$0x1]
        %v2990 = vld [vmem:[%s2794 + $0x48] sm:$0xf]
        %v2991 = vld [vmem:[%s2794 + $0x4c] sm:$0xf]
        %v2992 = vld [vmem:[%s2794 + $0x50] sm:$0x1]
        %v2993 = vld [vmem:[%s2794 + $0x54] sm:$0xf]
        %v2994 = vld [vmem:[%s2794 + $0x58] sm:$0xf]
        %v2995 = vld [vmem:[%s2794 + $0x5c] sm:$0x1]
        %v2996 = vld [vmem:[%s2794 + $0x60] sm:$0xf]
        %v2997 = vld [vmem:[%s2794 + $0x64] sm:$0xf]
        %v2998 = vld [vmem:[%s2794 + $0x68] sm:$0x1]
        %v2999 = vld [vmem:[%s2794 + $0x6c] sm:$0xf]
        %v3000 = vld [vmem:[%s2794 + $0x70] sm:$0xf]
        %v3001 = vld [vmem:[%s2794 + $0x74] sm:$0x1]
        %v3002 = vld [vmem:[%s2794 + $0x78] sm:$0xf]
        %v3003 = vld [vmem:[%s2794 + $0x7c] sm:$0xf]
        %v3004 = vld [vmem:[%s2794 + $0x80] sm:$0x1]
        %v3005 = vld [vmem:[%s2794 + $0x84] sm:$0xf]
        %v3006 = vld [vmem:[%s2794 + $0x88] sm:$0xf]
        %v3007 = vld [vmem:[%s2794 + $0x8c] sm:$0x1]
        %v3008 = vld [vmem:[%s2794 + $0x90] sm:$0xf]
        %v3009 = vld [vmem:[%s2794 + $0x94] sm:$0xf]
        %v3010 = vld [vmem:[%s2794 + $0x98] sm:$0x1]
        %v3011 = vld [vmem:[%s2794 + $0x9c] sm:$0xf]
        %v3012 = vld [vmem:[%s2794 + $0xa0] sm:$0xf]
        %v3013 = vld [vmem:[%s2794 + $0xa4] sm:$0x1]
        %v3014 = vld [vmem:[%s2794 + $0xa8] sm:$0xf]
        %v3015 = vld [vmem:[%s2794 + $0xac] sm:$0xf]
        %v3016 = vld [vmem:[%s2794 + $0xb0] sm:$0x1]
        %v3017 = vld [vmem:[%s2794 + $0xb4] sm:$0xf]
        %v3018 = vld [vmem:[%s2794 + $0xb8] sm:$0xf]
        %v3019 = vld [vmem:[%s2794 + $0xbc] sm:$0x1]
        %v3021 = vshrl.u32 %v2972, 16
        %v3023 = vrot.slane %v3021, 4
        %v3024 = vshll.u32 %v2972, 16
        %v3026 = vrot.slane %v3024, 5
        %v3027 = vor.u32 %v3023, %v3026
        %v3028 = vrot.slane %v3027, 4
        %v3030 = vshll.u32 %v2973, 16
        %v3032 = vrot.slane %v3030, 5
        %v3033 = vsel %vm929, %v3028, %v3032
        %v3034 = vshrl.u32 %v2973, 16
        %v3036 = vrot.slane %v3034, 4
        %v3037 = vor.u32 %v3036, %v3032
        %v3038 = vrot.slane %v3037, 4
        %v3040 = vshll.u32 %v2974, 16
        %v3042 = vrot.slane %v3040, 5
        %v3043 = vsel %vm929, %v3038, %v3042
        %v3045 = vshrl.u32 %v2975, 16
        %v3047 = vrot.slane %v3045, 4
        %v3048 = vshll.u32 %v2975, 16
        %v3050 = vrot.slane %v3048, 5
        %v3051 = vor.u32 %v3047, %v3050
        %v3052 = vrot.slane %v3051, 4
        %v3054 = vshll.u32 %v2976, 16
        %v3056 = vrot.slane %v3054, 5
        %v3057 = vsel %vm929, %v3052, %v3056
        %v3058 = vshrl.u32 %v2976, 16
        %v3060 = vrot.slane %v3058, 4
        %v3061 = vor.u32 %v3060, %v3056
        %v3062 = vrot.slane %v3061, 4
        %v3064 = vshll.u32 %v2977, 16
        %v3066 = vrot.slane %v3064, 5
        %v3067 = vsel %vm929, %v3062, %v3066
        %v3069 = vshrl.u32 %v2978, 16
        %v3071 = vrot.slane %v3069, 4
        %v3072 = vshll.u32 %v2978, 16
        %v3074 = vrot.slane %v3072, 5
        %v3075 = vor.u32 %v3071, %v3074
        %v3076 = vrot.slane %v3075, 4
        %v3078 = vshll.u32 %v2979, 16
        %v3080 = vrot.slane %v3078, 5
        %v3081 = vsel %vm929, %v3076, %v3080
        %v3082 = vshrl.u32 %v2979, 16
        %v3084 = vrot.slane %v3082, 4
        %v3085 = vor.u32 %v3084, %v3080
        %v3086 = vrot.slane %v3085, 4
        %v3088 = vshll.u32 %v2980, 16
        %v3090 = vrot.slane %v3088, 5
        %v3091 = vsel %vm929, %v3086, %v3090
        %v3093 = vshrl.u32 %v2981, 16
        %v3095 = vrot.slane %v3093, 4
        %v3096 = vshll.u32 %v2981, 16
        %v3098 = vrot.slane %v3096, 5
        %v3099 = vor.u32 %v3095, %v3098
        %v3100 = vrot.slane %v3099, 4
        %v3102 = vshll.u32 %v2982, 16
        %v3104 = vrot.slane %v3102, 5
        %v3105 = vsel %vm929, %v3100, %v3104
        %v3106 = vshrl.u32 %v2982, 16
        %v3108 = vrot.slane %v3106, 4
        %v3109 = vor.u32 %v3108, %v3104
        %v3110 = vrot.slane %v3109, 4
        %v3112 = vshll.u32 %v2983, 16
        %v3114 = vrot.slane %v3112, 5
        %v3115 = vsel %vm929, %v3110, %v3114
        %v3117 = vshrl.u32 %v2984, 16
        %v3119 = vrot.slane %v3117, 4
        %v3120 = vshll.u32 %v2984, 16
        %v3122 = vrot.slane %v3120, 5
        %v3123 = vor.u32 %v3119, %v3122
        %v3124 = vrot.slane %v3123, 4
        %v3126 = vshll.u32 %v2985, 16
        %v3128 = vrot.slane %v3126, 5
        %v3129 = vsel %vm929, %v3124, %v3128
        %v3130 = vshrl.u32 %v2985, 16
        %v3132 = vrot.slane %v3130, 4
        %v3133 = vor.u32 %v3132, %v3128
        %v3134 = vrot.slane %v3133, 4
        %v3136 = vshll.u32 %v2986, 16
        %v3138 = vrot.slane %v3136, 5
        %v3139 = vsel %vm929, %v3134, %v3138
        %v3141 = vshrl.u32 %v2987, 16
        %v3143 = vrot.slane %v3141, 4
        %v3144 = vshll.u32 %v2987, 16
        %v3146 = vrot.slane %v3144, 5
        %v3147 = vor.u32 %v3143, %v3146
        %v3148 = vrot.slane %v3147, 4
        %v3150 = vshll.u32 %v2988, 16
        %v3152 = vrot.slane %v3150, 5
        %v3153 = vsel %vm929, %v3148, %v3152
        %v3154 = vshrl.u32 %v2988, 16
        %v3156 = vrot.slane %v3154, 4
        %v3157 = vor.u32 %v3156, %v3152
        %v3158 = vrot.slane %v3157, 4
        %v3160 = vshll.u32 %v2989, 16
        %v3162 = vrot.slane %v3160, 5
        %v3163 = vsel %vm929, %v3158, %v3162
        %v3165 = vshrl.u32 %v2990, 16
        %v3167 = vrot.slane %v3165, 4
        %v3168 = vshll.u32 %v2990, 16
        %v3170 = vrot.slane %v3168, 5
        %v3171 = vor.u32 %v3167, %v3170
        %v3172 = vrot.slane %v3171, 4
        %v3174 = vshll.u32 %v2991, 16
        %v3176 = vrot.slane %v3174, 5
        %v3177 = vsel %vm929, %v3172, %v3176
        %v3178 = vshrl.u32 %v2991, 16
        %v3180 = vrot.slane %v3178, 4
        %v3181 = vor.u32 %v3180, %v3176
        %v3182 = vrot.slane %v3181, 4
        %v3184 = vshll.u32 %v2992, 16
        %v3186 = vrot.slane %v3184, 5
        %v3187 = vsel %vm929, %v3182, %v3186
        %v3189 = vshrl.u32 %v2993, 16
        %v3191 = vrot.slane %v3189, 4
        %v3192 = vshll.u32 %v2993, 16
        %v3194 = vrot.slane %v3192, 5
        %v3195 = vor.u32 %v3191, %v3194
        %v3196 = vrot.slane %v3195, 4
        %v3198 = vshll.u32 %v2994, 16
        %v3200 = vrot.slane %v3198, 5
        %v3201 = vsel %vm929, %v3196, %v3200
        %v3202 = vshrl.u32 %v2994, 16
        %v3204 = vrot.slane %v3202, 4
        %v3205 = vor.u32 %v3204, %v3200
        %v3206 = vrot.slane %v3205, 4
        %v3208 = vshll.u32 %v2995, 16
        %v3210 = vrot.slane %v3208, 5
        %v3211 = vsel %vm929, %v3206, %v3210
        %v3213 = vshrl.u32 %v2996, 16
        %v3215 = vrot.slane %v3213, 4
        %v3216 = vshll.u32 %v2996, 16
        %v3218 = vrot.slane %v3216, 5
        %v3219 = vor.u32 %v3215, %v3218
        %v3220 = vrot.slane %v3219, 4
        %v3222 = vshll.u32 %v2997, 16
        %v3224 = vrot.slane %v3222, 5
        %v3225 = vsel %vm929, %v3220, %v3224
        %v3226 = vshrl.u32 %v2997, 16
        %v3228 = vrot.slane %v3226, 4
        %v3229 = vor.u32 %v3228, %v3224
        %v3230 = vrot.slane %v3229, 4
        %v3232 = vshll.u32 %v2998, 16
        %v3234 = vrot.slane %v3232, 5
        %v3235 = vsel %vm929, %v3230, %v3234
        %v3237 = vshrl.u32 %v2999, 16
        %v3239 = vrot.slane %v3237, 4
        %v3240 = vshll.u32 %v2999, 16
        %v3242 = vrot.slane %v3240, 5
        %v3243 = vor.u32 %v3239, %v3242
        %v3244 = vrot.slane %v3243, 4
        %v3246 = vshll.u32 %v3000, 16
        %v3248 = vrot.slane %v3246, 5
        %v3249 = vsel %vm929, %v3244, %v3248
        %v3250 = vshrl.u32 %v3000, 16
        %v3252 = vrot.slane %v3250, 4
        %v3253 = vor.u32 %v3252, %v3248
        %v3254 = vrot.slane %v3253, 4
        %v3256 = vshll.u32 %v3001, 16
        %v3258 = vrot.slane %v3256, 5
        %v3259 = vsel %vm929, %v3254, %v3258
        %v3261 = vshrl.u32 %v3002, 16
        %v3263 = vrot.slane %v3261, 4
        %v3264 = vshll.u32 %v3002, 16
        %v3266 = vrot.slane %v3264, 5
        %v3267 = vor.u32 %v3263, %v3266
        %v3268 = vrot.slane %v3267, 4
        %v3270 = vshll.u32 %v3003, 16
        %v3272 = vrot.slane %v3270, 5
        %v3273 = vsel %vm929, %v3268, %v3272
        %v3274 = vshrl.u32 %v3003, 16
        %v3276 = vrot.slane %v3274, 4
        %v3277 = vor.u32 %v3276, %v3272
        %v3278 = vrot.slane %v3277, 4
        %v3280 = vshll.u32 %v3004, 16
        %v3282 = vrot.slane %v3280, 5
        %v3283 = vsel %vm929, %v3278, %v3282
        %v3285 = vshrl.u32 %v3005, 16
        %v3287 = vrot.slane %v3285, 4
        %v3288 = vshll.u32 %v3005, 16
        %v3290 = vrot.slane %v3288, 5
        %v3291 = vor.u32 %v3287, %v3290
        %v3292 = vrot.slane %v3291, 4
        %v3294 = vshll.u32 %v3006, 16
        %v3296 = vrot.slane %v3294, 5
        %v3297 = vsel %vm929, %v3292, %v3296
        %v3298 = vshrl.u32 %v3006, 16
        %v3300 = vrot.slane %v3298, 4
        %v3301 = vor.u32 %v3300, %v3296
        %v3302 = vrot.slane %v3301, 4
        %v3304 = vshll.u32 %v3007, 16
        %v3306 = vrot.slane %v3304, 5
        %v3307 = vsel %vm929, %v3302, %v3306
        %v3309 = vshrl.u32 %v3008, 16
        %v3311 = vrot.slane %v3309, 4
        %v3312 = vshll.u32 %v3008, 16
        %v3314 = vrot.slane %v3312, 5
        %v3315 = vor.u32 %v3311, %v3314
        %v3316 = vrot.slane %v3315, 4
        %v3318 = vshll.u32 %v3009, 16
        %v3320 = vrot.slane %v3318, 5
        %v3321 = vsel %vm929, %v3316, %v3320
        %v3322 = vshrl.u32 %v3009, 16
        %v3324 = vrot.slane %v3322, 4
        %v3325 = vor.u32 %v3324, %v3320
        %v3326 = vrot.slane %v3325, 4
        %v3328 = vshll.u32 %v3010, 16
        %v3330 = vrot.slane %v3328, 5
        %v3331 = vsel %vm929, %v3326, %v3330
        %v3333 = vshrl.u32 %v3011, 16
        %v3335 = vrot.slane %v3333, 4
        %v3336 = vshll.u32 %v3011, 16
        %v3338 = vrot.slane %v3336, 5
        %v3339 = vor.u32 %v3335, %v3338
        %v3340 = vrot.slane %v3339, 4
        %v3342 = vshll.u32 %v3012, 16
        %v3344 = vrot.slane %v3342, 5
        %v3345 = vsel %vm929, %v3340, %v3344
        %v3346 = vshrl.u32 %v3012, 16
        %v3348 = vrot.slane %v3346, 4
        %v3349 = vor.u32 %v3348, %v3344
        %v3350 = vrot.slane %v3349, 4
        %v3352 = vshll.u32 %v3013, 16
        %v3354 = vrot.slane %v3352, 5
        %v3355 = vsel %vm929, %v3350, %v3354
        %v3357 = vshrl.u32 %v3014, 16
        %v3359 = vrot.slane %v3357, 4
        %v3360 = vshll.u32 %v3014, 16
        %v3362 = vrot.slane %v3360, 5
        %v3363 = vor.u32 %v3359, %v3362
        %v3364 = vrot.slane %v3363, 4
        %v3366 = vshll.u32 %v3015, 16
        %v3368 = vrot.slane %v3366, 5
        %v3369 = vsel %vm929, %v3364, %v3368
        %v3370 = vshrl.u32 %v3015, 16
        %v3372 = vrot.slane %v3370, 4
        %v3373 = vor.u32 %v3372, %v3368
        %v3374 = vrot.slane %v3373, 4
        %v3376 = vshll.u32 %v3016, 16
        %v3378 = vrot.slane %v3376, 5
        %v3379 = vsel %vm929, %v3374, %v3378
        %v3381 = vshrl.u32 %v3017, 16
        %v3383 = vrot.slane %v3381, 4
        %v3384 = vshll.u32 %v3017, 16
        %v3386 = vrot.slane %v3384, 5
        %v3387 = vor.u32 %v3383, %v3386
        %v3388 = vrot.slane %v3387, 4
        %v3390 = vshll.u32 %v3018, 16
        %v3392 = vrot.slane %v3390, 5
        %v3393 = vsel %vm929, %v3388, %v3392
        %v3394 = vshrl.u32 %v3018, 16
        %v3396 = vrot.slane %v3394, 4
        %v3397 = vor.u32 %v3396, %v3392
        %v3398 = vrot.slane %v3397, 4
        %v3400 = vshll.u32 %v3019, 16
        %v3402 = vrot.slane %v3400, 5
        %v3403 = vsel %vm929, %v3398, %v3402
        %v3404 = vunpack.c.l.b16 %v3033
        %v3405 = vunpack.c.l.b16 %v3043
        %v3406 = vunpack.c.l.b16 %v3057
        %v3407 = vunpack.c.l.b16 %v3067
        %v3408 = vunpack.c.l.b16 %v3081
        %v3409 = vunpack.c.l.b16 %v3091
        %v3410 = vunpack.c.l.b16 %v3105
        %v3411 = vunpack.c.l.b16 %v3115
        %v3412 = vunpack.c.l.b16 %v3129
        %v3413 = vunpack.c.l.b16 %v3139
        %v3414 = vunpack.c.l.b16 %v3153
        %v3415 = vunpack.c.l.b16 %v3163
        %v3416 = vunpack.c.l.b16 %v3177
        %v3417 = vunpack.c.l.b16 %v3187
        %v3418 = vunpack.c.l.b16 %v3201
        %v3419 = vunpack.c.l.b16 %v3211
        %v3420 = vunpack.c.l.b16 %v3225
        %v3421 = vunpack.c.l.b16 %v3235
        %v3422 = vunpack.c.l.b16 %v3249
        %v3423 = vunpack.c.l.b16 %v3259
        %v3424 = vunpack.c.l.b16 %v3273
        %v3425 = vunpack.c.l.b16 %v3283
        %v3426 = vunpack.c.l.b16 %v3297
        %v3427 = vunpack.c.l.b16 %v3307
        %v3428 = vunpack.c.l.b16 %v3321
        %v3429 = vunpack.c.l.b16 %v3331
        %v3430 = vunpack.c.l.b16 %v3345
        %v3431 = vunpack.c.l.b16 %v3355
        %v3432 = vunpack.c.l.b16 %v3369
        %v3433 = vunpack.c.l.b16 %v3379
        %v3434 = vunpack.c.l.b16 %v3393
        %v3435 = vunpack.c.l.b16 %v3403
        %v3436 = vpack.c.b16 %v3405, %v3404
        %v3437 = vpack.c.b16 %v3407, %v3406
        %v3438 = vpack.c.b16 %v3409, %v3408
        %v3439 = vpack.c.b16 %v3411, %v3410
        %v3440 = vpack.c.b16 %v3413, %v3412
        %v3441 = vpack.c.b16 %v3415, %v3414
        %v3442 = vpack.c.b16 %v3417, %v3416
        %v3443 = vpack.c.b16 %v3419, %v3418
        %v3444 = vpack.c.b16 %v3421, %v3420
        %v3445 = vpack.c.b16 %v3423, %v3422
        %v3446 = vpack.c.b16 %v3425, %v3424
        %v3447 = vpack.c.b16 %v3427, %v3426
        %v3448 = vpack.c.b16 %v3429, %v3428
        %v3449 = vpack.c.b16 %v3431, %v3430
        %v3450 = vpack.c.b16 %v3433, %v3432
        %v3451 = vpack.c.b16 %v3435, %v3434
        %3452 = vrot.lane.b32.xlu0 %v3436, 21
        %v3453 = vpop.permute.xlu0 %3452
        %3454 = vrot.lane.b32.xlu0 %v3437, 21
        %v3455 = vpop.permute.xlu0 %3454
        %3456 = vrot.lane.b32.xlu0 %v3438, 21
        %v3457 = vpop.permute.xlu0 %3456
        %3458 = vrot.lane.b32.xlu0 %v3439, 21
        %v3459 = vpop.permute.xlu0 %3458
        %3460 = vrot.lane.b32.xlu0 %v3440, 21
        %v3461 = vpop.permute.xlu0 %3460
        %3462 = vrot.lane.b32.xlu0 %v3441, 21
        %v3463 = vpop.permute.xlu0 %3462
        %3464 = vrot.lane.b32.xlu0 %v3442, 21
        %v3465 = vpop.permute.xlu0 %3464
        %3466 = vrot.lane.b32.xlu0 %v3443, 21
        %v3467 = vpop.permute.xlu0 %3466
        %3468 = vrot.lane.b32.xlu0 %v3444, 21
        %v3469 = vpop.permute.xlu0 %3468
        %3470 = vrot.lane.b32.xlu0 %v3445, 21
        %v3471 = vpop.permute.xlu0 %3470
        %3472 = vrot.lane.b32.xlu0 %v3446, 21
        %v3473 = vpop.permute.xlu0 %3472
        %3474 = vrot.lane.b32.xlu0 %v3447, 21
        %v3475 = vpop.permute.xlu0 %3474
        %3476 = vrot.lane.b32.xlu0 %v3448, 21
        %v3477 = vpop.permute.xlu0 %3476
        %3478 = vrot.lane.b32.xlu0 %v3449, 21
        %v3479 = vpop.permute.xlu0 %3478
        %3480 = vrot.lane.b32.xlu0 %v3450, 21
        %v3481 = vpop.permute.xlu0 %3480
        %3482 = vrot.lane.b32.xlu0 %v3451, 21
        %v3483 = vpop.permute.xlu0 %3482
        %vm3500 = vcmask 195752
        %3501 = vst.msk [vmem:[#allocation3] sm:$0xff] %vm3500, %v3453
        %3502 = vst.msk [vmem:[#allocation3 + $0x8] sm:$0xff] %vm3500, %v3455
        %3503 = vst.msk [vmem:[#allocation3 + $0x10] sm:$0xff] %vm3500, %v3457
        %3504 = vst.msk [vmem:[#allocation3 + $0x18] sm:$0xff] %vm3500, %v3459
        %3505 = vst.msk [vmem:[#allocation3 + $0x20] sm:$0xff] %vm3500, %v3461
        %3506 = vst.msk [vmem:[#allocation3 + $0x28] sm:$0xff] %vm3500, %v3463
        %3507 = vst.msk [vmem:[#allocation3 + $0x30] sm:$0xff] %vm3500, %v3465
        %3508 = vst.msk [vmem:[#allocation3 + $0x38] sm:$0xff] %vm3500, %v3467
        %3509 = vst.msk [vmem:[#allocation3 + $0x40] sm:$0xff] %vm3500, %v3469
        %3510 = vst.msk [vmem:[#allocation3 + $0x48] sm:$0xff] %vm3500, %v3471
        %3511 = vst.msk [vmem:[#allocation3 + $0x50] sm:$0xff] %vm3500, %v3473
        %3512 = vst.msk [vmem:[#allocation3 + $0x58] sm:$0xff] %vm3500, %v3475
        %3513 = vst.msk [vmem:[#allocation3 + $0x60] sm:$0xff] %vm3500, %v3477
        %3514 = vst.msk [vmem:[#allocation3 + $0x68] sm:$0xff] %vm3500, %v3479
        %3515 = vst.msk [vmem:[#allocation3 + $0x70] sm:$0xff] %vm3500, %v3481
        %3516 = vst.msk [vmem:[#allocation3 + $0x78] sm:$0xff] %vm3500, %v3483
        %v3517 = vld [vmem:[%s2794] sm:$0xe]
        %v3518 = vld [vmem:[%s2794 + $0x4] sm:$0xf]
        %v3519 = vld [vmem:[%s2794 + $0x8] sm:$0x1]
        %v3520 = vld [vmem:[%s2794 + $0xc] sm:$0xe]
        %v3521 = vld [vmem:[%s2794 + $0x10] sm:$0xf]
        %v3522 = vld [vmem:[%s2794 + $0x14] sm:$0x1]
        %v3523 = vld [vmem:[%s2794 + $0x18] sm:$0xe]
        %v3524 = vld [vmem:[%s2794 + $0x1c] sm:$0xf]
        %v3525 = vld [vmem:[%s2794 + $0x20] sm:$0x1]
        %v3526 = vld [vmem:[%s2794 + $0x24] sm:$0xe]
        %v3527 = vld [vmem:[%s2794 + $0x28] sm:$0xf]
        %v3528 = vld [vmem:[%s2794 + $0x2c] sm:$0x1]
        %v3529 = vld [vmem:[%s2794 + $0x30] sm:$0xe]
        %v3530 = vld [vmem:[%s2794 + $0x34] sm:$0xf]
        %v3531 = vld [vmem:[%s2794 + $0x38] sm:$0x1]
        %v3532 = vld [vmem:[%s2794 + $0x3c] sm:$0xe]
        %v3533 = vld [vmem:[%s2794 + $0x40] sm:$0xf]
        %v3534 = vld [vmem:[%s2794 + $0x44] sm:$0x1]
        %v3535 = vld [vmem:[%s2794 + $0x48] sm:$0xe]
        %v3536 = vld [vmem:[%s2794 + $0x4c] sm:$0xf]
        %v3537 = vld [vmem:[%s2794 + $0x50] sm:$0x1]
        %v3538 = vld [vmem:[%s2794 + $0x54] sm:$0xe]
        %v3539 = vld [vmem:[%s2794 + $0x58] sm:$0xf]
        %v3540 = vld [vmem:[%s2794 + $0x5c] sm:$0x1]
        %v3541 = vld [vmem:[%s2794 + $0x60] sm:$0xe]
        %v3542 = vld [vmem:[%s2794 + $0x64] sm:$0xf]
        %v3543 = vld [vmem:[%s2794 + $0x68] sm:$0x1]
        %v3544 = vld [vmem:[%s2794 + $0x6c] sm:$0xe]
        %v3545 = vld [vmem:[%s2794 + $0x70] sm:$0xf]
        %v3546 = vld [vmem:[%s2794 + $0x74] sm:$0x1]
        %v3547 = vld [vmem:[%s2794 + $0x78] sm:$0xe]
        %v3548 = vld [vmem:[%s2794 + $0x7c] sm:$0xf]
        %v3549 = vld [vmem:[%s2794 + $0x80] sm:$0x1]
        %v3550 = vld [vmem:[%s2794 + $0x84] sm:$0xe]
        %v3551 = vld [vmem:[%s2794 + $0x88] sm:$0xf]
        %v3552 = vld [vmem:[%s2794 + $0x8c] sm:$0x1]
        %v3553 = vld [vmem:[%s2794 + $0x90] sm:$0xe]
        %v3554 = vld [vmem:[%s2794 + $0x94] sm:$0xf]
        %v3555 = vld [vmem:[%s2794 + $0x98] sm:$0x1]
        %v3556 = vld [vmem:[%s2794 + $0x9c] sm:$0xe]
        %v3557 = vld [vmem:[%s2794 + $0xa0] sm:$0xf]
        %v3558 = vld [vmem:[%s2794 + $0xa4] sm:$0x1]
        %v3559 = vld [vmem:[%s2794 + $0xa8] sm:$0xe]
        %v3560 = vld [vmem:[%s2794 + $0xac] sm:$0xf]
        %v3561 = vld [vmem:[%s2794 + $0xb0] sm:$0x1]
        %v3562 = vld [vmem:[%s2794 + $0xb4] sm:$0xe]
        %v3563 = vld [vmem:[%s2794 + $0xb8] sm:$0xf]
        %v3564 = vld [vmem:[%s2794 + $0xbc] sm:$0x1]
        %v3613 = vrot.slane %v3517, 5
        %v3614 = vrot.slane %v3613, 4
        %v3615 = vrot.slane %v3518, 5
        %v3616 = vsel %vm1525, %v3614, %v3615
        %v3617 = vrot.slane %v3615, 4
        %v3618 = vrot.slane %v3519, 5
        %v3619 = vsel %vm1525, %v3617, %v3618
        %v3620 = vrot.slane %v3520, 5
        %v3621 = vrot.slane %v3620, 4
        %v3622 = vrot.slane %v3521, 5
        %v3623 = vsel %vm1525, %v3621, %v3622
        %v3624 = vrot.slane %v3622, 4
        %v3625 = vrot.slane %v3522, 5
        %v3626 = vsel %vm1525, %v3624, %v3625
        %v3627 = vrot.slane %v3523, 5
        %v3628 = vrot.slane %v3627, 4
        %v3629 = vrot.slane %v3524, 5
        %v3630 = vsel %vm1525, %v3628, %v3629
        %v3631 = vrot.slane %v3629, 4
        %v3632 = vrot.slane %v3525, 5
        %v3633 = vsel %vm1525, %v3631, %v3632
        %v3634 = vrot.slane %v3526, 5
        %v3635 = vrot.slane %v3634, 4
        %v3636 = vrot.slane %v3527, 5
        %v3637 = vsel %vm1525, %v3635, %v3636
        %v3638 = vrot.slane %v3636, 4
        %v3639 = vrot.slane %v3528, 5
        %v3640 = vsel %vm1525, %v3638, %v3639
        %v3641 = vrot.slane %v3529, 5
        %v3642 = vrot.slane %v3641, 4
        %v3643 = vrot.slane %v3530, 5
        %v3644 = vsel %vm1525, %v3642, %v3643
        %v3645 = vrot.slane %v3643, 4
        %v3646 = vrot.slane %v3531, 5
        %v3647 = vsel %vm1525, %v3645, %v3646
        %v3648 = vrot.slane %v3532, 5
        %v3649 = vrot.slane %v3648, 4
        %v3650 = vrot.slane %v3533, 5
        %v3651 = vsel %vm1525, %v3649, %v3650
        %v3652 = vrot.slane %v3650, 4
        %v3653 = vrot.slane %v3534, 5
        %v3654 = vsel %vm1525, %v3652, %v3653
        %v3655 = vrot.slane %v3535, 5
        %v3656 = vrot.slane %v3655, 4
        %v3657 = vrot.slane %v3536, 5
        %v3658 = vsel %vm1525, %v3656, %v3657
        %v3659 = vrot.slane %v3657, 4
        %v3660 = vrot.slane %v3537, 5
        %v3661 = vsel %vm1525, %v3659, %v3660
        %v3662 = vrot.slane %v3538, 5
        %v3663 = vrot.slane %v3662, 4
        %v3664 = vrot.slane %v3539, 5
        %v3665 = vsel %vm1525, %v3663, %v3664
        %v3666 = vrot.slane %v3664, 4
        %v3667 = vrot.slane %v3540, 5
        %v3668 = vsel %vm1525, %v3666, %v3667
        %v3669 = vrot.slane %v3541, 5
        %v3670 = vrot.slane %v3669, 4
        %v3671 = vrot.slane %v3542, 5
        %v3672 = vsel %vm1525, %v3670, %v3671
        %v3673 = vrot.slane %v3671, 4
        %v3674 = vrot.slane %v3543, 5
        %v3675 = vsel %vm1525, %v3673, %v3674
        %v3676 = vrot.slane %v3544, 5
        %v3677 = vrot.slane %v3676, 4
        %v3678 = vrot.slane %v3545, 5
        %v3679 = vsel %vm1525, %v3677, %v3678
        %v3680 = vrot.slane %v3678, 4
        %v3681 = vrot.slane %v3546, 5
        %v3682 = vsel %vm1525, %v3680, %v3681
        %v3683 = vrot.slane %v3547, 5
        %v3684 = vrot.slane %v3683, 4
        %v3685 = vrot.slane %v3548, 5
        %v3686 = vsel %vm1525, %v3684, %v3685
        %v3687 = vrot.slane %v3685, 4
        %v3688 = vrot.slane %v3549, 5
        %v3689 = vsel %vm1525, %v3687, %v3688
        %v3690 = vrot.slane %v3550, 5
        %v3691 = vrot.slane %v3690, 4
        %v3692 = vrot.slane %v3551, 5
        %v3693 = vsel %vm1525, %v3691, %v3692
        %v3694 = vrot.slane %v3692, 4
        %v3695 = vrot.slane %v3552, 5
        %v3696 = vsel %vm1525, %v3694, %v3695
        %v3697 = vrot.slane %v3553, 5
        %v3698 = vrot.slane %v3697, 4
        %v3699 = vrot.slane %v3554, 5
        %v3700 = vsel %vm1525, %v3698, %v3699
        %v3701 = vrot.slane %v3699, 4
        %v3702 = vrot.slane %v3555, 5
        %v3703 = vsel %vm1525, %v3701, %v3702
        %v3704 = vrot.slane %v3556, 5
        %v3705 = vrot.slane %v3704, 4
        %v3706 = vrot.slane %v3557, 5
        %v3707 = vsel %vm1525, %v3705, %v3706
        %v3708 = vrot.slane %v3706, 4
        %v3709 = vrot.slane %v3558, 5
        %v3710 = vsel %vm1525, %v3708, %v3709
        %v3711 = vrot.slane %v3559, 5
        %v3712 = vrot.slane %v3711, 4
        %v3713 = vrot.slane %v3560, 5
        %v3714 = vsel %vm1525, %v3712, %v3713
        %v3715 = vrot.slane %v3713, 4
        %v3716 = vrot.slane %v3561, 5
        %v3717 = vsel %vm1525, %v3715, %v3716
        %v3718 = vrot.slane %v3562, 5
        %v3719 = vrot.slane %v3718, 4
        %v3720 = vrot.slane %v3563, 5
        %v3721 = vsel %vm1525, %v3719, %v3720
        %v3722 = vrot.slane %v3720, 4
        %v3723 = vrot.slane %v3564, 5
        %v3724 = vsel %vm1525, %v3722, %v3723
        %v3725 = vunpack.c.l.b16 %v3616
        %v3726 = vunpack.c.l.b16 %v3619
        %v3727 = vunpack.c.l.b16 %v3623
        %v3728 = vunpack.c.l.b16 %v3626
        %v3729 = vunpack.c.l.b16 %v3630
        %v3730 = vunpack.c.l.b16 %v3633
        %v3731 = vunpack.c.l.b16 %v3637
        %v3732 = vunpack.c.l.b16 %v3640
        %v3733 = vunpack.c.l.b16 %v3644
        %v3734 = vunpack.c.l.b16 %v3647
        %v3735 = vunpack.c.l.b16 %v3651
        %v3736 = vunpack.c.l.b16 %v3654
        %v3737 = vunpack.c.l.b16 %v3658
        %v3738 = vunpack.c.l.b16 %v3661
        %v3739 = vunpack.c.l.b16 %v3665
        %v3740 = vunpack.c.l.b16 %v3668
        %v3741 = vunpack.c.l.b16 %v3672
        %v3742 = vunpack.c.l.b16 %v3675
        %v3743 = vunpack.c.l.b16 %v3679
        %v3744 = vunpack.c.l.b16 %v3682
        %v3745 = vunpack.c.l.b16 %v3686
        %v3746 = vunpack.c.l.b16 %v3689
        %v3747 = vunpack.c.l.b16 %v3693
        %v3748 = vunpack.c.l.b16 %v3696
        %v3749 = vunpack.c.l.b16 %v3700
        %v3750 = vunpack.c.l.b16 %v3703
        %v3751 = vunpack.c.l.b16 %v3707
        %v3752 = vunpack.c.l.b16 %v3710
        %v3753 = vunpack.c.l.b16 %v3714
        %v3754 = vunpack.c.l.b16 %v3717
        %v3755 = vunpack.c.l.b16 %v3721
        %v3756 = vunpack.c.l.b16 %v3724
        %v3757 = vpack.c.b16 %v3726, %v3725
        %v3758 = vpack.c.b16 %v3728, %v3727
        %v3759 = vpack.c.b16 %v3730, %v3729
        %v3760 = vpack.c.b16 %v3732, %v3731
        %v3761 = vpack.c.b16 %v3734, %v3733
        %v3762 = vpack.c.b16 %v3736, %v3735
        %v3763 = vpack.c.b16 %v3738, %v3737
        %v3764 = vpack.c.b16 %v3740, %v3739
        %v3765 = vpack.c.b16 %v3742, %v3741
        %v3766 = vpack.c.b16 %v3744, %v3743
        %v3767 = vpack.c.b16 %v3746, %v3745
        %v3768 = vpack.c.b16 %v3748, %v3747
        %v3769 = vpack.c.b16 %v3750, %v3749
        %v3770 = vpack.c.b16 %v3752, %v3751
        %v3771 = vpack.c.b16 %v3754, %v3753
        %v3772 = vpack.c.b16 %v3756, %v3755
        %3773 = vrot.lane.b32.xlu0 %v3757, 24
        %v3774 = vpop.permute.xlu0 %3773
        %3775 = vrot.lane.b32.xlu0 %v3758, 24
        %v3776 = vpop.permute.xlu0 %3775
        %3777 = vrot.lane.b32.xlu0 %v3759, 24
        %v3778 = vpop.permute.xlu0 %3777
        %3779 = vrot.lane.b32.xlu0 %v3760, 24
        %v3780 = vpop.permute.xlu0 %3779
        %3781 = vrot.lane.b32.xlu0 %v3761, 24
        %v3782 = vpop.permute.xlu0 %3781
        %3783 = vrot.lane.b32.xlu0 %v3762, 24
        %v3784 = vpop.permute.xlu0 %3783
        %3785 = vrot.lane.b32.xlu0 %v3763, 24
        %v3786 = vpop.permute.xlu0 %3785
        %3787 = vrot.lane.b32.xlu0 %v3764, 24
        %v3788 = vpop.permute.xlu0 %3787
        %3789 = vrot.lane.b32.xlu0 %v3765, 24
        %v3790 = vpop.permute.xlu0 %3789
        %3791 = vrot.lane.b32.xlu0 %v3766, 24
        %v3792 = vpop.permute.xlu0 %3791
        %3793 = vrot.lane.b32.xlu0 %v3767, 24
        %v3794 = vpop.permute.xlu0 %3793
        %3795 = vrot.lane.b32.xlu0 %v3768, 24
        %v3796 = vpop.permute.xlu0 %3795
        %3797 = vrot.lane.b32.xlu0 %v3769, 24
        %v3798 = vpop.permute.xlu0 %3797
        %3799 = vrot.lane.b32.xlu0 %v3770, 24
        %v3800 = vpop.permute.xlu0 %3799
        %3801 = vrot.lane.b32.xlu0 %v3771, 24
        %v3802 = vpop.permute.xlu0 %3801
        %3803 = vrot.lane.b32.xlu0 %v3772, 24
        %v3804 = vpop.permute.xlu0 %3803
        %vm3821 = vcmask 220352
        %3822 = vst.msk [vmem:[#allocation3] sm:$0xff] %vm3821, %v3774
        %3823 = vst.msk [vmem:[#allocation3 + $0x8] sm:$0xff] %vm3821, %v3776
        %3824 = vst.msk [vmem:[#allocation3 + $0x10] sm:$0xff] %vm3821, %v3778
        %3825 = vst.msk [vmem:[#allocation3 + $0x18] sm:$0xff] %vm3821, %v3780
        %3826 = vst.msk [vmem:[#allocation3 + $0x20] sm:$0xff] %vm3821, %v3782
        %3827 = vst.msk [vmem:[#allocation3 + $0x28] sm:$0xff] %vm3821, %v3784
        %3828 = vst.msk [vmem:[#allocation3 + $0x30] sm:$0xff] %vm3821, %v3786
        %3829 = vst.msk [vmem:[#allocation3 + $0x38] sm:$0xff] %vm3821, %v3788
        %3830 = vst.msk [vmem:[#allocation3 + $0x40] sm:$0xff] %vm3821, %v3790
        %3831 = vst.msk [vmem:[#allocation3 + $0x48] sm:$0xff] %vm3821, %v3792
        %3832 = vst.msk [vmem:[#allocation3 + $0x50] sm:$0xff] %vm3821, %v3794
        %3833 = vst.msk [vmem:[#allocation3 + $0x58] sm:$0xff] %vm3821, %v3796
        %3834 = vst.msk [vmem:[#allocation3 + $0x60] sm:$0xff] %vm3821, %v3798
        %3835 = vst.msk [vmem:[#allocation3 + $0x68] sm:$0xff] %vm3821, %v3800
        %3836 = vst.msk [vmem:[#allocation3 + $0x70] sm:$0xff] %vm3821, %v3802
        %3837 = vst.msk [vmem:[#allocation3 + $0x78] sm:$0xff] %vm3821, %v3804
        %v3838 = vld [vmem:[#allocation3] sm:$0xff]
        %v3839 = vld [vmem:[#allocation3 + $0x8] sm:$0xff]
        %v3840 = vld [vmem:[#allocation3 + $0x10] sm:$0xff]
        %v3841 = vld [vmem:[#allocation3 + $0x18] sm:$0xff]
        %v3842 = vld [vmem:[#allocation3 + $0x20] sm:$0xff]
        %v3843 = vld [vmem:[#allocation3 + $0x28] sm:$0xff]
        %v3844 = vld [vmem:[#allocation3 + $0x30] sm:$0xff]
        %v3845 = vld [vmem:[#allocation3 + $0x38] sm:$0xff]
        %v3846 = vld [vmem:[#allocation3 + $0x40] sm:$0xff]
        %v3847 = vld [vmem:[#allocation3 + $0x48] sm:$0xff]
        %v3848 = vld [vmem:[#allocation3 + $0x50] sm:$0xff]
        %v3849 = vld [vmem:[#allocation3 + $0x58] sm:$0xff]
        %v3850 = vld [vmem:[#allocation3 + $0x60] sm:$0xff]
        %v3851 = vld [vmem:[#allocation3 + $0x68] sm:$0xff]
        %v3852 = vld [vmem:[#allocation3 + $0x70] sm:$0xff]
        %v3853 = vld [vmem:[#allocation3 + $0x78] sm:$0xff]
        %v3854 = vld [vmem:[%s1] sm:$0xf]
        %v3855 = vld [vmem:[%s1 + $0x4] sm:$0xf]
        %v3856 = vld [vmem:[%s1 + $0x8] sm:$0xf]
        %v3857 = vld [vmem:[%s1 + $0xc] sm:$0x3]
        %v3862 = vunpack.c.l.b16 %v3854
        %v3863 = vunpack.c.l.b16 %v3855
        %v3864 = vunpack.c.l.b16 %v3856
        %v3865 = vunpack.c.l.b16 %v3857
        %v3866 = vpack.c.b16 %v3863, %v3862
        %v3867 = vpack.c.b16 %v3865, %v3864
        %vm3869 = vcmask 220160
        %v3871 = vsel %vm3869, %v3838, 0
        %v3874 = vsel %vm3869, %v3839, 0
        %v3877 = vsel %vm3869, %v3840, 0
        %v3880 = vsel %vm3869, %v3841, 0
        %v3883 = vsel %vm3869, %v3842, 0
        %v3886 = vsel %vm3869, %v3843, 0
        %v3889 = vsel %vm3869, %v3844, 0
        %v3892 = vsel %vm3869, %v3845, 0
        %v3895 = vsel %vm3869, %v3846, 0
        %v3898 = vsel %vm3869, %v3847, 0
        %v3901 = vsel %vm3869, %v3848, 0
        %v3904 = vsel %vm3869, %v3849, 0
        %v3907 = vsel %vm3869, %v3850, 0
        %v3910 = vsel %vm3869, %v3851, 0
        %v3913 = vsel %vm3869, %v3852, 0
        %v3916 = vsel %vm3869, %v3853, 0
        %vm3918 = vcmask 1044480
        %vm3919 = vcmask 1045504
        %v3920 = vsel %vm3918, 4294967295, 65535
        %v3921 = vsel %vm3919, %v3920, 0
        %v3923 = vand.u32 %v3867, %v3921
        %3925 = vmatprep.subr.bf16.mxu0 0
        %3926 = vmatpush1.bf16.msra.mxu0 %v3866
        %3927 = vmatprep.subr.bf16.mxu0 0
        %3928 = vmatpush1.bf16.msra.mxu0 %v3923
        %3929 = vmatprep.subr.bf16.mxu0 0
        %3930 = vmatpush1.bf16.msra.mxu0 0
        %3931 = vmatprep.subr.bf16.mxu0 0
        %3932 = vmatpush1.bf16.msra.mxu0 0
        %3933 = vmatprep.subr.bf16.mxu0 0
        %3934 = vmatpush1.bf16.msra.mxu0 0
        %3935 = vmatprep.subr.bf16.mxu0 0
        %3936 = vmatpush1.bf16.msra.mxu0 0
        %3937 = vmatprep.subr.bf16.mxu0 0
        %3938 = vmatpush1.bf16.msra.mxu0 0
        %3939 = vmatprep.subr.bf16.mxu0 0
        %3940 = vmatpush1.bf16.msra.mxu0 0
        %3941 = vmatprep.subr.bf16.mxu0 0
        %3942 = vmatpush1.bf16.msra.mxu0 0
        %3943 = vmatprep.subr.bf16.mxu0 0
        %3944 = vmatpush1.bf16.msra.mxu0 0
        %3945 = vmatprep.subr.bf16.mxu0 0
        %3946 = vmatpush1.bf16.msra.mxu0 0
        %3947 = vmatprep.subr.bf16.mxu0 0
        %3948 = vmatpush1.bf16.msra.mxu0 0
        %3949 = vmatprep.subr.bf16.mxu0 0
        %3950 = vmatpush1.bf16.msra.mxu0 0
        %3951 = vmatprep.subr.bf16.mxu0 0
        %3952 = vmatpush1.bf16.msra.mxu0 0
        %3953 = vmatprep.subr.bf16.mxu0 0
        %3954 = vmatpush1.bf16.msra.mxu0 0
        %3955 = vmatprep.subr.bf16.mxu0 0
        %3956 = vmatpush1.bf16.msra.mxu0 0
        %3957 = vmatprep.mubr.bf16.mxu0 0
        %3958 = vmatmul.mubr.bf16.gmra.mrb[0].mxu0 %v3871
        %v3959 = vpop.f32.mrb[0].mxu0
        %v3960 = vadd.f32 0.0, %v3959
        %v3961 = vpop.f32.mrb[0].mxu0
        %v3962 = vpop.f32.mrb[0].mxu0
        %v3963 = vadd.f32 0.0, %v3962
        %v3964 = vpop.f32.mrb[0].mxu0
        %3965 = vmatprep.mubr.bf16.mxu0 0
        %3966 = vmatmul.mubr.bf16.gmra.mrb[0].mxu0 %v3874
        %v3967 = vpop.f32.mrb[0].mxu0
        %v3968 = vadd.f32 0.0, %v3967
        %v3969 = vpop.f32.mrb[0].mxu0
        %v3970 = vpop.f32.mrb[0].mxu0
        %v3971 = vadd.f32 0.0, %v3970
        %v3972 = vpop.f32.mrb[0].mxu0
        %3973 = vmatprep.mubr.bf16.mxu0 0
        %3974 = vmatmul.mubr.bf16.gmra.mrb[0].mxu0 %v3877
        %v3975 = vpop.f32.mrb[0].mxu0
        %v3976 = vadd.f32 0.0, %v3975
        %v3977 = vpop.f32.mrb[0].mxu0
        %v3978 = vpop.f32.mrb[0].mxu0
        %v3979 = vadd.f32 0.0, %v3978
        %v3980 = vpop.f32.mrb[0].mxu0
        %3981 = vmatprep.mubr.bf16.mxu0 0
        %3982 = vmatmul.mubr.bf16.gmra.mrb[0].mxu0 %v3880
        %v3983 = vpop.f32.mrb[0].mxu0
        %v3984 = vadd.f32 0.0, %v3983
        %v3985 = vpop.f32.mrb[0].mxu0
        %v3986 = vpop.f32.mrb[0].mxu0
        %v3987 = vadd.f32 0.0, %v3986
        %v3988 = vpop.f32.mrb[0].mxu0
        %3989 = vmatprep.mubr.bf16.mxu0 0
        %3990 = vmatmul.mubr.bf16.gmra.mrb[0].mxu0 %v3883
        %v3991 = vpop.f32.mrb[0].mxu0
        %v3992 = vadd.f32 0.0, %v3991
        %v3993 = vpop.f32.mrb[0].mxu0
        %v3994 = vpop.f32.mrb[0].mxu0
        %v3995 = vadd.f32 0.0, %v3994
        %v3996 = vpop.f32.mrb[0].mxu0
        %3997 = vmatprep.mubr.bf16.mxu0 0
        %3998 = vmatmul.mubr.bf16.gmra.mrb[0].mxu0 %v3886
        %v3999 = vpop.f32.mrb[0].mxu0
        %v4000 = vadd.f32 0.0, %v3999
        %v4001 = vpop.f32.mrb[0].mxu0
        %v4002 = vpop.f32.mrb[0].mxu0
        %v4003 = vadd.f32 0.0, %v4002
        %v4004 = vpop.f32.mrb[0].mxu0
        %4005 = vmatprep.mubr.bf16.mxu0 0
        %4006 = vmatmul.mubr.bf16.gmra.mrb[0].mxu0 %v3889
        %v4007 = vpop.f32.mrb[0].mxu0
        %v4008 = vadd.f32 0.0, %v4007
        %v4009 = vpop.f32.mrb[0].mxu0
        %v4010 = vpop.f32.mrb[0].mxu0
        %v4011 = vadd.f32 0.0, %v4010
        %v4012 = vpop.f32.mrb[0].mxu0
        %4013 = vmatprep.mubr.bf16.mxu0 0
        %4014 = vmatmul.mubr.bf16.gmra.mrb[0].mxu0 %v3892
        %v4015 = vpop.f32.mrb[0].mxu0
        %v4016 = vadd.f32 0.0, %v4015
        %v4017 = vpop.f32.mrb[0].mxu0
        %v4018 = vpop.f32.mrb[0].mxu0
        %v4019 = vadd.f32 0.0, %v4018
        %v4020 = vpop.f32.mrb[0].mxu0
        %4021 = vmatprep.mubr.bf16.mxu0 0
        %4022 = vmatmul.mubr.bf16.gmra.mrb[0].mxu0 %v3895
        %v4023 = vpop.f32.mrb[0].mxu0
        %v4024 = vadd.f32 0.0, %v4023
        %v4025 = vpop.f32.mrb[0].mxu0
        %v4026 = vpop.f32.mrb[0].mxu0
        %v4027 = vadd.f32 0.0, %v4026
        %v4028 = vpop.f32.mrb[0].mxu0
        %4029 = vmatprep.mubr.bf16.mxu0 0
        %4030 = vmatmul.mubr.bf16.gmra.mrb[0].mxu0 %v3898
        %v4031 = vpop.f32.mrb[0].mxu0
        %v4032 = vadd.f32 0.0, %v4031
        %v4033 = vpop.f32.mrb[0].mxu0
        %v4034 = vpop.f32.mrb[0].mxu0
        %v4035 = vadd.f32 0.0, %v4034
        %v4036 = vpop.f32.mrb[0].mxu0
        %4037 = vmatprep.mubr.bf16.mxu0 0
        %4038 = vmatmul.mubr.bf16.gmra.mrb[0].mxu0 %v3901
        %v4039 = vpop.f32.mrb[0].mxu0
        %v4040 = vadd.f32 0.0, %v4039
        %v4041 = vpop.f32.mrb[0].mxu0
        %v4042 = vpop.f32.mrb[0].mxu0
        %v4043 = vadd.f32 0.0, %v4042
        %v4044 = vpop.f32.mrb[0].mxu0
        %4045 = vmatprep.mubr.bf16.mxu0 0
        %4046 = vmatmul.mubr.bf16.gmra.mrb[0].mxu0 %v3904
        %v4047 = vpop.f32.mrb[0].mxu0
        %v4048 = vadd.f32 0.0, %v4047
        %v4049 = vpop.f32.mrb[0].mxu0
        %v4050 = vpop.f32.mrb[0].mxu0
        %v4051 = vadd.f32 0.0, %v4050
        %v4052 = vpop.f32.mrb[0].mxu0
        %4053 = vmatprep.mubr.bf16.mxu0 0
        %4054 = vmatmul.mubr.bf16.gmra.mrb[0].mxu0 %v3907
        %v4055 = vpop.f32.mrb[0].mxu0
        %v4056 = vadd.f32 0.0, %v4055
        %v4057 = vpop.f32.mrb[0].mxu0
        %v4058 = vpop.f32.mrb[0].mxu0
        %v4059 = vadd.f32 0.0, %v4058
        %v4060 = vpop.f32.mrb[0].mxu0
        %4061 = vmatprep.mubr.bf16.mxu0 0
        %4062 = vmatmul.mubr.bf16.gmra.mrb[0].mxu0 %v3910
        %v4063 = vpop.f32.mrb[0].mxu0
        %v4064 = vadd.f32 0.0, %v4063
        %v4065 = vpop.f32.mrb[0].mxu0
        %v4066 = vpop.f32.mrb[0].mxu0
        %v4067 = vadd.f32 0.0, %v4066
        %v4068 = vpop.f32.mrb[0].mxu0
        %4069 = vmatprep.mubr.bf16.mxu0 0
        %4070 = vmatmul.mubr.bf16.gmra.mrb[0].mxu0 %v3913
        %v4071 = vpop.f32.mrb[0].mxu0
        %v4072 = vadd.f32 0.0, %v4071
        %v4073 = vpop.f32.mrb[0].mxu0
        %v4074 = vpop.f32.mrb[0].mxu0
        %v4075 = vadd.f32 0.0, %v4074
        %v4076 = vpop.f32.mrb[0].mxu0
        %4077 = vmatprep.mubr.bf16.mxu0 0
        %4078 = vmatmul.mubr.bf16.gmra.mrb[0].mxu0 %v3916
        %v4079 = vpop.f32.mrb[0].mxu0
        %v4080 = vadd.f32 0.0, %v4079
        %v4081 = vpop.f32.mrb[0].mxu0
        %v4082 = vpop.f32.mrb[0].mxu0
        %v4083 = vadd.f32 0.0, %v4082
        %v4084 = vpop.f32.mrb[0].mxu0
        %4085 = vdwg.mxu0
        %v4086 = vmax.f32 %v3960, 0.0
        %v4087 = vmax.f32 %v3963, 0.0
        %v4088 = vmax.f32 %v3968, 0.0
        %v4089 = vmax.f32 %v3971, 0.0
        %v4090 = vmax.f32 %v3976, 0.0
        %v4091 = vmax.f32 %v3979, 0.0
        %v4092 = vmax.f32 %v3984, 0.0
        %v4093 = vmax.f32 %v3987, 0.0
        %v4094 = vmax.f32 %v3992, 0.0
        %v4095 = vmax.f32 %v3995, 0.0
        %v4096 = vmax.f32 %v4000, 0.0
        %v4097 = vmax.f32 %v4003, 0.0
        %v4098 = vmax.f32 %v4008, 0.0
        %v4099 = vmax.f32 %v4011, 0.0
        %v4100 = vmax.f32 %v4016, 0.0
        %v4101 = vmax.f32 %v4019, 0.0
        %v4102 = vmax.f32 %v4024, 0.0
        %v4103 = vmax.f32 %v4027, 0.0
        %v4104 = vmax.f32 %v4032, 0.0
        %v4105 = vmax.f32 %v4035, 0.0
        %v4106 = vmax.f32 %v4040, 0.0
        %v4107 = vmax.f32 %v4043, 0.0
        %v4108 = vmax.f32 %v4048, 0.0
        %v4109 = vmax.f32 %v4051, 0.0
        %v4110 = vmax.f32 %v4056, 0.0
        %v4111 = vmax.f32 %v4059, 0.0
        %v4112 = vmax.f32 %v4064, 0.0
        %v4113 = vmax.f32 %v4067, 0.0
        %v4114 = vmax.f32 %v4072, 0.0
        %v4115 = vmax.f32 %v4075, 0.0
        %v4116 = vmax.f32 %v4080, 0.0
        %v4117 = vmax.f32 %v4083, 0.0
        %v4150 = vcombine.high %v4086, %v4086
        %v4152 = vunpack.c.l.s4 1983009808
        %v4153 = vunpack.c.0.s8 %v4152
        %v4154 = vlaneseq
        %v4155 = vshrl.u32 %v4154, 7
        %v4156 = vsub.s32 %v4153, %v4155
        %v4157 = vrot.slane %v4086, %v4156
        %v4159 = vunpack.c.l.s4 1983009808
        %v4160 = vunpack.c.0.s8 %v4159
        %v4161 = vlaneseq
        %v4162 = vshrl.u32 %v4161, 7
        %v4163 = vsub.s32 %v4160, %v4162
        %v4164 = vrot.slane %v4150, %v4163
        %v4165 = vcombine.high %v4157, %v4157
        %v4166 = vcombine.high %v4164, %v4164
        %v4167 = vcombine.high %v4087, %v4087
        %v4169 = vunpack.c.l.s4 1983009808
        %v4170 = vunpack.c.0.s8 %v4169
        %v4171 = vlaneseq
        %v4172 = vshrl.u32 %v4171, 7
        %v4173 = vsub.s32 %v4170, %v4172
        %v4174 = vrot.slane %v4087, %v4173
        %v4176 = vunpack.c.l.s4 1983009808
        %v4177 = vunpack.c.0.s8 %v4176
        %v4178 = vlaneseq
        %v4179 = vshrl.u32 %v4178, 7
        %v4180 = vsub.s32 %v4177, %v4179
        %v4181 = vrot.slane %v4167, %v4180
        %v4182 = vcombine.high %v4174, %v4174
        %v4183 = vcombine.high %v4181, %v4181
        %v4184 = vcombine.high %v4088, %v4088
        %v4186 = vunpack.c.l.s4 1983009808
        %v4187 = vunpack.c.0.s8 %v4186
        %v4188 = vlaneseq
        %v4189 = vshrl.u32 %v4188, 7
        %v4190 = vsub.s32 %v4187, %v4189
        %v4191 = vrot.slane %v4088, %v4190
        %v4193 = vunpack.c.l.s4 1983009808
        %v4194 = vunpack.c.0.s8 %v4193
        %v4195 = vlaneseq
        %v4196 = vshrl.u32 %v4195, 7
        %v4197 = vsub.s32 %v4194, %v4196
        %v4198 = vrot.slane %v4184, %v4197
        %v4199 = vcombine.high %v4191, %v4191
        %v4200 = vcombine.high %v4198, %v4198
        %v4201 = vcombine.high %v4089, %v4089
        %v4203 = vunpack.c.l.s4 1983009808
        %v4204 = vunpack.c.0.s8 %v4203
        %v4205 = vlaneseq
        %v4206 = vshrl.u32 %v4205, 7
        %v4207 = vsub.s32 %v4204, %v4206
        %v4208 = vrot.slane %v4089, %v4207
        %v4210 = vunpack.c.l.s4 1983009808
        %v4211 = vunpack.c.0.s8 %v4210
        %v4212 = vlaneseq
        %v4213 = vshrl.u32 %v4212, 7
        %v4214 = vsub.s32 %v4211, %v4213
        %v4215 = vrot.slane %v4201, %v4214
        %v4216 = vcombine.high %v4208, %v4208
        %v4217 = vcombine.high %v4215, %v4215
        %v4218 = vcombine.high %v4090, %v4090
        %v4220 = vunpack.c.l.s4 1983009808
        %v4221 = vunpack.c.0.s8 %v4220
        %v4222 = vlaneseq
        %v4223 = vshrl.u32 %v4222, 7
        %v4224 = vsub.s32 %v4221, %v4223
        %v4225 = vrot.slane %v4090, %v4224
        %v4227 = vunpack.c.l.s4 1983009808
        %v4228 = vunpack.c.0.s8 %v4227
        %v4229 = vlaneseq
        %v4230 = vshrl.u32 %v4229, 7
        %v4231 = vsub.s32 %v4228, %v4230
        %v4232 = vrot.slane %v4218, %v4231
        %v4233 = vcombine.high %v4225, %v4225
        %v4234 = vcombine.high %v4232, %v4232
        %v4235 = vcombine.high %v4091, %v4091
        %v4237 = vunpack.c.l.s4 1983009808
        %v4238 = vunpack.c.0.s8 %v4237
        %v4239 = vlaneseq
        %v4240 = vshrl.u32 %v4239, 7
        %v4241 = vsub.s32 %v4238, %v4240
        %v4242 = vrot.slane %v4091, %v4241
        %v4244 = vunpack.c.l.s4 1983009808
        %v4245 = vunpack.c.0.s8 %v4244
        %v4246 = vlaneseq
        %v4247 = vshrl.u32 %v4246, 7
        %v4248 = vsub.s32 %v4245, %v4247
        %v4249 = vrot.slane %v4235, %v4248
        %v4250 = vcombine.high %v4242, %v4242
        %v4251 = vcombine.high %v4249, %v4249
        %v4252 = vcombine.high %v4092, %v4092
        %v4254 = vunpack.c.l.s4 1983009808
        %v4255 = vunpack.c.0.s8 %v4254
        %v4256 = vlaneseq
        %v4257 = vshrl.u32 %v4256, 7
        %v4258 = vsub.s32 %v4255, %v4257
        %v4259 = vrot.slane %v4092, %v4258
        %v4261 = vunpack.c.l.s4 1983009808
        %v4262 = vunpack.c.0.s8 %v4261
        %v4263 = vlaneseq
        %v4264 = vshrl.u32 %v4263, 7
        %v4265 = vsub.s32 %v4262, %v4264
        %v4266 = vrot.slane %v4252, %v4265
        %v4267 = vcombine.high %v4259, %v4259
        %v4268 = vcombine.high %v4266, %v4266
        %v4269 = vcombine.high %v4093, %v4093
        %v4271 = vunpack.c.l.s4 1983009808
        %v4272 = vunpack.c.0.s8 %v4271
        %v4273 = vlaneseq
        %v4274 = vshrl.u32 %v4273, 7
        %v4275 = vsub.s32 %v4272, %v4274
        %v4276 = vrot.slane %v4093, %v4275
        %v4278 = vunpack.c.l.s4 1983009808
        %v4279 = vunpack.c.0.s8 %v4278
        %v4280 = vlaneseq
        %v4281 = vshrl.u32 %v4280, 7
        %v4282 = vsub.s32 %v4279, %v4281
        %v4283 = vrot.slane %v4269, %v4282
        %v4284 = vcombine.high %v4276, %v4276
        %v4285 = vcombine.high %v4283, %v4283
        %v4286 = vcombine.high %v4094, %v4094
        %v4288 = vunpack.c.l.s4 1983009808
        %v4289 = vunpack.c.0.s8 %v4288
        %v4290 = vlaneseq
        %v4291 = vshrl.u32 %v4290, 7
        %v4292 = vsub.s32 %v4289, %v4291
        %v4293 = vrot.slane %v4094, %v4292
        %v4295 = vunpack.c.l.s4 1983009808
        %v4296 = vunpack.c.0.s8 %v4295
        %v4297 = vlaneseq
        %v4298 = vshrl.u32 %v4297, 7
        %v4299 = vsub.s32 %v4296, %v4298
        %v4300 = vrot.slane %v4286, %v4299
        %v4301 = vcombine.high %v4293, %v4293
        %v4302 = vcombine.high %v4300, %v4300
        %v4303 = vcombine.high %v4095, %v4095
        %v4305 = vunpack.c.l.s4 1983009808
        %v4306 = vunpack.c.0.s8 %v4305
        %v4307 = vlaneseq
        %v4308 = vshrl.u32 %v4307, 7
        %v4309 = vsub.s32 %v4306, %v4308
        %v4310 = vrot.slane %v4095, %v4309
        %v4312 = vunpack.c.l.s4 1983009808
        %v4313 = vunpack.c.0.s8 %v4312
        %v4314 = vlaneseq
        %v4315 = vshrl.u32 %v4314, 7
        %v4316 = vsub.s32 %v4313, %v4315
        %v4317 = vrot.slane %v4303, %v4316
        %v4318 = vcombine.high %v4310, %v4310
        %v4319 = vcombine.high %v4317, %v4317
        %v4320 = vcombine.high %v4096, %v4096
        %v4322 = vunpack.c.l.s4 1983009808
        %v4323 = vunpack.c.0.s8 %v4322
        %v4324 = vlaneseq
        %v4325 = vshrl.u32 %v4324, 7
        %v4326 = vsub.s32 %v4323, %v4325
        %v4327 = vrot.slane %v4096, %v4326
        %v4329 = vunpack.c.l.s4 1983009808
        %v4330 = vunpack.c.0.s8 %v4329
        %v4331 = vlaneseq
        %v4332 = vshrl.u32 %v4331, 7
        %v4333 = vsub.s32 %v4330, %v4332
        %v4334 = vrot.slane %v4320, %v4333
        %v4335 = vcombine.high %v4327, %v4327
        %v4336 = vcombine.high %v4334, %v4334
        %v4337 = vcombine.high %v4097, %v4097
        %v4339 = vunpack.c.l.s4 1983009808
        %v4340 = vunpack.c.0.s8 %v4339
        %v4341 = vlaneseq
        %v4342 = vshrl.u32 %v4341, 7
        %v4343 = vsub.s32 %v4340, %v4342
        %v4344 = vrot.slane %v4097, %v4343
        %v4346 = vunpack.c.l.s4 1983009808
        %v4347 = vunpack.c.0.s8 %v4346
        %v4348 = vlaneseq
        %v4349 = vshrl.u32 %v4348, 7
        %v4350 = vsub.s32 %v4347, %v4349
        %v4351 = vrot.slane %v4337, %v4350
        %v4352 = vcombine.high %v4344, %v4344
        %v4353 = vcombine.high %v4351, %v4351
        %v4354 = vcombine.high %v4098, %v4098
        %v4356 = vunpack.c.l.s4 1983009808
        %v4357 = vunpack.c.0.s8 %v4356
        %v4358 = vlaneseq
        %v4359 = vshrl.u32 %v4358, 7
        %v4360 = vsub.s32 %v4357, %v4359
        %v4361 = vrot.slane %v4098, %v4360
        %v4363 = vunpack.c.l.s4 1983009808
        %v4364 = vunpack.c.0.s8 %v4363
        %v4365 = vlaneseq
        %v4366 = vshrl.u32 %v4365, 7
        %v4367 = vsub.s32 %v4364, %v4366
        %v4368 = vrot.slane %v4354, %v4367
        %v4369 = vcombine.high %v4361, %v4361
        %v4370 = vcombine.high %v4368, %v4368
        %v4371 = vcombine.high %v4099, %v4099
        %v4373 = vunpack.c.l.s4 1983009808
        %v4374 = vunpack.c.0.s8 %v4373
        %v4375 = vlaneseq
        %v4376 = vshrl.u32 %v4375, 7
        %v4377 = vsub.s32 %v4374, %v4376
        %v4378 = vrot.slane %v4099, %v4377
        %v4380 = vunpack.c.l.s4 1983009808
        %v4381 = vunpack.c.0.s8 %v4380
        %v4382 = vlaneseq
        %v4383 = vshrl.u32 %v4382, 7
        %v4384 = vsub.s32 %v4381, %v4383
        %v4385 = vrot.slane %v4371, %v4384
        %v4386 = vcombine.high %v4378, %v4378
        %v4387 = vcombine.high %v4385, %v4385
        %v4388 = vcombine.high %v4100, %v4100
        %v4390 = vunpack.c.l.s4 1983009808
        %v4391 = vunpack.c.0.s8 %v4390
        %v4392 = vlaneseq
        %v4393 = vshrl.u32 %v4392, 7
        %v4394 = vsub.s32 %v4391, %v4393
        %v4395 = vrot.slane %v4100, %v4394
        %v4397 = vunpack.c.l.s4 1983009808
        %v4398 = vunpack.c.0.s8 %v4397
        %v4399 = vlaneseq
        %v4400 = vshrl.u32 %v4399, 7
        %v4401 = vsub.s32 %v4398, %v4400
        %v4402 = vrot.slane %v4388, %v4401
        %v4403 = vcombine.high %v4395, %v4395
        %v4404 = vcombine.high %v4402, %v4402
        %v4405 = vcombine.high %v4101, %v4101
        %v4407 = vunpack.c.l.s4 1983009808
        %v4408 = vunpack.c.0.s8 %v4407
        %v4409 = vlaneseq
        %v4410 = vshrl.u32 %v4409, 7
        %v4411 = vsub.s32 %v4408, %v4410
        %v4412 = vrot.slane %v4101, %v4411
        %v4414 = vunpack.c.l.s4 1983009808
        %v4415 = vunpack.c.0.s8 %v4414
        %v4416 = vlaneseq
        %v4417 = vshrl.u32 %v4416, 7
        %v4418 = vsub.s32 %v4415, %v4417
        %v4419 = vrot.slane %v4405, %v4418
        %v4420 = vcombine.high %v4412, %v4412
        %v4421 = vcombine.high %v4419, %v4419
        %v4422 = vcombine.high %v4102, %v4102
        %v4424 = vunpack.c.l.s4 1983009808
        %v4425 = vunpack.c.0.s8 %v4424
        %v4426 = vlaneseq
        %v4427 = vshrl.u32 %v4426, 7
        %v4428 = vsub.s32 %v4425, %v4427
        %v4429 = vrot.slane %v4102, %v4428
        %v4431 = vunpack.c.l.s4 1983009808
        %v4432 = vunpack.c.0.s8 %v4431
        %v4433 = vlaneseq
        %v4434 = vshrl.u32 %v4433, 7
        %v4435 = vsub.s32 %v4432, %v4434
        %v4436 = vrot.slane %v4422, %v4435
        %v4437 = vcombine.high %v4429, %v4429
        %v4438 = vcombine.high %v4436, %v4436
        %v4439 = vcombine.high %v4103, %v4103
        %v4441 = vunpack.c.l.s4 1983009808
        %v4442 = vunpack.c.0.s8 %v4441
        %v4443 = vlaneseq
        %v4444 = vshrl.u32 %v4443, 7
        %v4445 = vsub.s32 %v4442, %v4444
        %v4446 = vrot.slane %v4103, %v4445
        %v4448 = vunpack.c.l.s4 1983009808
        %v4449 = vunpack.c.0.s8 %v4448
        %v4450 = vlaneseq
        %v4451 = vshrl.u32 %v4450, 7
        %v4452 = vsub.s32 %v4449, %v4451
        %v4453 = vrot.slane %v4439, %v4452
        %v4454 = vcombine.high %v4446, %v4446
        %v4455 = vcombine.high %v4453, %v4453
        %v4456 = vcombine.high %v4104, %v4104
        %v4458 = vunpack.c.l.s4 1983009808
        %v4459 = vunpack.c.0.s8 %v4458
        %v4460 = vlaneseq
        %v4461 = vshrl.u32 %v4460, 7
        %v4462 = vsub.s32 %v4459, %v4461
        %v4463 = vrot.slane %v4104, %v4462
        %v4465 = vunpack.c.l.s4 1983009808
        %v4466 = vunpack.c.0.s8 %v4465
        %v4467 = vlaneseq
        %v4468 = vshrl.u32 %v4467, 7
        %v4469 = vsub.s32 %v4466, %v4468
        %v4470 = vrot.slane %v4456, %v4469
        %v4471 = vcombine.high %v4463, %v4463
        %v4472 = vcombine.high %v4470, %v4470
        %v4473 = vcombine.high %v4105, %v4105
        %v4475 = vunpack.c.l.s4 1983009808
        %v4476 = vunpack.c.0.s8 %v4475
        %v4477 = vlaneseq
        %v4478 = vshrl.u32 %v4477, 7
        %v4479 = vsub.s32 %v4476, %v4478
        %v4480 = vrot.slane %v4105, %v4479
        %v4482 = vunpack.c.l.s4 1983009808
        %v4483 = vunpack.c.0.s8 %v4482
        %v4484 = vlaneseq
        %v4485 = vshrl.u32 %v4484, 7
        %v4486 = vsub.s32 %v4483, %v4485
        %v4487 = vrot.slane %v4473, %v4486
        %v4488 = vcombine.high %v4480, %v4480
        %v4489 = vcombine.high %v4487, %v4487
        %v4490 = vcombine.high %v4106, %v4106
        %v4492 = vunpack.c.l.s4 1983009808
        %v4493 = vunpack.c.0.s8 %v4492
        %v4494 = vlaneseq
        %v4495 = vshrl.u32 %v4494, 7
        %v4496 = vsub.s32 %v4493, %v4495
        %v4497 = vrot.slane %v4106, %v4496
        %v4499 = vunpack.c.l.s4 1983009808
        %v4500 = vunpack.c.0.s8 %v4499
        %v4501 = vlaneseq
        %v4502 = vshrl.u32 %v4501, 7
        %v4503 = vsub.s32 %v4500, %v4502
        %v4504 = vrot.slane %v4490, %v4503
        %v4505 = vcombine.high %v4497, %v4497
        %v4506 = vcombine.high %v4504, %v4504
        %v4507 = vcombine.high %v4107, %v4107
        %v4509 = vunpack.c.l.s4 1983009808
        %v4510 = vunpack.c.0.s8 %v4509
        %v4511 = vlaneseq
        %v4512 = vshrl.u32 %v4511, 7
        %v4513 = vsub.s32 %v4510, %v4512
        %v4514 = vrot.slane %v4107, %v4513
        %v4516 = vunpack.c.l.s4 1983009808
        %v4517 = vunpack.c.0.s8 %v4516
        %v4518 = vlaneseq
        %v4519 = vshrl.u32 %v4518, 7
        %v4520 = vsub.s32 %v4517, %v4519
        %v4521 = vrot.slane %v4507, %v4520
        %v4522 = vcombine.high %v4514, %v4514
        %v4523 = vcombine.high %v4521, %v4521
        %v4524 = vcombine.high %v4108, %v4108
        %v4526 = vunpack.c.l.s4 1983009808
        %v4527 = vunpack.c.0.s8 %v4526
        %v4528 = vlaneseq
        %v4529 = vshrl.u32 %v4528, 7
        %v4530 = vsub.s32 %v4527, %v4529
        %v4531 = vrot.slane %v4108, %v4530
        %v4533 = vunpack.c.l.s4 1983009808
        %v4534 = vunpack.c.0.s8 %v4533
        %v4535 = vlaneseq
        %v4536 = vshrl.u32 %v4535, 7
        %v4537 = vsub.s32 %v4534, %v4536
        %v4538 = vrot.slane %v4524, %v4537
        %v4539 = vcombine.high %v4531, %v4531
        %v4540 = vcombine.high %v4538, %v4538
        %v4541 = vcombine.high %v4109, %v4109
        %v4543 = vunpack.c.l.s4 1983009808
        %v4544 = vunpack.c.0.s8 %v4543
        %v4545 = vlaneseq
        %v4546 = vshrl.u32 %v4545, 7
        %v4547 = vsub.s32 %v4544, %v4546
        %v4548 = vrot.slane %v4109, %v4547
        %v4550 = vunpack.c.l.s4 1983009808
        %v4551 = vunpack.c.0.s8 %v4550
        %v4552 = vlaneseq
        %v4553 = vshrl.u32 %v4552, 7
        %v4554 = vsub.s32 %v4551, %v4553
        %v4555 = vrot.slane %v4541, %v4554
        %v4556 = vcombine.high %v4548, %v4548
        %v4557 = vcombine.high %v4555, %v4555
        %v4558 = vcombine.high %v4110, %v4110
        %v4560 = vunpack.c.l.s4 1983009808
        %v4561 = vunpack.c.0.s8 %v4560
        %v4562 = vlaneseq
        %v4563 = vshrl.u32 %v4562, 7
        %v4564 = vsub.s32 %v4561, %v4563
        %v4565 = vrot.slane %v4110, %v4564
        %v4567 = vunpack.c.l.s4 1983009808
        %v4568 = vunpack.c.0.s8 %v4567
        %v4569 = vlaneseq
        %v4570 = vshrl.u32 %v4569, 7
        %v4571 = vsub.s32 %v4568, %v4570
        %v4572 = vrot.slane %v4558, %v4571
        %v4573 = vcombine.high %v4565, %v4565
        %v4574 = vcombine.high %v4572, %v4572
        %v4575 = vcombine.high %v4111, %v4111
        %v4577 = vunpack.c.l.s4 1983009808
        %v4578 = vunpack.c.0.s8 %v4577
        %v4579 = vlaneseq
        %v4580 = vshrl.u32 %v4579, 7
        %v4581 = vsub.s32 %v4578, %v4580
        %v4582 = vrot.slane %v4111, %v4581
        %v4584 = vunpack.c.l.s4 1983009808
        %v4585 = vunpack.c.0.s8 %v4584
        %v4586 = vlaneseq
        %v4587 = vshrl.u32 %v4586, 7
        %v4588 = vsub.s32 %v4585, %v4587
        %v4589 = vrot.slane %v4575, %v4588
        %v4590 = vcombine.high %v4582, %v4582
        %v4591 = vcombine.high %v4589, %v4589
        %v4592 = vcombine.high %v4112, %v4112
        %v4594 = vunpack.c.l.s4 1983009808
        %v4595 = vunpack.c.0.s8 %v4594
        %v4596 = vlaneseq
        %v4597 = vshrl.u32 %v4596, 7
        %v4598 = vsub.s32 %v4595, %v4597
        %v4599 = vrot.slane %v4112, %v4598
        %v4601 = vunpack.c.l.s4 1983009808
        %v4602 = vunpack.c.0.s8 %v4601
        %v4603 = vlaneseq
        %v4604 = vshrl.u32 %v4603, 7
        %v4605 = vsub.s32 %v4602, %v4604
        %v4606 = vrot.slane %v4592, %v4605
        %v4607 = vcombine.high %v4599, %v4599
        %v4608 = vcombine.high %v4606, %v4606
        %v4609 = vcombine.high %v4113, %v4113
        %v4611 = vunpack.c.l.s4 1983009808
        %v4612 = vunpack.c.0.s8 %v4611
        %v4613 = vlaneseq
        %v4614 = vshrl.u32 %v4613, 7
        %v4615 = vsub.s32 %v4612, %v4614
        %v4616 = vrot.slane %v4113, %v4615
        %v4618 = vunpack.c.l.s4 1983009808
        %v4619 = vunpack.c.0.s8 %v4618
        %v4620 = vlaneseq
        %v4621 = vshrl.u32 %v4620, 7
        %v4622 = vsub.s32 %v4619, %v4621
        %v4623 = vrot.slane %v4609, %v4622
        %v4624 = vcombine.high %v4616, %v4616
        %v4625 = vcombine.high %v4623, %v4623
        %v4626 = vcombine.high %v4114, %v4114
        %v4628 = vunpack.c.l.s4 1983009808
        %v4629 = vunpack.c.0.s8 %v4628
        %v4630 = vlaneseq
        %v4631 = vshrl.u32 %v4630, 7
        %v4632 = vsub.s32 %v4629, %v4631
        %v4633 = vrot.slane %v4114, %v4632
        %v4635 = vunpack.c.l.s4 1983009808
        %v4636 = vunpack.c.0.s8 %v4635
        %v4637 = vlaneseq
        %v4638 = vshrl.u32 %v4637, 7
        %v4639 = vsub.s32 %v4636, %v4638
        %v4640 = vrot.slane %v4626, %v4639
        %v4641 = vcombine.high %v4633, %v4633
        %v4642 = vcombine.high %v4640, %v4640
        %v4643 = vcombine.high %v4115, %v4115
        %v4645 = vunpack.c.l.s4 1983009808
        %v4646 = vunpack.c.0.s8 %v4645
        %v4647 = vlaneseq
        %v4648 = vshrl.u32 %v4647, 7
        %v4649 = vsub.s32 %v4646, %v4648
        %v4650 = vrot.slane %v4115, %v4649
        %v4652 = vunpack.c.l.s4 1983009808
        %v4653 = vunpack.c.0.s8 %v4652
        %v4654 = vlaneseq
        %v4655 = vshrl.u32 %v4654, 7
        %v4656 = vsub.s32 %v4653, %v4655
        %v4657 = vrot.slane %v4643, %v4656
        %v4658 = vcombine.high %v4650, %v4650
        %v4659 = vcombine.high %v4657, %v4657
        %v4660 = vcombine.high %v4116, %v4116
        %v4662 = vunpack.c.l.s4 1983009808
        %v4663 = vunpack.c.0.s8 %v4662
        %v4664 = vlaneseq
        %v4665 = vshrl.u32 %v4664, 7
        %v4666 = vsub.s32 %v4663, %v4665
        %v4667 = vrot.slane %v4116, %v4666
        %v4669 = vunpack.c.l.s4 1983009808
        %v4670 = vunpack.c.0.s8 %v4669
        %v4671 = vlaneseq
        %v4672 = vshrl.u32 %v4671, 7
        %v4673 = vsub.s32 %v4670, %v4672
        %v4674 = vrot.slane %v4660, %v4673
        %v4675 = vcombine.high %v4667, %v4667
        %v4676 = vcombine.high %v4674, %v4674
        %v4677 = vcombine.high %v4117, %v4117
        %v4679 = vunpack.c.l.s4 1983009808
        %v4680 = vunpack.c.0.s8 %v4679
        %v4681 = vlaneseq
        %v4682 = vshrl.u32 %v4681, 7
        %v4683 = vsub.s32 %v4680, %v4682
        %v4684 = vrot.slane %v4117, %v4683
        %v4686 = vunpack.c.l.s4 1983009808
        %v4687 = vunpack.c.0.s8 %v4686
        %v4688 = vlaneseq
        %v4689 = vshrl.u32 %v4688, 7
        %v4690 = vsub.s32 %v4687, %v4689
        %v4691 = vrot.slane %v4677, %v4690
        %v4692 = vcombine.high %v4684, %v4684
        %v4693 = vcombine.high %v4691, %v4691
        %vm4822 = vcmask 254976
        %v4823 = vsel %vm4822, %v4157, -inf
        %v4824 = vrot.slane %v4823, 4
        %v4825 = vmax.f32 %v4823, %v4824
        %v4826 = vrot.slane %v4825, 2
        %v4827 = vmax.f32 %v4825, %v4826
        %v4828 = vrot.slane %v4827, 1
        %v4829 = vmax.f32 %v4827, %v4828
        %v4830 = vsel %vm4822, %v4165, -inf
        %v4831 = vrot.slane %v4830, 4
        %v4832 = vmax.f32 %v4830, %v4831
        %v4833 = vrot.slane %v4832, 2
        %v4834 = vmax.f32 %v4832, %v4833
        %v4835 = vrot.slane %v4834, 1
        %v4836 = vmax.f32 %v4834, %v4835
        %v4837 = vsel %vm4822, %v4164, -inf
        %v4838 = vrot.slane %v4837, 4
        %v4839 = vmax.f32 %v4837, %v4838
        %v4840 = vrot.slane %v4839, 2
        %v4841 = vmax.f32 %v4839, %v4840
        %v4842 = vrot.slane %v4841, 1
        %v4843 = vmax.f32 %v4841, %v4842
        %v4844 = vsel %vm4822, %v4166, -inf
        %v4845 = vrot.slane %v4844, 4
        %v4846 = vmax.f32 %v4844, %v4845
        %v4847 = vrot.slane %v4846, 2
        %v4848 = vmax.f32 %v4846, %v4847
        %v4849 = vrot.slane %v4848, 1
        %v4850 = vmax.f32 %v4848, %v4849
        %v4851 = vsel %vm4822, %v4174, -inf
        %v4852 = vrot.slane %v4851, 4
        %v4853 = vmax.f32 %v4851, %v4852
        %v4854 = vrot.slane %v4853, 2
        %v4855 = vmax.f32 %v4853, %v4854
        %v4856 = vrot.slane %v4855, 1
        %v4857 = vmax.f32 %v4855, %v4856
        %v4858 = vsel %vm4822, %v4182, -inf
        %v4859 = vrot.slane %v4858, 4
        %v4860 = vmax.f32 %v4858, %v4859
        %v4861 = vrot.slane %v4860, 2
        %v4862 = vmax.f32 %v4860, %v4861
        %v4863 = vrot.slane %v4862, 1
        %v4864 = vmax.f32 %v4862, %v4863
        %v4865 = vsel %vm4822, %v4181, -inf
        %v4866 = vrot.slane %v4865, 4
        %v4867 = vmax.f32 %v4865, %v4866
        %v4868 = vrot.slane %v4867, 2
        %v4869 = vmax.f32 %v4867, %v4868
        %v4870 = vrot.slane %v4869, 1
        %v4871 = vmax.f32 %v4869, %v4870
        %v4872 = vsel %vm4822, %v4183, -inf
        %v4873 = vrot.slane %v4872, 4
        %v4874 = vmax.f32 %v4872, %v4873
        %v4875 = vrot.slane %v4874, 2
        %v4876 = vmax.f32 %v4874, %v4875
        %v4877 = vrot.slane %v4876, 1
        %v4878 = vmax.f32 %v4876, %v4877
        %v4879 = vsel %vm4822, %v4191, -inf
        %v4880 = vrot.slane %v4879, 4
        %v4881 = vmax.f32 %v4879, %v4880
        %v4882 = vrot.slane %v4881, 2
        %v4883 = vmax.f32 %v4881, %v4882
        %v4884 = vrot.slane %v4883, 1
        %v4885 = vmax.f32 %v4883, %v4884
        %v4886 = vsel %vm4822, %v4199, -inf
        %v4887 = vrot.slane %v4886, 4
        %v4888 = vmax.f32 %v4886, %v4887
        %v4889 = vrot.slane %v4888, 2
        %v4890 = vmax.f32 %v4888, %v4889
        %v4891 = vrot.slane %v4890, 1
        %v4892 = vmax.f32 %v4890, %v4891
        %v4893 = vsel %vm4822, %v4198, -inf
        %v4894 = vrot.slane %v4893, 4
        %v4895 = vmax.f32 %v4893, %v4894
        %v4896 = vrot.slane %v4895, 2
        %v4897 = vmax.f32 %v4895, %v4896
        %v4898 = vrot.slane %v4897, 1
        %v4899 = vmax.f32 %v4897, %v4898
        %v4900 = vsel %vm4822, %v4200, -inf
        %v4901 = vrot.slane %v4900, 4
        %v4902 = vmax.f32 %v4900, %v4901
        %v4903 = vrot.slane %v4902, 2
        %v4904 = vmax.f32 %v4902, %v4903
        %v4905 = vrot.slane %v4904, 1
        %v4906 = vmax.f32 %v4904, %v4905
        %v4907 = vsel %vm4822, %v4208, -inf
        %v4908 = vrot.slane %v4907, 4
        %v4909 = vmax.f32 %v4907, %v4908
        %v4910 = vrot.slane %v4909, 2
        %v4911 = vmax.f32 %v4909, %v4910
        %v4912 = vrot.slane %v4911, 1
        %v4913 = vmax.f32 %v4911, %v4912
        %v4914 = vsel %vm4822, %v4216, -inf
        %v4915 = vrot.slane %v4914, 4
        %v4916 = vmax.f32 %v4914, %v4915
        %v4917 = vrot.slane %v4916, 2
        %v4918 = vmax.f32 %v4916, %v4917
        %v4919 = vrot.slane %v4918, 1
        %v4920 = vmax.f32 %v4918, %v4919
        %v4921 = vsel %vm4822, %v4215, -inf
        %v4922 = vrot.slane %v4921, 4
        %v4923 = vmax.f32 %v4921, %v4922
        %v4924 = vrot.slane %v4923, 2
        %v4925 = vmax.f32 %v4923, %v4924
        %v4926 = vrot.slane %v4925, 1
        %v4927 = vmax.f32 %v4925, %v4926
        %v4928 = vsel %vm4822, %v4217, -inf
        %v4929 = vrot.slane %v4928, 4
        %v4930 = vmax.f32 %v4928, %v4929
        %v4931 = vrot.slane %v4930, 2
        %v4932 = vmax.f32 %v4930, %v4931
        %v4933 = vrot.slane %v4932, 1
        %v4934 = vmax.f32 %v4932, %v4933
        %v4935 = vsel %vm4822, %v4225, -inf
        %v4936 = vrot.slane %v4935, 4
        %v4937 = vmax.f32 %v4935, %v4936
        %v4938 = vrot.slane %v4937, 2
        %v4939 = vmax.f32 %v4937, %v4938
        %v4940 = vrot.slane %v4939, 1
        %v4941 = vmax.f32 %v4939, %v4940
        %v4942 = vsel %vm4822, %v4233, -inf
        %v4943 = vrot.slane %v4942, 4
        %v4944 = vmax.f32 %v4942, %v4943
        %v4945 = vrot.slane %v4944, 2
        %v4946 = vmax.f32 %v4944, %v4945
        %v4947 = vrot.slane %v4946, 1
        %v4948 = vmax.f32 %v4946, %v4947
        %v4949 = vsel %vm4822, %v4232, -inf
        %v4950 = vrot.slane %v4949, 4
        %v4951 = vmax.f32 %v4949, %v4950
        %v4952 = vrot.slane %v4951, 2
        %v4953 = vmax.f32 %v4951, %v4952
        %v4954 = vrot.slane %v4953, 1
        %v4955 = vmax.f32 %v4953, %v4954
        %v4956 = vsel %vm4822, %v4234, -inf
        %v4957 = vrot.slane %v4956, 4
        %v4958 = vmax.f32 %v4956, %v4957
        %v4959 = vrot.slane %v4958, 2
        %v4960 = vmax.f32 %v4958, %v4959
        %v4961 = vrot.slane %v4960, 1
        %v4962 = vmax.f32 %v4960, %v4961
        %v4963 = vsel %vm4822, %v4242, -inf
        %v4964 = vrot.slane %v4963, 4
        %v4965 = vmax.f32 %v4963, %v4964
        %v4966 = vrot.slane %v4965, 2
        %v4967 = vmax.f32 %v4965, %v4966
        %v4968 = vrot.slane %v4967, 1
        %v4969 = vmax.f32 %v4967, %v4968
        %v4970 = vsel %vm4822, %v4250, -inf
        %v4971 = vrot.slane %v4970, 4
        %v4972 = vmax.f32 %v4970, %v4971
        %v4973 = vrot.slane %v4972, 2
        %v4974 = vmax.f32 %v4972, %v4973
        %v4975 = vrot.slane %v4974, 1
        %v4976 = vmax.f32 %v4974, %v4975
        %v4977 = vsel %vm4822, %v4249, -inf
        %v4978 = vrot.slane %v4977, 4
        %v4979 = vmax.f32 %v4977, %v4978
        %v4980 = vrot.slane %v4979, 2
        %v4981 = vmax.f32 %v4979, %v4980
        %v4982 = vrot.slane %v4981, 1
        %v4983 = vmax.f32 %v4981, %v4982
        %v4984 = vsel %vm4822, %v4251, -inf
        %v4985 = vrot.slane %v4984, 4
        %v4986 = vmax.f32 %v4984, %v4985
        %v4987 = vrot.slane %v4986, 2
        %v4988 = vmax.f32 %v4986, %v4987
        %v4989 = vrot.slane %v4988, 1
        %v4990 = vmax.f32 %v4988, %v4989
        %v4991 = vsel %vm4822, %v4259, -inf
        %v4992 = vrot.slane %v4991, 4
        %v4993 = vmax.f32 %v4991, %v4992
        %v4994 = vrot.slane %v4993, 2
        %v4995 = vmax.f32 %v4993, %v4994
        %v4996 = vrot.slane %v4995, 1
        %v4997 = vmax.f32 %v4995, %v4996
        %v4998 = vsel %vm4822, %v4267, -inf
        %v4999 = vrot.slane %v4998, 4
        %v5000 = vmax.f32 %v4998, %v4999
        %v5001 = vrot.slane %v5000, 2
        %v5002 = vmax.f32 %v5000, %v5001
        %v5003 = vrot.slane %v5002, 1
        %v5004 = vmax.f32 %v5002, %v5003
        %v5005 = vsel %vm4822, %v4266, -inf
        %v5006 = vrot.slane %v5005, 4
        %v5007 = vmax.f32 %v5005, %v5006
        %v5008 = vrot.slane %v5007, 2
        %v5009 = vmax.f32 %v5007, %v5008
        %v5010 = vrot.slane %v5009, 1
        %v5011 = vmax.f32 %v5009, %v5010
        %v5012 = vsel %vm4822, %v4268, -inf
        %v5013 = vrot.slane %v5012, 4
        %v5014 = vmax.f32 %v5012, %v5013
        %v5015 = vrot.slane %v5014, 2
        %v5016 = vmax.f32 %v5014, %v5015
        %v5017 = vrot.slane %v5016, 1
        %v5018 = vmax.f32 %v5016, %v5017
        %v5019 = vsel %vm4822, %v4276, -inf
        %v5020 = vrot.slane %v5019, 4
        %v5021 = vmax.f32 %v5019, %v5020
        %v5022 = vrot.slane %v5021, 2
        %v5023 = vmax.f32 %v5021, %v5022
        %v5024 = vrot.slane %v5023, 1
        %v5025 = vmax.f32 %v5023, %v5024
        %v5026 = vsel %vm4822, %v4284, -inf
        %v5027 = vrot.slane %v5026, 4
        %v5028 = vmax.f32 %v5026, %v5027
        %v5029 = vrot.slane %v5028, 2
        %v5030 = vmax.f32 %v5028, %v5029
        %v5031 = vrot.slane %v5030, 1
        %v5032 = vmax.f32 %v5030, %v5031
        %v5033 = vsel %vm4822, %v4283, -inf
        %v5034 = vrot.slane %v5033, 4
        %v5035 = vmax.f32 %v5033, %v5034
        %v5036 = vrot.slane %v5035, 2
        %v5037 = vmax.f32 %v5035, %v5036
        %v5038 = vrot.slane %v5037, 1
        %v5039 = vmax.f32 %v5037, %v5038
        %v5040 = vsel %vm4822, %v4285, -inf
        %v5041 = vrot.slane %v5040, 4
        %v5042 = vmax.f32 %v5040, %v5041
        %v5043 = vrot.slane %v5042, 2
        %v5044 = vmax.f32 %v5042, %v5043
        %v5045 = vrot.slane %v5044, 1
        %v5046 = vmax.f32 %v5044, %v5045
        %v5047 = vsel %vm4822, %v4293, -inf
        %v5048 = vrot.slane %v5047, 4
        %v5049 = vmax.f32 %v5047, %v5048
        %v5050 = vrot.slane %v5049, 2
        %v5051 = vmax.f32 %v5049, %v5050
        %v5052 = vrot.slane %v5051, 1
        %v5053 = vmax.f32 %v5051, %v5052
        %v5054 = vsel %vm4822, %v4301, -inf
        %v5055 = vrot.slane %v5054, 4
        %v5056 = vmax.f32 %v5054, %v5055
        %v5057 = vrot.slane %v5056, 2
        %v5058 = vmax.f32 %v5056, %v5057
        %v5059 = vrot.slane %v5058, 1
        %v5060 = vmax.f32 %v5058, %v5059
        %v5061 = vsel %vm4822, %v4300, -inf
        %v5062 = vrot.slane %v5061, 4
        %v5063 = vmax.f32 %v5061, %v5062
        %v5064 = vrot.slane %v5063, 2
        %v5065 = vmax.f32 %v5063, %v5064
        %v5066 = vrot.slane %v5065, 1
        %v5067 = vmax.f32 %v5065, %v5066
        %v5068 = vsel %vm4822, %v4302, -inf
        %v5069 = vrot.slane %v5068, 4
        %v5070 = vmax.f32 %v5068, %v5069
        %v5071 = vrot.slane %v5070, 2
        %v5072 = vmax.f32 %v5070, %v5071
        %v5073 = vrot.slane %v5072, 1
        %v5074 = vmax.f32 %v5072, %v5073
        %v5075 = vsel %vm4822, %v4310, -inf
        %v5076 = vrot.slane %v5075, 4
        %v5077 = vmax.f32 %v5075, %v5076
        %v5078 = vrot.slane %v5077, 2
        %v5079 = vmax.f32 %v5077, %v5078
        %v5080 = vrot.slane %v5079, 1
        %v5081 = vmax.f32 %v5079, %v5080
        %v5082 = vsel %vm4822, %v4318, -inf
        %v5083 = vrot.slane %v5082, 4
        %v5084 = vmax.f32 %v5082, %v5083
        %v5085 = vrot.slane %v5084, 2
        %v5086 = vmax.f32 %v5084, %v5085
        %v5087 = vrot.slane %v5086, 1
        %v5088 = vmax.f32 %v5086, %v5087
        %v5089 = vsel %vm4822, %v4317, -inf
        %v5090 = vrot.slane %v5089, 4
        %v5091 = vmax.f32 %v5089, %v5090
        %v5092 = vrot.slane %v5091, 2
        %v5093 = vmax.f32 %v5091, %v5092
        %v5094 = vrot.slane %v5093, 1
        %v5095 = vmax.f32 %v5093, %v5094
        %v5096 = vsel %vm4822, %v4319, -inf
        %v5097 = vrot.slane %v5096, 4
        %v5098 = vmax.f32 %v5096, %v5097
        %v5099 = vrot.slane %v5098, 2
        %v5100 = vmax.f32 %v5098, %v5099
        %v5101 = vrot.slane %v5100, 1
        %v5102 = vmax.f32 %v5100, %v5101
        %v5103 = vsel %vm4822, %v4327, -inf
        %v5104 = vrot.slane %v5103, 4
        %v5105 = vmax.f32 %v5103, %v5104
        %v5106 = vrot.slane %v5105, 2
        %v5107 = vmax.f32 %v5105, %v5106
        %v5108 = vrot.slane %v5107, 1
        %v5109 = vmax.f32 %v5107, %v5108
        %v5110 = vsel %vm4822, %v4335, -inf
        %v5111 = vrot.slane %v5110, 4
        %v5112 = vmax.f32 %v5110, %v5111
        %v5113 = vrot.slane %v5112, 2
        %v5114 = vmax.f32 %v5112, %v5113
        %v5115 = vrot.slane %v5114, 1
        %v5116 = vmax.f32 %v5114, %v5115
        %v5117 = vsel %vm4822, %v4334, -inf
        %v5118 = vrot.slane %v5117, 4
        %v5119 = vmax.f32 %v5117, %v5118
        %v5120 = vrot.slane %v5119, 2
        %v5121 = vmax.f32 %v5119, %v5120
        %v5122 = vrot.slane %v5121, 1
        %v5123 = vmax.f32 %v5121, %v5122
        %v5124 = vsel %vm4822, %v4336, -inf
        %v5125 = vrot.slane %v5124, 4
        %v5126 = vmax.f32 %v5124, %v5125
        %v5127 = vrot.slane %v5126, 2
        %v5128 = vmax.f32 %v5126, %v5127
        %v5129 = vrot.slane %v5128, 1
        %v5130 = vmax.f32 %v5128, %v5129
        %v5131 = vsel %vm4822, %v4344, -inf
        %v5132 = vrot.slane %v5131, 4
        %v5133 = vmax.f32 %v5131, %v5132
        %v5134 = vrot.slane %v5133, 2
        %v5135 = vmax.f32 %v5133, %v5134
        %v5136 = vrot.slane %v5135, 1
        %v5137 = vmax.f32 %v5135, %v5136
        %v5138 = vsel %vm4822, %v4352, -inf
        %v5139 = vrot.slane %v5138, 4
        %v5140 = vmax.f32 %v5138, %v5139
        %v5141 = vrot.slane %v5140, 2
        %v5142 = vmax.f32 %v5140, %v5141
        %v5143 = vrot.slane %v5142, 1
        %v5144 = vmax.f32 %v5142, %v5143
        %v5145 = vsel %vm4822, %v4351, -inf
        %v5146 = vrot.slane %v5145, 4
        %v5147 = vmax.f32 %v5145, %v5146
        %v5148 = vrot.slane %v5147, 2
        %v5149 = vmax.f32 %v5147, %v5148
        %v5150 = vrot.slane %v5149, 1
        %v5151 = vmax.f32 %v5149, %v5150
        %v5152 = vsel %vm4822, %v4353, -inf
        %v5153 = vrot.slane %v5152, 4
        %v5154 = vmax.f32 %v5152, %v5153
        %v5155 = vrot.slane %v5154, 2
        %v5156 = vmax.f32 %v5154, %v5155
        %v5157 = vrot.slane %v5156, 1
        %v5158 = vmax.f32 %v5156, %v5157
        %v5159 = vsel %vm4822, %v4361, -inf
        %v5160 = vrot.slane %v5159, 4
        %v5161 = vmax.f32 %v5159, %v5160
        %v5162 = vrot.slane %v5161, 2
        %v5163 = vmax.f32 %v5161, %v5162
        %v5164 = vrot.slane %v5163, 1
        %v5165 = vmax.f32 %v5163, %v5164
        %v5166 = vsel %vm4822, %v4369, -inf
        %v5167 = vrot.slane %v5166, 4
        %v5168 = vmax.f32 %v5166, %v5167
        %v5169 = vrot.slane %v5168, 2
        %v5170 = vmax.f32 %v5168, %v5169
        %v5171 = vrot.slane %v5170, 1
        %v5172 = vmax.f32 %v5170, %v5171
        %v5173 = vsel %vm4822, %v4368, -inf
        %v5174 = vrot.slane %v5173, 4
        %v5175 = vmax.f32 %v5173, %v5174
        %v5176 = vrot.slane %v5175, 2
        %v5177 = vmax.f32 %v5175, %v5176
        %v5178 = vrot.slane %v5177, 1
        %v5179 = vmax.f32 %v5177, %v5178
        %v5180 = vsel %vm4822, %v4370, -inf
        %v5181 = vrot.slane %v5180, 4
        %v5182 = vmax.f32 %v5180, %v5181
        %v5183 = vrot.slane %v5182, 2
        %v5184 = vmax.f32 %v5182, %v5183
        %v5185 = vrot.slane %v5184, 1
        %v5186 = vmax.f32 %v5184, %v5185
        %v5187 = vsel %vm4822, %v4378, -inf
        %v5188 = vrot.slane %v5187, 4
        %v5189 = vmax.f32 %v5187, %v5188
        %v5190 = vrot.slane %v5189, 2
        %v5191 = vmax.f32 %v5189, %v5190
        %v5192 = vrot.slane %v5191, 1
        %v5193 = vmax.f32 %v5191, %v5192
        %v5194 = vsel %vm4822, %v4386, -inf
        %v5195 = vrot.slane %v5194, 4
        %v5196 = vmax.f32 %v5194, %v5195
        %v5197 = vrot.slane %v5196, 2
        %v5198 = vmax.f32 %v5196, %v5197
        %v5199 = vrot.slane %v5198, 1
        %v5200 = vmax.f32 %v5198, %v5199
        %v5201 = vsel %vm4822, %v4385, -inf
        %v5202 = vrot.slane %v5201, 4
        %v5203 = vmax.f32 %v5201, %v5202
        %v5204 = vrot.slane %v5203, 2
        %v5205 = vmax.f32 %v5203, %v5204
        %v5206 = vrot.slane %v5205, 1
        %v5207 = vmax.f32 %v5205, %v5206
        %v5208 = vsel %vm4822, %v4387, -inf
        %v5209 = vrot.slane %v5208, 4
        %v5210 = vmax.f32 %v5208, %v5209
        %v5211 = vrot.slane %v5210, 2
        %v5212 = vmax.f32 %v5210, %v5211
        %v5213 = vrot.slane %v5212, 1
        %v5214 = vmax.f32 %v5212, %v5213
        %v5215 = vsel %vm4822, %v4395, -inf
        %v5216 = vrot.slane %v5215, 4
        %v5217 = vmax.f32 %v5215, %v5216
        %v5218 = vrot.slane %v5217, 2
        %v5219 = vmax.f32 %v5217, %v5218
        %v5220 = vrot.slane %v5219, 1
        %v5221 = vmax.f32 %v5219, %v5220
        %v5222 = vsel %vm4822, %v4403, -inf
        %v5223 = vrot.slane %v5222, 4
        %v5224 = vmax.f32 %v5222, %v5223
        %v5225 = vrot.slane %v5224, 2
        %v5226 = vmax.f32 %v5224, %v5225
        %v5227 = vrot.slane %v5226, 1
        %v5228 = vmax.f32 %v5226, %v5227
        %v5229 = vsel %vm4822, %v4402, -inf
        %v5230 = vrot.slane %v5229, 4
        %v5231 = vmax.f32 %v5229, %v5230
        %v5232 = vrot.slane %v5231, 2
        %v5233 = vmax.f32 %v5231, %v5232
        %v5234 = vrot.slane %v5233, 1
        %v5235 = vmax.f32 %v5233, %v5234
        %v5236 = vsel %vm4822, %v4404, -inf
        %v5237 = vrot.slane %v5236, 4
        %v5238 = vmax.f32 %v5236, %v5237
        %v5239 = vrot.slane %v5238, 2
        %v5240 = vmax.f32 %v5238, %v5239
        %v5241 = vrot.slane %v5240, 1
        %v5242 = vmax.f32 %v5240, %v5241
        %v5243 = vsel %vm4822, %v4412, -inf
        %v5244 = vrot.slane %v5243, 4
        %v5245 = vmax.f32 %v5243, %v5244
        %v5246 = vrot.slane %v5245, 2
        %v5247 = vmax.f32 %v5245, %v5246
        %v5248 = vrot.slane %v5247, 1
        %v5249 = vmax.f32 %v5247, %v5248
        %v5250 = vsel %vm4822, %v4420, -inf
        %v5251 = vrot.slane %v5250, 4
        %v5252 = vmax.f32 %v5250, %v5251
        %v5253 = vrot.slane %v5252, 2
        %v5254 = vmax.f32 %v5252, %v5253
        %v5255 = vrot.slane %v5254, 1
        %v5256 = vmax.f32 %v5254, %v5255
        %v5257 = vsel %vm4822, %v4419, -inf
        %v5258 = vrot.slane %v5257, 4
        %v5259 = vmax.f32 %v5257, %v5258
        %v5260 = vrot.slane %v5259, 2
        %v5261 = vmax.f32 %v5259, %v5260
        %v5262 = vrot.slane %v5261, 1
        %v5263 = vmax.f32 %v5261, %v5262
        %v5264 = vsel %vm4822, %v4421, -inf
        %v5265 = vrot.slane %v5264, 4
        %v5266 = vmax.f32 %v5264, %v5265
        %v5267 = vrot.slane %v5266, 2
        %v5268 = vmax.f32 %v5266, %v5267
        %v5269 = vrot.slane %v5268, 1
        %v5270 = vmax.f32 %v5268, %v5269
        %v5271 = vsel %vm4822, %v4429, -inf
        %v5272 = vrot.slane %v5271, 4
        %v5273 = vmax.f32 %v5271, %v5272
        %v5274 = vrot.slane %v5273, 2
        %v5275 = vmax.f32 %v5273, %v5274
        %v5276 = vrot.slane %v5275, 1
        %v5277 = vmax.f32 %v5275, %v5276
        %v5278 = vsel %vm4822, %v4437, -inf
        %v5279 = vrot.slane %v5278, 4
        %v5280 = vmax.f32 %v5278, %v5279
        %v5281 = vrot.slane %v5280, 2
        %v5282 = vmax.f32 %v5280, %v5281
        %v5283 = vrot.slane %v5282, 1
        %v5284 = vmax.f32 %v5282, %v5283
        %v5285 = vsel %vm4822, %v4436, -inf
        %v5286 = vrot.slane %v5285, 4
        %v5287 = vmax.f32 %v5285, %v5286
        %v5288 = vrot.slane %v5287, 2
        %v5289 = vmax.f32 %v5287, %v5288
        %v5290 = vrot.slane %v5289, 1
        %v5291 = vmax.f32 %v5289, %v5290
        %v5292 = vsel %vm4822, %v4438, -inf
        %v5293 = vrot.slane %v5292, 4
        %v5294 = vmax.f32 %v5292, %v5293
        %v5295 = vrot.slane %v5294, 2
        %v5296 = vmax.f32 %v5294, %v5295
        %v5297 = vrot.slane %v5296, 1
        %v5298 = vmax.f32 %v5296, %v5297
        %v5299 = vsel %vm4822, %v4446, -inf
        %v5300 = vrot.slane %v5299, 4
        %v5301 = vmax.f32 %v5299, %v5300
        %v5302 = vrot.slane %v5301, 2
        %v5303 = vmax.f32 %v5301, %v5302
        %v5304 = vrot.slane %v5303, 1
        %v5305 = vmax.f32 %v5303, %v5304
        %v5306 = vsel %vm4822, %v4454, -inf
        %v5307 = vrot.slane %v5306, 4
        %v5308 = vmax.f32 %v5306, %v5307
        %v5309 = vrot.slane %v5308, 2
        %v5310 = vmax.f32 %v5308, %v5309
        %v5311 = vrot.slane %v5310, 1
        %v5312 = vmax.f32 %v5310, %v5311
        %v5313 = vsel %vm4822, %v4453, -inf
        %v5314 = vrot.slane %v5313, 4
        %v5315 = vmax.f32 %v5313, %v5314
        %v5316 = vrot.slane %v5315, 2
        %v5317 = vmax.f32 %v5315, %v5316
        %v5318 = vrot.slane %v5317, 1
        %v5319 = vmax.f32 %v5317, %v5318
        %v5320 = vsel %vm4822, %v4455, -inf
        %v5321 = vrot.slane %v5320, 4
        %v5322 = vmax.f32 %v5320, %v5321
        %v5323 = vrot.slane %v5322, 2
        %v5324 = vmax.f32 %v5322, %v5323
        %v5325 = vrot.slane %v5324, 1
        %v5326 = vmax.f32 %v5324, %v5325
        %v5327 = vsel %vm4822, %v4463, -inf
        %v5328 = vrot.slane %v5327, 4
        %v5329 = vmax.f32 %v5327, %v5328
        %v5330 = vrot.slane %v5329, 2
        %v5331 = vmax.f32 %v5329, %v5330
        %v5332 = vrot.slane %v5331, 1
        %v5333 = vmax.f32 %v5331, %v5332
        %v5334 = vsel %vm4822, %v4471, -inf
        %v5335 = vrot.slane %v5334, 4
        %v5336 = vmax.f32 %v5334, %v5335
        %v5337 = vrot.slane %v5336, 2
        %v5338 = vmax.f32 %v5336, %v5337
        %v5339 = vrot.slane %v5338, 1
        %v5340 = vmax.f32 %v5338, %v5339
        %v5341 = vsel %vm4822, %v4470, -inf
        %v5342 = vrot.slane %v5341, 4
        %v5343 = vmax.f32 %v5341, %v5342
        %v5344 = vrot.slane %v5343, 2
        %v5345 = vmax.f32 %v5343, %v5344
        %v5346 = vrot.slane %v5345, 1
        %v5347 = vmax.f32 %v5345, %v5346
        %v5348 = vsel %vm4822, %v4472, -inf
        %v5349 = vrot.slane %v5348, 4
        %v5350 = vmax.f32 %v5348, %v5349
        %v5351 = vrot.slane %v5350, 2
        %v5352 = vmax.f32 %v5350, %v5351
        %v5353 = vrot.slane %v5352, 1
        %v5354 = vmax.f32 %v5352, %v5353
        %v5355 = vsel %vm4822, %v4480, -inf
        %v5356 = vrot.slane %v5355, 4
        %v5357 = vmax.f32 %v5355, %v5356
        %v5358 = vrot.slane %v5357, 2
        %v5359 = vmax.f32 %v5357, %v5358
        %v5360 = vrot.slane %v5359, 1
        %v5361 = vmax.f32 %v5359, %v5360
        %v5362 = vsel %vm4822, %v4488, -inf
        %v5363 = vrot.slane %v5362, 4
        %v5364 = vmax.f32 %v5362, %v5363
        %v5365 = vrot.slane %v5364, 2
        %v5366 = vmax.f32 %v5364, %v5365
        %v5367 = vrot.slane %v5366, 1
        %v5368 = vmax.f32 %v5366, %v5367
        %v5369 = vsel %vm4822, %v4487, -inf
        %v5370 = vrot.slane %v5369, 4
        %v5371 = vmax.f32 %v5369, %v5370
        %v5372 = vrot.slane %v5371, 2
        %v5373 = vmax.f32 %v5371, %v5372
        %v5374 = vrot.slane %v5373, 1
        %v5375 = vmax.f32 %v5373, %v5374
        %v5376 = vsel %vm4822, %v4489, -inf
        %v5377 = vrot.slane %v5376, 4
        %v5378 = vmax.f32 %v5376, %v5377
        %v5379 = vrot.slane %v5378, 2
        %v5380 = vmax.f32 %v5378, %v5379
        %v5381 = vrot.slane %v5380, 1
        %v5382 = vmax.f32 %v5380, %v5381
        %v5383 = vsel %vm4822, %v4497, -inf
        %v5384 = vrot.slane %v5383, 4
        %v5385 = vmax.f32 %v5383, %v5384
        %v5386 = vrot.slane %v5385, 2
        %v5387 = vmax.f32 %v5385, %v5386
        %v5388 = vrot.slane %v5387, 1
        %v5389 = vmax.f32 %v5387, %v5388
        %v5390 = vsel %vm4822, %v4505, -inf
        %v5391 = vrot.slane %v5390, 4
        %v5392 = vmax.f32 %v5390, %v5391
        %v5393 = vrot.slane %v5392, 2
        %v5394 = vmax.f32 %v5392, %v5393
        %v5395 = vrot.slane %v5394, 1
        %v5396 = vmax.f32 %v5394, %v5395
        %v5397 = vsel %vm4822, %v4504, -inf
        %v5398 = vrot.slane %v5397, 4
        %v5399 = vmax.f32 %v5397, %v5398
        %v5400 = vrot.slane %v5399, 2
        %v5401 = vmax.f32 %v5399, %v5400
        %v5402 = vrot.slane %v5401, 1
        %v5403 = vmax.f32 %v5401, %v5402
        %v5404 = vsel %vm4822, %v4506, -inf
        %v5405 = vrot.slane %v5404, 4
        %v5406 = vmax.f32 %v5404, %v5405
        %v5407 = vrot.slane %v5406, 2
        %v5408 = vmax.f32 %v5406, %v5407
        %v5409 = vrot.slane %v5408, 1
        %v5410 = vmax.f32 %v5408, %v5409
        %v5411 = vsel %vm4822, %v4514, -inf
        %v5412 = vrot.slane %v5411, 4
        %v5413 = vmax.f32 %v5411, %v5412
        %v5414 = vrot.slane %v5413, 2
        %v5415 = vmax.f32 %v5413, %v5414
        %v5416 = vrot.slane %v5415, 1
        %v5417 = vmax.f32 %v5415, %v5416
        %v5418 = vsel %vm4822, %v4522, -inf
        %v5419 = vrot.slane %v5418, 4
        %v5420 = vmax.f32 %v5418, %v5419
        %v5421 = vrot.slane %v5420, 2
        %v5422 = vmax.f32 %v5420, %v5421
        %v5423 = vrot.slane %v5422, 1
        %v5424 = vmax.f32 %v5422, %v5423
        %v5425 = vsel %vm4822, %v4521, -inf
        %v5426 = vrot.slane %v5425, 4
        %v5427 = vmax.f32 %v5425, %v5426
        %v5428 = vrot.slane %v5427, 2
        %v5429 = vmax.f32 %v5427, %v5428
        %v5430 = vrot.slane %v5429, 1
        %v5431 = vmax.f32 %v5429, %v5430
        %v5432 = vsel %vm4822, %v4523, -inf
        %v5433 = vrot.slane %v5432, 4
        %v5434 = vmax.f32 %v5432, %v5433
        %v5435 = vrot.slane %v5434, 2
        %v5436 = vmax.f32 %v5434, %v5435
        %v5437 = vrot.slane %v5436, 1
        %v5438 = vmax.f32 %v5436, %v5437
        %v5439 = vsel %vm4822, %v4531, -inf
        %v5440 = vrot.slane %v5439, 4
        %v5441 = vmax.f32 %v5439, %v5440
        %v5442 = vrot.slane %v5441, 2
        %v5443 = vmax.f32 %v5441, %v5442
        %v5444 = vrot.slane %v5443, 1
        %v5445 = vmax.f32 %v5443, %v5444
        %v5446 = vsel %vm4822, %v4539, -inf
        %v5447 = vrot.slane %v5446, 4
        %v5448 = vmax.f32 %v5446, %v5447
        %v5449 = vrot.slane %v5448, 2
        %v5450 = vmax.f32 %v5448, %v5449
        %v5451 = vrot.slane %v5450, 1
        %v5452 = vmax.f32 %v5450, %v5451
        %v5453 = vsel %vm4822, %v4538, -inf
        %v5454 = vrot.slane %v5453, 4
        %v5455 = vmax.f32 %v5453, %v5454
        %v5456 = vrot.slane %v5455, 2
        %v5457 = vmax.f32 %v5455, %v5456
        %v5458 = vrot.slane %v5457, 1
        %v5459 = vmax.f32 %v5457, %v5458
        %v5460 = vsel %vm4822, %v4540, -inf
        %v5461 = vrot.slane %v5460, 4
        %v5462 = vmax.f32 %v5460, %v5461
        %v5463 = vrot.slane %v5462, 2
        %v5464 = vmax.f32 %v5462, %v5463
        %v5465 = vrot.slane %v5464, 1
        %v5466 = vmax.f32 %v5464, %v5465
        %v5467 = vsel %vm4822, %v4548, -inf
        %v5468 = vrot.slane %v5467, 4
        %v5469 = vmax.f32 %v5467, %v5468
        %v5470 = vrot.slane %v5469, 2
        %v5471 = vmax.f32 %v5469, %v5470
        %v5472 = vrot.slane %v5471, 1
        %v5473 = vmax.f32 %v5471, %v5472
        %v5474 = vsel %vm4822, %v4556, -inf
        %v5475 = vrot.slane %v5474, 4
        %v5476 = vmax.f32 %v5474, %v5475
        %v5477 = vrot.slane %v5476, 2
        %v5478 = vmax.f32 %v5476, %v5477
        %v5479 = vrot.slane %v5478, 1
        %v5480 = vmax.f32 %v5478, %v5479
        %v5481 = vsel %vm4822, %v4555, -inf
        %v5482 = vrot.slane %v5481, 4
        %v5483 = vmax.f32 %v5481, %v5482
        %v5484 = vrot.slane %v5483, 2
        %v5485 = vmax.f32 %v5483, %v5484
        %v5486 = vrot.slane %v5485, 1
        %v5487 = vmax.f32 %v5485, %v5486
        %v5488 = vsel %vm4822, %v4557, -inf
        %v5489 = vrot.slane %v5488, 4
        %v5490 = vmax.f32 %v5488, %v5489
        %v5491 = vrot.slane %v5490, 2
        %v5492 = vmax.f32 %v5490, %v5491
        %v5493 = vrot.slane %v5492, 1
        %v5494 = vmax.f32 %v5492, %v5493
        %v5495 = vsel %vm4822, %v4565, -inf
        %v5496 = vrot.slane %v5495, 4
        %v5497 = vmax.f32 %v5495, %v5496
        %v5498 = vrot.slane %v5497, 2
        %v5499 = vmax.f32 %v5497, %v5498
        %v5500 = vrot.slane %v5499, 1
        %v5501 = vmax.f32 %v5499, %v5500
        %v5502 = vsel %vm4822, %v4573, -inf
        %v5503 = vrot.slane %v5502, 4
        %v5504 = vmax.f32 %v5502, %v5503
        %v5505 = vrot.slane %v5504, 2
        %v5506 = vmax.f32 %v5504, %v5505
        %v5507 = vrot.slane %v5506, 1
        %v5508 = vmax.f32 %v5506, %v5507
        %v5509 = vsel %vm4822, %v4572, -inf
        %v5510 = vrot.slane %v5509, 4
        %v5511 = vmax.f32 %v5509, %v5510
        %v5512 = vrot.slane %v5511, 2
        %v5513 = vmax.f32 %v5511, %v5512
        %v5514 = vrot.slane %v5513, 1
        %v5515 = vmax.f32 %v5513, %v5514
        %v5516 = vsel %vm4822, %v4574, -inf
        %v5517 = vrot.slane %v5516, 4
        %v5518 = vmax.f32 %v5516, %v5517
        %v5519 = vrot.slane %v5518, 2
        %v5520 = vmax.f32 %v5518, %v5519
        %v5521 = vrot.slane %v5520, 1
        %v5522 = vmax.f32 %v5520, %v5521
        %v5523 = vsel %vm4822, %v4582, -inf
        %v5524 = vrot.slane %v5523, 4
        %v5525 = vmax.f32 %v5523, %v5524
        %v5526 = vrot.slane %v5525, 2
        %v5527 = vmax.f32 %v5525, %v5526
        %v5528 = vrot.slane %v5527, 1
        %v5529 = vmax.f32 %v5527, %v5528
        %v5530 = vsel %vm4822, %v4590, -inf
        %v5531 = vrot.slane %v5530, 4
        %v5532 = vmax.f32 %v5530, %v5531
        %v5533 = vrot.slane %v5532, 2
        %v5534 = vmax.f32 %v5532, %v5533
        %v5535 = vrot.slane %v5534, 1
        %v5536 = vmax.f32 %v5534, %v5535
        %v5537 = vsel %vm4822, %v4589, -inf
        %v5538 = vrot.slane %v5537, 4
        %v5539 = vmax.f32 %v5537, %v5538
        %v5540 = vrot.slane %v5539, 2
        %v5541 = vmax.f32 %v5539, %v5540
        %v5542 = vrot.slane %v5541, 1
        %v5543 = vmax.f32 %v5541, %v5542
        %v5544 = vsel %vm4822, %v4591, -inf
        %v5545 = vrot.slane %v5544, 4
        %v5546 = vmax.f32 %v5544, %v5545
        %v5547 = vrot.slane %v5546, 2
        %v5548 = vmax.f32 %v5546, %v5547
        %v5549 = vrot.slane %v5548, 1
        %v5550 = vmax.f32 %v5548, %v5549
        %v5551 = vsel %vm4822, %v4599, -inf
        %v5552 = vrot.slane %v5551, 4
        %v5553 = vmax.f32 %v5551, %v5552
        %v5554 = vrot.slane %v5553, 2
        %v5555 = vmax.f32 %v5553, %v5554
        %v5556 = vrot.slane %v5555, 1
        %v5557 = vmax.f32 %v5555, %v5556
        %v5558 = vsel %vm4822, %v4607, -inf
        %v5559 = vrot.slane %v5558, 4
        %v5560 = vmax.f32 %v5558, %v5559
        %v5561 = vrot.slane %v5560, 2
        %v5562 = vmax.f32 %v5560, %v5561
        %v5563 = vrot.slane %v5562, 1
        %v5564 = vmax.f32 %v5562, %v5563
        %v5565 = vsel %vm4822, %v4606, -inf
        %v5566 = vrot.slane %v5565, 4
        %v5567 = vmax.f32 %v5565, %v5566
        %v5568 = vrot.slane %v5567, 2
        %v5569 = vmax.f32 %v5567, %v5568
        %v5570 = vrot.slane %v5569, 1
        %v5571 = vmax.f32 %v5569, %v5570
        %v5572 = vsel %vm4822, %v4608, -inf
        %v5573 = vrot.slane %v5572, 4
        %v5574 = vmax.f32 %v5572, %v5573
        %v5575 = vrot.slane %v5574, 2
        %v5576 = vmax.f32 %v5574, %v5575
        %v5577 = vrot.slane %v5576, 1
        %v5578 = vmax.f32 %v5576, %v5577
        %v5579 = vsel %vm4822, %v4616, -inf
        %v5580 = vrot.slane %v5579, 4
        %v5581 = vmax.f32 %v5579, %v5580
        %v5582 = vrot.slane %v5581, 2
        %v5583 = vmax.f32 %v5581, %v5582
        %v5584 = vrot.slane %v5583, 1
        %v5585 = vmax.f32 %v5583, %v5584
        %v5586 = vsel %vm4822, %v4624, -inf
        %v5587 = vrot.slane %v5586, 4
        %v5588 = vmax.f32 %v5586, %v5587
        %v5589 = vrot.slane %v5588, 2
        %v5590 = vmax.f32 %v5588, %v5589
        %v5591 = vrot.slane %v5590, 1
        %v5592 = vmax.f32 %v5590, %v5591
        %v5593 = vsel %vm4822, %v4623, -inf
        %v5594 = vrot.slane %v5593, 4
        %v5595 = vmax.f32 %v5593, %v5594
        %v5596 = vrot.slane %v5595, 2
        %v5597 = vmax.f32 %v5595, %v5596
        %v5598 = vrot.slane %v5597, 1
        %v5599 = vmax.f32 %v5597, %v5598
        %v5600 = vsel %vm4822, %v4625, -inf
        %v5601 = vrot.slane %v5600, 4
        %v5602 = vmax.f32 %v5600, %v5601
        %v5603 = vrot.slane %v5602, 2
        %v5604 = vmax.f32 %v5602, %v5603
        %v5605 = vrot.slane %v5604, 1
        %v5606 = vmax.f32 %v5604, %v5605
        %v5607 = vsel %vm4822, %v4633, -inf
        %v5608 = vrot.slane %v5607, 4
        %v5609 = vmax.f32 %v5607, %v5608
        %v5610 = vrot.slane %v5609, 2
        %v5611 = vmax.f32 %v5609, %v5610
        %v5612 = vrot.slane %v5611, 1
        %v5613 = vmax.f32 %v5611, %v5612
        %v5614 = vsel %vm4822, %v4641, -inf
        %v5615 = vrot.slane %v5614, 4
        %v5616 = vmax.f32 %v5614, %v5615
        %v5617 = vrot.slane %v5616, 2
        %v5618 = vmax.f32 %v5616, %v5617
        %v5619 = vrot.slane %v5618, 1
        %v5620 = vmax.f32 %v5618, %v5619
        %v5621 = vsel %vm4822, %v4640, -inf
        %v5622 = vrot.slane %v5621, 4
        %v5623 = vmax.f32 %v5621, %v5622
        %v5624 = vrot.slane %v5623, 2
        %v5625 = vmax.f32 %v5623, %v5624
        %v5626 = vrot.slane %v5625, 1
        %v5627 = vmax.f32 %v5625, %v5626
        %v5628 = vsel %vm4822, %v4642, -inf
        %v5629 = vrot.slane %v5628, 4
        %v5630 = vmax.f32 %v5628, %v5629
        %v5631 = vrot.slane %v5630, 2
        %v5632 = vmax.f32 %v5630, %v5631
        %v5633 = vrot.slane %v5632, 1
        %v5634 = vmax.f32 %v5632, %v5633
        %v5635 = vsel %vm4822, %v4650, -inf
        %v5636 = vrot.slane %v5635, 4
        %v5637 = vmax.f32 %v5635, %v5636
        %v5638 = vrot.slane %v5637, 2
        %v5639 = vmax.f32 %v5637, %v5638
        %v5640 = vrot.slane %v5639, 1
        %v5641 = vmax.f32 %v5639, %v5640
        %v5642 = vsel %vm4822, %v4658, -inf
        %v5643 = vrot.slane %v5642, 4
        %v5644 = vmax.f32 %v5642, %v5643
        %v5645 = vrot.slane %v5644, 2
        %v5646 = vmax.f32 %v5644, %v5645
        %v5647 = vrot.slane %v5646, 1
        %v5648 = vmax.f32 %v5646, %v5647
        %v5649 = vsel %vm4822, %v4657, -inf
        %v5650 = vrot.slane %v5649, 4
        %v5651 = vmax.f32 %v5649, %v5650
        %v5652 = vrot.slane %v5651, 2
        %v5653 = vmax.f32 %v5651, %v5652
        %v5654 = vrot.slane %v5653, 1
        %v5655 = vmax.f32 %v5653, %v5654
        %v5656 = vsel %vm4822, %v4659, -inf
        %v5657 = vrot.slane %v5656, 4
        %v5658 = vmax.f32 %v5656, %v5657
        %v5659 = vrot.slane %v5658, 2
        %v5660 = vmax.f32 %v5658, %v5659
        %v5661 = vrot.slane %v5660, 1
        %v5662 = vmax.f32 %v5660, %v5661
        %v5663 = vsel %vm4822, %v4667, -inf
        %v5664 = vrot.slane %v5663, 4
        %v5665 = vmax.f32 %v5663, %v5664
        %v5666 = vrot.slane %v5665, 2
        %v5667 = vmax.f32 %v5665, %v5666
        %v5668 = vrot.slane %v5667, 1
        %v5669 = vmax.f32 %v5667, %v5668
        %v5670 = vsel %vm4822, %v4675, -inf
        %v5671 = vrot.slane %v5670, 4
        %v5672 = vmax.f32 %v5670, %v5671
        %v5673 = vrot.slane %v5672, 2
        %v5674 = vmax.f32 %v5672, %v5673
        %v5675 = vrot.slane %v5674, 1
        %v5676 = vmax.f32 %v5674, %v5675
        %v5677 = vsel %vm4822, %v4674, -inf
        %v5678 = vrot.slane %v5677, 4
        %v5679 = vmax.f32 %v5677, %v5678
        %v5680 = vrot.slane %v5679, 2
        %v5681 = vmax.f32 %v5679, %v5680
        %v5682 = vrot.slane %v5681, 1
        %v5683 = vmax.f32 %v5681, %v5682
        %v5684 = vsel %vm4822, %v4676, -inf
        %v5685 = vrot.slane %v5684, 4
        %v5686 = vmax.f32 %v5684, %v5685
        %v5687 = vrot.slane %v5686, 2
        %v5688 = vmax.f32 %v5686, %v5687
        %v5689 = vrot.slane %v5688, 1
        %v5690 = vmax.f32 %v5688, %v5689
        %v5691 = vsel %vm4822, %v4684, -inf
        %v5692 = vrot.slane %v5691, 4
        %v5693 = vmax.f32 %v5691, %v5692
        %v5694 = vrot.slane %v5693, 2
        %v5695 = vmax.f32 %v5693, %v5694
        %v5696 = vrot.slane %v5695, 1
        %v5697 = vmax.f32 %v5695, %v5696
        %v5698 = vsel %vm4822, %v4692, -inf
        %v5699 = vrot.slane %v5698, 4
        %v5700 = vmax.f32 %v5698, %v5699
        %v5701 = vrot.slane %v5700, 2
        %v5702 = vmax.f32 %v5700, %v5701
        %v5703 = vrot.slane %v5702, 1
        %v5704 = vmax.f32 %v5702, %v5703
        %v5705 = vsel %vm4822, %v4691, -inf
        %v5706 = vrot.slane %v5705, 4
        %v5707 = vmax.f32 %v5705, %v5706
        %v5708 = vrot.slane %v5707, 2
        %v5709 = vmax.f32 %v5707, %v5708
        %v5710 = vrot.slane %v5709, 1
        %v5711 = vmax.f32 %v5709, %v5710
        %v5712 = vsel %vm4822, %v4693, -inf
        %v5713 = vrot.slane %v5712, 4
        %v5714 = vmax.f32 %v5712, %v5713
        %v5715 = vrot.slane %v5714, 2
        %v5716 = vmax.f32 %v5714, %v5715
        %v5717 = vrot.slane %v5716, 1
        %v5718 = vmax.f32 %v5716, %v5717
        %v5719 = vmax.f32 %v4829, %v4885
        %v5720 = vmax.f32 %v4836, %v4892
        %v5721 = vmax.f32 %v4843, %v4899
        %v5722 = vmax.f32 %v4850, %v4906
        %v5723 = vmax.f32 %v4857, %v4913
        %v5724 = vmax.f32 %v4864, %v4920
        %v5725 = vmax.f32 %v4871, %v4927
        %v5726 = vmax.f32 %v4878, %v4934
        %v5727 = vmax.f32 %v4941, %v4997
        %v5728 = vmax.f32 %v4948, %v5004
        %v5729 = vmax.f32 %v4955, %v5011
        %v5730 = vmax.f32 %v4962, %v5018
        %v5731 = vmax.f32 %v4969, %v5025
        %v5732 = vmax.f32 %v4976, %v5032
        %v5733 = vmax.f32 %v4983, %v5039
        %v5734 = vmax.f32 %v4990, %v5046
        %v5735 = vmax.f32 %v5053, %v5109
        %v5736 = vmax.f32 %v5060, %v5116
        %v5737 = vmax.f32 %v5067, %v5123
        %v5738 = vmax.f32 %v5074, %v5130
        %v5739 = vmax.f32 %v5081, %v5137
        %v5740 = vmax.f32 %v5088, %v5144
        %v5741 = vmax.f32 %v5095, %v5151
        %v5742 = vmax.f32 %v5102, %v5158
        %v5743 = vmax.f32 %v5165, %v5221
        %v5744 = vmax.f32 %v5172, %v5228
        %v5745 = vmax.f32 %v5179, %v5235
        %v5746 = vmax.f32 %v5186, %v5242
        %v5747 = vmax.f32 %v5193, %v5249
        %v5748 = vmax.f32 %v5200, %v5256
        %v5749 = vmax.f32 %v5207, %v5263
        %v5750 = vmax.f32 %v5214, %v5270
        %v5751 = vmax.f32 %v5277, %v5333
        %v5752 = vmax.f32 %v5284, %v5340
        %v5753 = vmax.f32 %v5291, %v5347
        %v5754 = vmax.f32 %v5298, %v5354
        %v5755 = vmax.f32 %v5305, %v5361
        %v5756 = vmax.f32 %v5312, %v5368
        %v5757 = vmax.f32 %v5319, %v5375
        %v5758 = vmax.f32 %v5326, %v5382
        %v5759 = vmax.f32 %v5389, %v5445
        %v5760 = vmax.f32 %v5396, %v5452
        %v5761 = vmax.f32 %v5403, %v5459
        %v5762 = vmax.f32 %v5410, %v5466
        %v5763 = vmax.f32 %v5417, %v5473
        %v5764 = vmax.f32 %v5424, %v5480
        %v5765 = vmax.f32 %v5431, %v5487
        %v5766 = vmax.f32 %v5438, %v5494
        %v5767 = vmax.f32 %v5501, %v5557
        %v5768 = vmax.f32 %v5508, %v5564
        %v5769 = vmax.f32 %v5515, %v5571
        %v5770 = vmax.f32 %v5522, %v5578
        %v5771 = vmax.f32 %v5529, %v5585
        %v5772 = vmax.f32 %v5536, %v5592
        %v5773 = vmax.f32 %v5543, %v5599
        %v5774 = vmax.f32 %v5550, %v5606
        %v5775 = vmax.f32 %v5613, %v5669
        %v5776 = vmax.f32 %v5620, %v5676
        %v5777 = vmax.f32 %v5627, %v5683
        %v5778 = vmax.f32 %v5634, %v5690
        %v5779 = vmax.f32 %v5641, %v5697
        %v5780 = vmax.f32 %v5648, %v5704
        %v5781 = vmax.f32 %v5655, %v5711
        %v5782 = vmax.f32 %v5662, %v5718
        %vm5847 = vcmask 1041409
        %v5848 = vsel %vm5847, %v5720, %v5719
        %vm5849 = vcmask 1042434
        %v5850 = vsel %vm5849, %v5721, %v5848
        %vm5851 = vcmask 1043459
        %v5852 = vsel %vm5851, %v5722, %v5850
        %vm5853 = vcmask 1044484
        %v5854 = vsel %vm5853, %v5723, %v5852
        %vm5855 = vcmask 1045509
        %v5856 = vsel %vm5855, %v5724, %v5854
        %vm5857 = vcmask 1046534
        %v5858 = vsel %vm5857, %v5725, %v5856
        %vm5859 = vcmask 1047559
        %v5860 = vsel %vm5859, %v5726, %v5858
        %v5861 = vsel %vm5847, %v5728, %v5727
        %v5862 = vsel %vm5849, %v5729, %v5861
        %v5863 = vsel %vm5851, %v5730, %v5862
        %v5864 = vsel %vm5853, %v5731, %v5863
        %v5865 = vsel %vm5855, %v5732, %v5864
        %v5866 = vsel %vm5857, %v5733, %v5865
        %v5867 = vsel %vm5859, %v5734, %v5866
        %v5868 = vsel %vm5847, %v5736, %v5735
        %v5869 = vsel %vm5849, %v5737, %v5868
        %v5870 = vsel %vm5851, %v5738, %v5869
        %v5871 = vsel %vm5853, %v5739, %v5870
        %v5872 = vsel %vm5855, %v5740, %v5871
        %v5873 = vsel %vm5857, %v5741, %v5872
        %v5874 = vsel %vm5859, %v5742, %v5873
        %v5875 = vsel %vm5847, %v5744, %v5743
        %v5876 = vsel %vm5849, %v5745, %v5875
        %v5877 = vsel %vm5851, %v5746, %v5876
        %v5878 = vsel %vm5853, %v5747, %v5877
        %v5879 = vsel %vm5855, %v5748, %v5878
        %v5880 = vsel %vm5857, %v5749, %v5879
        %v5881 = vsel %vm5859, %v5750, %v5880
        %v5882 = vsel %vm5847, %v5752, %v5751
        %v5883 = vsel %vm5849, %v5753, %v5882
        %v5884 = vsel %vm5851, %v5754, %v5883
        %v5885 = vsel %vm5853, %v5755, %v5884
        %v5886 = vsel %vm5855, %v5756, %v5885
        %v5887 = vsel %vm5857, %v5757, %v5886
        %v5888 = vsel %vm5859, %v5758, %v5887
        %v5889 = vsel %vm5847, %v5760, %v5759
        %v5890 = vsel %vm5849, %v5761, %v5889
        %v5891 = vsel %vm5851, %v5762, %v5890
        %v5892 = vsel %vm5853, %v5763, %v5891
        %v5893 = vsel %vm5855, %v5764, %v5892
        %v5894 = vsel %vm5857, %v5765, %v5893
        %v5895 = vsel %vm5859, %v5766, %v5894
        %v5896 = vsel %vm5847, %v5768, %v5767
        %v5897 = vsel %vm5849, %v5769, %v5896
        %v5898 = vsel %vm5851, %v5770, %v5897
        %v5899 = vsel %vm5853, %v5771, %v5898
        %v5900 = vsel %vm5855, %v5772, %v5899
        %v5901 = vsel %vm5857, %v5773, %v5900
        %v5902 = vsel %vm5859, %v5774, %v5901
        %v5903 = vsel %vm5847, %v5776, %v5775
        %v5904 = vsel %vm5849, %v5777, %v5903
        %v5905 = vsel %vm5851, %v5778, %v5904
        %v5906 = vsel %vm5853, %v5779, %v5905
        %v5907 = vsel %vm5855, %v5780, %v5906
        %v5908 = vsel %vm5857, %v5781, %v5907
        %v5909 = vsel %vm5859, %v5782, %v5908
        %v5918 = vcombine.low %v5860, %v5874
        %v5919 = vcombine.high %v5860, %v5874
        %v5921 = vunpack.c.l.s4 1983009808
        %v5922 = vunpack.c.0.s8 %v5921
        %v5923 = vlaneseq
        %v5924 = vshrl.u32 %v5923, 7
        %v5925 = vsub.s32 %v5922, %v5924
        %v5926 = vrot.slane %v5918, %v5925
        %v5928 = vunpack.c.l.s4 1983009808
        %v5929 = vunpack.c.0.s8 %v5928
        %v5930 = vlaneseq
        %v5931 = vshrl.u32 %v5930, 7
        %v5932 = vsub.s32 %v5929, %v5931
        %v5933 = vrot.slane %v5919, %v5932
        %v5934 = vcombine.low %v5867, %v5881
        %v5935 = vcombine.high %v5867, %v5881
        %v5937 = vunpack.c.l.s4 1983009808
        %v5938 = vunpack.c.0.s8 %v5937
        %v5939 = vlaneseq
        %v5940 = vshrl.u32 %v5939, 7
        %v5941 = vsub.s32 %v5938, %v5940
        %v5942 = vrot.slane %v5934, %v5941
        %v5944 = vunpack.c.l.s4 1983009808
        %v5945 = vunpack.c.0.s8 %v5944
        %v5946 = vlaneseq
        %v5947 = vshrl.u32 %v5946, 7
        %v5948 = vsub.s32 %v5945, %v5947
        %v5949 = vrot.slane %v5935, %v5948
        %v5950 = vcombine.low %v5888, %v5902
        %v5951 = vcombine.high %v5888, %v5902
        %v5953 = vunpack.c.l.s4 1983009808
        %v5954 = vunpack.c.0.s8 %v5953
        %v5955 = vlaneseq
        %v5956 = vshrl.u32 %v5955, 7
        %v5957 = vsub.s32 %v5954, %v5956
        %v5958 = vrot.slane %v5950, %v5957
        %v5960 = vunpack.c.l.s4 1983009808
        %v5961 = vunpack.c.0.s8 %v5960
        %v5962 = vlaneseq
        %v5963 = vshrl.u32 %v5962, 7
        %v5964 = vsub.s32 %v5961, %v5963
        %v5965 = vrot.slane %v5951, %v5964
        %v5966 = vcombine.low %v5895, %v5909
        %v5967 = vcombine.high %v5895, %v5909
        %v5969 = vunpack.c.l.s4 1983009808
        %v5970 = vunpack.c.0.s8 %v5969
        %v5971 = vlaneseq
        %v5972 = vshrl.u32 %v5971, 7
        %v5973 = vsub.s32 %v5970, %v5972
        %v5974 = vrot.slane %v5966, %v5973
        %v5976 = vunpack.c.l.s4 1983009808
        %v5977 = vunpack.c.0.s8 %v5976
        %v5978 = vlaneseq
        %v5979 = vshrl.u32 %v5978, 7
        %v5980 = vsub.s32 %v5977, %v5979
        %v5981 = vrot.slane %v5967, %v5980
        %v5982 = vcombine.low %v5926, %v5942
        %v5983 = vcombine.high %v5926, %v5942
        %v5985 = vunpack.c.l.s4 1934713408
        %v5986 = vunpack.c.0.s8 %v5985
        %v5987 = vlaneseq
        %v5988 = vshrl.u32 %v5987, 7
        %v5989 = vsub.s32 %v5986, %v5988
        %v5990 = vrot.slane %v5982, %v5989
        %v5992 = vunpack.c.l.s4 1934713408
        %v5993 = vunpack.c.0.s8 %v5992
        %v5994 = vlaneseq
        %v5995 = vshrl.u32 %v5994, 7
        %v5996 = vsub.s32 %v5993, %v5995
        %v5997 = vrot.slane %v5983, %v5996
        %v5998 = vcombine.low %v5933, %v5949
        %v5999 = vcombine.high %v5933, %v5949
        %v6001 = vunpack.c.l.s4 1934713408
        %v6002 = vunpack.c.0.s8 %v6001
        %v6003 = vlaneseq
        %v6004 = vshrl.u32 %v6003, 7
        %v6005 = vsub.s32 %v6002, %v6004
        %v6006 = vrot.slane %v5998, %v6005
        %v6008 = vunpack.c.l.s4 1934713408
        %v6009 = vunpack.c.0.s8 %v6008
        %v6010 = vlaneseq
        %v6011 = vshrl.u32 %v6010, 7
        %v6012 = vsub.s32 %v6009, %v6011
        %v6013 = vrot.slane %v5999, %v6012
        %v6014 = vcombine.low %v5958, %v5974
        %v6015 = vcombine.high %v5958, %v5974
        %v6017 = vunpack.c.l.s4 1934713408
        %v6018 = vunpack.c.0.s8 %v6017
        %v6019 = vlaneseq
        %v6020 = vshrl.u32 %v6019, 7
        %v6021 = vsub.s32 %v6018, %v6020
        %v6022 = vrot.slane %v6014, %v6021
        %v6024 = vunpack.c.l.s4 1934713408
        %v6025 = vunpack.c.0.s8 %v6024
        %v6026 = vlaneseq
        %v6027 = vshrl.u32 %v6026, 7
        %v6028 = vsub.s32 %v6025, %v6027
        %v6029 = vrot.slane %v6015, %v6028
        %v6030 = vcombine.low %v5965, %v5981
        %v6031 = vcombine.high %v5965, %v5981
        %v6033 = vunpack.c.l.s4 1934713408
        %v6034 = vunpack.c.0.s8 %v6033
        %v6035 = vlaneseq
        %v6036 = vshrl.u32 %v6035, 7
        %v6037 = vsub.s32 %v6034, %v6036
        %v6038 = vrot.slane %v6030, %v6037
        %v6040 = vunpack.c.l.s4 1934713408
        %v6041 = vunpack.c.0.s8 %v6040
        %v6042 = vlaneseq
        %v6043 = vshrl.u32 %v6042, 7
        %v6044 = vsub.s32 %v6041, %v6043
        %v6045 = vrot.slane %v6031, %v6044
        %v6046 = vcombine.low %v5990, %v6022
        %v6047 = vcombine.high %v5990, %v6022
        %v6048 = vcombine.low %v5997, %v6029
        %v6049 = vcombine.high %v5997, %v6029
        %v6050 = vcombine.low %v6006, %v6038
        %v6051 = vcombine.high %v6006, %v6038
        %v6052 = vcombine.low %v6013, %v6045
        %v6053 = vcombine.high %v6013, %v6045
        %6055 = vrot.lane.b32.xlu0 %v6047, 32
        %v6056 = vpop.permute.xlu0 %6055
        %6059 = vrot.lane.b32.xlu0 %v6048, 64
        %v6060 = vpop.permute.xlu0 %6059
        %6063 = vrot.lane.b32.xlu0 %v6049, 96
        %v6064 = vpop.permute.xlu0 %6063
        %6067 = vrot.lane.b32.xlu0 %v6051, 32
        %v6068 = vpop.permute.xlu0 %6067
        %6071 = vrot.lane.b32.xlu0 %v6052, 64
        %v6072 = vpop.permute.xlu0 %6071
        %6075 = vrot.lane.b32.xlu0 %v6053, 96
        %v6076 = vpop.permute.xlu0 %6075
        %vm6078 = vcmask 261120
        %v6079 = vsel %vm6078, %v6046, %v6056
        %vm6080 = vcmask 523264
        %v6081 = vsel %vm6080, %v6079, %v6060
        %vm6082 = vcmask 785408
        %v6083 = vsel %vm6082, %v6081, %v6064
        %v6084 = vsel %vm6078, %v6050, %v6068
        %v6085 = vsel %vm6080, %v6084, %v6072
        %v6086 = vsel %vm6082, %v6085, %v6076
        %v6087 = vpack.c.bf16 %v6083, %v6083
        %v6088 = vpack.c.bf16 %v6086, %v6086
        %v6091 = vunpack.c.l.b16 %v6087
        %v6092 = vunpack.c.l.b16 %v6088
        %v6093 = vpack.c.b16 %v6092, %v6091
        %6095 = vst [vmem:[%s136] sm:$0xff] %v6093
        %s6096 = sand.u32 %s71, 1
        %s6097 = scalar_lea.sflag [#allocation5], %s6096
        %s6098 = sand.u32 %s71, 1
        %s6099 = smul.addr %s6098, 8
        %s6100 = scalar_lea.vmem [#allocation4], %s6099
        // Predicated region
        $region29: #{tpu_custom_call.1} parent=27 // pred_check
          %p6101 = pneg %p81
        $region30: #{tpu_custom_call.1} parent=27 // pred_check_branch
          %6103 = sbr.rel (%p6101) target = $region32
        $region31: #{tpu_custom_call.1} parent=27 // pred_region
          %s6105 = ssub.s32 128, 128
          %6106 = vsyncadd %s6097, %s6105
          %s6107 = smul.addr %s16, 2
          %s6108 = smul.addr %s6107, 64
          %s6109 = scalar_lea.hbm %s2, %s6108
          %s6111 = sshll.u32 %s6100, 4
          %s6112 = int_to_ptr.vmem [resolvable:$true] %s6111
          %6114 = dma.vmem_to_hbm [thread:$0]  %s6112, 128, %s6109, %s6097
        $region32: #{tpu_custom_call.1} parent=27 // pred_fallthru
          _
      $region28: #{tpu_custom_call.1} parent=5 // pred_fallthru
        _
      %p6115 = scmp.le.s32.totalorder 2, %s11
      // Predicated region
      $region33: #{tpu_custom_call.1} parent=5 // pred_check
        %p6116 = pneg %p6115
      $region34: #{tpu_custom_call.1} parent=5 // pred_check_branch
        %6118 = sbr.rel (%p6116) target = $region36
      $region35: #{tpu_custom_call.1} parent=5 // pred_region
        %s6119 = ssub.s32 %s11, 2
        // Predicated region
        $region37: #{tpu_custom_call.1} parent=35 // pred_check
          %p6120 = pneg %p87
        $region38: #{tpu_custom_call.1} parent=35 // pred_check_branch
          %6122 = sbr.rel (%p6120) target = $region40
        $region39: #{tpu_custom_call.1} parent=35 // pred_region
          %s6123 = sand.u32 %s72, 1
          %s6124 = scalar_lea.sflag [#allocation5], %s6123
          %s6125 = sand.u32 %s72, 1
          %s6126 = smul.addr %s6125, 8
          %s6127 = scalar_lea.vmem [#allocation4], %s6126
          %6128 = dma.done %s6124, 128
        $region40: #{tpu_custom_call.1} parent=35 // pred_fallthru
          _
      $region36: #{tpu_custom_call.1} parent=5 // pred_fallthru
        _
    $region6: #{tpu_custom_call.1} parent=1 // loop_footer
      %s15 = sadd.s32 1, %s11
    $region7: #{tpu_custom_call.1} parent=1 // loop_footer_branch
      %10 = sbr.rel target = $region3
    $region8: #{tpu_custom_call.1} parent=1 // loop_exit
      _
    %6129 = vsyncpa [#allocation5], 1
    %s6130 = scalar_lea.sflag [#allocation5], 1
    %6131 = vsyncpa %s6130, 1

</llo_original>
